<compile_context>
chip_gen: v7x
topology: tpu7x:2x2x1
jax: 0.10.0
libtpu: 0.0.40
codegen_flags: <defaults>
</compile_context>

<pallas_src>
import jax
import jax.numpy as jnp
from jax import lax
from jax.experimental import pallas as pl
from jax.experimental.pallas import tpu as pltpu


def bilstm_maxpool_kernel(tok_ref, emb_ref, wih_all_ref, whh_f_ref,
                          whh_b_ref, b_all_ref, out_ref):
    B = out_ref.shape[0]
    H = out_ref.shape[1] // 2
    LB = tok_ref.shape[0]
    L = LB // B
    V1 = emb_ref.shape[0]

    # ---- fused embedding gather: one-hot matmul against the tiny table ----
    tok = tok_ref[...]                                              # (L*B, 1) int32, time-major
    vocab_iota = lax.broadcasted_iota(jnp.int32, (LB, V1), 1)       # (L*B, V1)
    one_hot = (tok == vocab_iota).astype(jnp.float32)               # (L*B, V1)
    x = jnp.dot(one_hot, emb_ref[...],
                preferred_element_type=jnp.float32)                 # (L*B, H) f32

    # ---- hoisted input projection for BOTH directions, bias folded in ----
    # gates_x[:, 0:4H]  -> forward-direction  x @ W_ih_f + (b_ih_f + b_hh_f)
    # gates_x[:, 4H:8H] -> backward-direction x @ W_ih_b + (b_ih_b + b_hh_b)
    gates_x = jnp.dot(x.astype(jnp.bfloat16), wih_all_ref[...],
                      preferred_element_type=jnp.float32) + b_all_ref[...]   # (L*B, 8H) f32

    whh_f = whh_f_ref[...]                                          # (H, 4H) bf16
    whh_b = whh_b_ref[...]                                          # (H, 4H) bf16

    def sigmoid(z):                                                 # one EUP push (tanh)
        return 0.5 * (jnp.tanh(0.5 * z) + 1.0)

    def cell(gates, c):
        i = sigmoid(gates[:, 0 * H:1 * H])
        f = sigmoid(gates[:, 1 * H:2 * H])
        g = jnp.tanh(gates[:, 2 * H:3 * H])
        o = sigmoid(gates[:, 3 * H:4 * H])
        c_new = f * c + i * g
        h_new = o * jnp.tanh(c_new)
        return h_new, c_new

    h_f = jnp.zeros((B, H), jnp.float32)
    c_f = jnp.zeros((B, H), jnp.float32)
    h_b = jnp.zeros((B, H), jnp.float32)
    c_b = jnp.zeros((B, H), jnp.float32)
    m_f = jnp.full((B, H), -jnp.inf, jnp.float32)   # safe: L >= 1
    m_b = jnp.full((B, H), -jnp.inf, jnp.float32)

    # ---- fused fwd/bwd recurrence, fully unrolled (L static & small) so the
    # scheduler sees all matmul/EUP/VPU work and all slices are static ----
    for t in range(L):
        gx_f = gates_x[t * B:(t + 1) * B, 0:4 * H]                  # forward step t
        gx_b = gates_x[(L - 1 - t) * B:(L - t) * B, 4 * H:8 * H]    # backward step L-1-t
        g_f = gx_f + jnp.dot(h_f.astype(jnp.bfloat16), whh_f,
                             preferred_element_type=jnp.float32)
        g_b = gx_b + jnp.dot(h_b.astype(jnp.bfloat16), whh_b,
                             preferred_element_type=jnp.float32)
        h_f, c_f = cell(g_f, c_f)
        h_b, c_b = cell(g_b, c_b)
        m_f = jnp.maximum(m_f, h_f)
        m_b = jnp.maximum(m_b, h_b)

    out_ref[:, 0:H] = m_f
    out_ref[:, H:2 * H] = m_b


@jax.jit
def sentence_encoder_forward(token_ids, params):
    """token_ids: int32 (B, L).  Returns float32 (B, 2H)."""
    B, L = token_ids.shape
    H = params['embedding'].shape[1]

    # Time-major flattening of the (tiny) id matrix: row t*B + b == token (b, t).
    tok = token_ids.T.reshape(L * B, 1).astype(jnp.int32)

    out = pl.pallas_call(
        bilstm_maxpool_kernel,
        out_shape=jax.ShapeDtypeStruct((B, 2 * H), jnp.float32),
        in_specs=[pl.BlockSpec(memory_space=pltpu.MemorySpace.VMEM)] * 6,
        out_specs=pl.BlockSpec(memory_space=pltpu.MemorySpace.VMEM),
    )(tok,
      params['embedding'],      # (V+1, H)   f32
      params['wih_all'],        # (H, 8H)    bf16  [W_ih_f | W_ih_b]
      params['whh_f'],          # (H, 4H)    bf16
      params['whh_b'],          # (H, 4H)    bf16
      params['b_all'])          # (1, 8H)    f32   [b_f | b_b], each = b_ih + b_hh
    return out


def init_params(key, vocab_size, hidden_size):
    """Deterministic synthetic parameters matching nn.Embedding + bi-LSTM shapes,
    pre-packed into the kernel layout (transposed, concatenated, bf16 weights)."""
    V1 = vocab_size + 1
    H = hidden_size
    ks = jax.random.split(key, 9)
    bound = 1.0 / float(H) ** 0.5

    def u(k, shape):
        return jax.random.uniform(k, shape, jnp.float32, -bound, bound)

    emb = jax.random.normal(ks[0], (V1, H), jnp.float32)
    emb = emb.at[0].set(0.0)                                  # padding_idx = 0

    wih_f = u(ks[1], (H, 4 * H))                              # == torch weight_ih_l0.T
    wih_b = u(ks[2], (H, 4 * H))                              # == torch weight_ih_l0_reverse.T
    whh_f = u(ks[3], (H, 4 * H))                              # == torch weight_hh_l0.T
    whh_b = u(ks[4], (H, 4 * H))                              # == torch weight_hh_l0_reverse.T
    b_f = u(ks[5], (1, 4 * H)) + u(ks[6], (1, 4 * H))         # b_ih_l0 + b_hh_l0
    b_b = u(ks[7], (1, 4 * H)) + u(ks[8], (1, 4 * H))         # reverse biases

    return {
        'embedding': emb,
        'wih_all': jnp.concatenate([wih_f, wih_b], axis=1).astype(jnp.bfloat16),
        'whh_f': whh_f.astype(jnp.bfloat16),
        'whh_b': whh_b.astype(jnp.bfloat16),
        'b_all': jnp.concatenate([b_f, b_b], axis=1),
    }


if __name__ == "__main__":
    # config analog: hidden_size=128, vocab_size=31 (+1 for padding), max_length=8
    hidden_size = 128
    vocab_size = 31
    max_length = 8
    batch = 8

    key = jax.random.PRNGKey(0)
    k_param, k_tok = jax.random.split(key)

    params = init_params(k_param, vocab_size, hidden_size)
    token_ids = jax.random.randint(
        k_tok, (batch, max_length), 0, vocab_size + 1, dtype=jnp.int32)

    out = sentence_encoder_forward(token_ids, params)
    out = jax.block_until_ready(out)

    assert out.shape == (batch, 2 * hidden_size), out.shape
    assert bool(jnp.all(jnp.isfinite(out)))
    # TODO(synk): nn.Dropout(0.5) exists in the module but is never applied in
    # forward, and sentence_length is computed but unused; both are omitted.
    print("KERNEL_OK")
</pallas_src>

<mosaic_0001>
module attributes {stable_mosaic.version = 11 : i64} {
  func.func @bilstm_maxpool_kernel(%arg0: memref<64x1xi32, #tpu.memory_space<vmem>>, %arg1: memref<32x128xf32, #tpu.memory_space<vmem>>, %arg2: memref<128x1024xbf16, #tpu.memory_space<vmem>>, %arg3: memref<128x512xbf16, #tpu.memory_space<vmem>>, %arg4: memref<128x512xbf16, #tpu.memory_space<vmem>>, %arg5: memref<1x1024xf32, #tpu.memory_space<vmem>>, %arg6: memref<8x256xf32, #tpu.memory_space<vmem>>) attributes {dimension_semantics = [], scalar_prefetch = 0 : i64, scratch_operands = 0 : i64, tpu.core_type = #tpu.core_type<tc>} {
    %c0 = arith.constant 0 : index
    %c0_0 = arith.constant 0 : index
    %0 = vector.load %arg0[%c0, %c0_0] : memref<64x1xi32, #tpu.memory_space<vmem>>, vector<64x1xi32>
    %1 = tpu.iota {dimensions = array<i32: 1>} : vector<64x32xi32>
    %2 = vector.broadcast %0 : vector<64x1xi32> to vector<64x32xi32>
    %3 = arith.cmpi eq, %2, %1 : vector<64x32xi32>
    %4 = arith.extui %3 : vector<64x32xi1> to vector<64x32xi32>
    %5 = arith.sitofp %4 : vector<64x32xi32> to vector<64x32xf32>
    %c0_1 = arith.constant 0 : index
    %c0_2 = arith.constant 0 : index
    %6 = vector.load %arg1[%c0_1, %c0_2] : memref<32x128xf32, #tpu.memory_space<vmem>>, vector<32x128xf32>
    %cst = arith.constant dense<0.000000e+00> : vector<64x128xf32>
    %7 = tpu.matmul %5, %6, %cst {dimension_numbers = #tpu.dot_dimension_numbers<[1], [0], [0], [1], [0, 0, 1, 1], [], []>} : vector<64x32xf32>, vector<32x128xf32>, vector<64x128xf32> -> vector<64x128xf32>
    %8 = arith.truncf %7 : vector<64x128xf32> to vector<64x128xbf16>
    %c0_3 = arith.constant 0 : index
    %c0_4 = arith.constant 0 : index
    %9 = vector.load %arg2[%c0_3, %c0_4] : memref<128x1024xbf16, #tpu.memory_space<vmem>>, vector<128x1024xbf16>
    %cst_5 = arith.constant dense<0.000000e+00> : vector<64x1024xf32>
    %10 = tpu.matmul %8, %9, %cst_5 {dimension_numbers = #tpu.dot_dimension_numbers<[1], [0], [0], [1], [0, 0, 1, 1], [], []>} : vector<64x128xbf16>, vector<128x1024xbf16>, vector<64x1024xf32> -> vector<64x1024xf32>
    %c0_6 = arith.constant 0 : index
    %c0_7 = arith.constant 0 : index
    %11 = vector.load %arg5[%c0_6, %c0_7] : memref<1x1024xf32, #tpu.memory_space<vmem>>, vector<1x1024xf32>
    %12 = vector.broadcast %11 : vector<1x1024xf32> to vector<64x1024xf32>
    %13 = arith.addf %10, %12 : vector<64x1024xf32>
    %c0_8 = arith.constant 0 : index
    %c0_9 = arith.constant 0 : index
    %14 = vector.load %arg3[%c0_8, %c0_9] : memref<128x512xbf16, #tpu.memory_space<vmem>>, vector<128x512xbf16>
    %c0_10 = arith.constant 0 : index
    %c0_11 = arith.constant 0 : index
    %15 = vector.load %arg4[%c0_10, %c0_11] : memref<128x512xbf16, #tpu.memory_space<vmem>>, vector<128x512xbf16>
    %cst_12 = arith.constant 0.000000e+00 : f32
    %16 = vector.broadcast %cst_12 : f32 to vector<8x128xf32>
    %cst_13 = arith.constant 0.000000e+00 : f32
    %17 = vector.broadcast %cst_13 : f32 to vector<8x128xf32>
    %cst_14 = arith.constant 0.000000e+00 : f32
    %18 = vector.broadcast %cst_14 : f32 to vector<8x128xf32>
    %cst_15 = arith.constant 0.000000e+00 : f32
    %19 = vector.broadcast %cst_15 : f32 to vector<8x128xf32>
    %cst_16 = arith.constant 0xFF800000 : f32
    %20 = vector.broadcast %cst_16 : f32 to vector<8x128xf32>
    %cst_17 = arith.constant 0xFF800000 : f32
    %21 = vector.broadcast %cst_17 : f32 to vector<8x128xf32>
    %22 = vector.extract_strided_slice %13 {offsets = [0, 0], sizes = [8, 512], strides = [1, 1]} : vector<64x1024xf32> to vector<8x512xf32>
    %23 = vector.extract_strided_slice %13 {offsets = [56, 512], sizes = [8, 512], strides = [1, 1]} : vector<64x1024xf32> to vector<8x512xf32>
    %24 = arith.truncf %16 : vector<8x128xf32> to vector<8x128xbf16>
    %cst_18 = arith.constant dense<0.000000e+00> : vector<8x512xf32>
    %25 = tpu.matmul %24, %14, %cst_18 {dimension_numbers = #tpu.dot_dimension_numbers<[1], [0], [0], [1], [0, 0, 1, 1], [], []>} : vector<8x128xbf16>, vector<128x512xbf16>, vector<8x512xf32> -> vector<8x512xf32>
    %26 = arith.addf %22, %25 : vector<8x512xf32>
    %27 = arith.truncf %18 : vector<8x128xf32> to vector<8x128xbf16>
    %cst_19 = arith.constant dense<0.000000e+00> : vector<8x512xf32>
    %28 = tpu.matmul %27, %15, %cst_19 {dimension_numbers = #tpu.dot_dimension_numbers<[1], [0], [0], [1], [0, 0, 1, 1], [], []>} : vector<8x128xbf16>, vector<128x512xbf16>, vector<8x512xf32> -> vector<8x512xf32>
    %29 = arith.addf %23, %28 : vector<8x512xf32>
    %30 = vector.extract_strided_slice %26 {offsets = [0, 0], sizes = [8, 128], strides = [1, 1]} : vector<8x512xf32> to vector<8x128xf32>
    %cst_20 = arith.constant 5.000000e-01 : f32
    %31 = vector.broadcast %cst_20 : f32 to vector<8x128xf32>
    %32 = arith.mulf %31, %30 : vector<8x128xf32>
    %33 = math.tanh %32 : vector<8x128xf32>
    %cst_21 = arith.constant 1.000000e+00 : f32
    %34 = vector.broadcast %cst_21 : f32 to vector<8x128xf32>
    %35 = arith.addf %33, %34 : vector<8x128xf32>
    %cst_22 = arith.constant 5.000000e-01 : f32
    %36 = vector.broadcast %cst_22 : f32 to vector<8x128xf32>
    %37 = arith.mulf %36, %35 : vector<8x128xf32>
    %38 = vector.extract_strided_slice %26 {offsets = [0, 128], sizes = [8, 128], strides = [1, 1]} : vector<8x512xf32> to vector<8x128xf32>
    %cst_23 = arith.constant 5.000000e-01 : f32
    %39 = vector.broadcast %cst_23 : f32 to vector<8x128xf32>
    %40 = arith.mulf %39, %38 : vector<8x128xf32>
    %41 = math.tanh %40 : vector<8x128xf32>
    %cst_24 = arith.constant 1.000000e+00 : f32
    %42 = vector.broadcast %cst_24 : f32 to vector<8x128xf32>
    %43 = arith.addf %41, %42 : vector<8x128xf32>
    %cst_25 = arith.constant 5.000000e-01 : f32
    %44 = vector.broadcast %cst_25 : f32 to vector<8x128xf32>
    %45 = arith.mulf %44, %43 : vector<8x128xf32>
    %46 = vector.extract_strided_slice %26 {offsets = [0, 256], sizes = [8, 128], strides = [1, 1]} : vector<8x512xf32> to vector<8x128xf32>
    %47 = math.tanh %46 : vector<8x128xf32>
    %48 = vector.extract_strided_slice %26 {offsets = [0, 384], sizes = [8, 128], strides = [1, 1]} : vector<8x512xf32> to vector<8x128xf32>
    %cst_26 = arith.constant 5.000000e-01 : f32
    %49 = vector.broadcast %cst_26 : f32 to vector<8x128xf32>
    %50 = arith.mulf %49, %48 : vector<8x128xf32>
    %51 = math.tanh %50 : vector<8x128xf32>
    %cst_27 = arith.constant 1.000000e+00 : f32
    %52 = vector.broadcast %cst_27 : f32 to vector<8x128xf32>
    %53 = arith.addf %51, %52 : vector<8x128xf32>
    %cst_28 = arith.constant 5.000000e-01 : f32
    %54 = vector.broadcast %cst_28 : f32 to vector<8x128xf32>
    %55 = arith.mulf %54, %53 : vector<8x128xf32>
    %56 = arith.mulf %45, %17 : vector<8x128xf32>
    %57 = arith.mulf %37, %47 : vector<8x128xf32>
    %58 = arith.addf %56, %57 : vector<8x128xf32>
    %59 = math.tanh %58 : vector<8x128xf32>
    %60 = arith.mulf %55, %59 : vector<8x128xf32>
    %61 = vector.extract_strided_slice %29 {offsets = [0, 0], sizes = [8, 128], strides = [1, 1]} : vector<8x512xf32> to vector<8x128xf32>
    %cst_29 = arith.constant 5.000000e-01 : f32
    %62 = vector.broadcast %cst_29 : f32 to vector<8x128xf32>
    %63 = arith.mulf %62, %61 : vector<8x128xf32>
    %64 = math.tanh %63 : vector<8x128xf32>
    %cst_30 = arith.constant 1.000000e+00 : f32
    %65 = vector.broadcast %cst_30 : f32 to vector<8x128xf32>
    %66 = arith.addf %64, %65 : vector<8x128xf32>
    %cst_31 = arith.constant 5.000000e-01 : f32
    %67 = vector.broadcast %cst_31 : f32 to vector<8x128xf32>
    %68 = arith.mulf %67, %66 : vector<8x128xf32>
    %69 = vector.extract_strided_slice %29 {offsets = [0, 128], sizes = [8, 128], strides = [1, 1]} : vector<8x512xf32> to vector<8x128xf32>
    %cst_32 = arith.constant 5.000000e-01 : f32
    %70 = vector.broadcast %cst_32 : f32 to vector<8x128xf32>
    %71 = arith.mulf %70, %69 : vector<8x128xf32>
    %72 = math.tanh %71 : vector<8x128xf32>
    %cst_33 = arith.constant 1.000000e+00 : f32
    %73 = vector.broadcast %cst_33 : f32 to vector<8x128xf32>
    %74 = arith.addf %72, %73 : vector<8x128xf32>
    %cst_34 = arith.constant 5.000000e-01 : f32
    %75 = vector.broadcast %cst_34 : f32 to vector<8x128xf32>
    %76 = arith.mulf %75, %74 : vector<8x128xf32>
    %77 = vector.extract_strided_slice %29 {offsets = [0, 256], sizes = [8, 128], strides = [1, 1]} : vector<8x512xf32> to vector<8x128xf32>
    %78 = math.tanh %77 : vector<8x128xf32>
    %79 = vector.extract_strided_slice %29 {offsets = [0, 384], sizes = [8, 128], strides = [1, 1]} : vector<8x512xf32> to vector<8x128xf32>
    %cst_35 = arith.constant 5.000000e-01 : f32
    %80 = vector.broadcast %cst_35 : f32 to vector<8x128xf32>
    %81 = arith.mulf %80, %79 : vector<8x128xf32>
    %82 = math.tanh %81 : vector<8x128xf32>
    %cst_36 = arith.constant 1.000000e+00 : f32
    %83 = vector.broadcast %cst_36 : f32 to vector<8x128xf32>
    %84 = arith.addf %82, %83 : vector<8x128xf32>
    %cst_37 = arith.constant 5.000000e-01 : f32
    %85 = vector.broadcast %cst_37 : f32 to vector<8x128xf32>
    %86 = arith.mulf %85, %84 : vector<8x128xf32>
    %87 = arith.mulf %76, %19 : vector<8x128xf32>
    %88 = arith.mulf %68, %78 : vector<8x128xf32>
    %89 = arith.addf %87, %88 : vector<8x128xf32>
    %90 = math.tanh %89 : vector<8x128xf32>
    %91 = arith.mulf %86, %90 : vector<8x128xf32>
    %92 = arith.maximumf %20, %60 : vector<8x128xf32>
    %93 = arith.maximumf %21, %91 : vector<8x128xf32>
    %94 = vector.extract_strided_slice %13 {offsets = [8, 0], sizes = [8, 512], strides = [1, 1]} : vector<64x1024xf32> to vector<8x512xf32>
    %95 = vector.extract_strided_slice %13 {offsets = [48, 512], sizes = [8, 512], strides = [1, 1]} : vector<64x1024xf32> to vector<8x512xf32>
    %96 = arith.truncf %60 : vector<8x128xf32> to vector<8x128xbf16>
    %cst_38 = arith.constant dense<0.000000e+00> : vector<8x512xf32>
    %97 = tpu.matmul %96, %14, %cst_38 {dimension_numbers = #tpu.dot_dimension_numbers<[1], [0], [0], [1], [0, 0, 1, 1], [], []>} : vector<8x128xbf16>, vector<128x512xbf16>, vector<8x512xf32> -> vector<8x512xf32>
    %98 = arith.addf %94, %97 : vector<8x512xf32>
    %99 = arith.truncf %91 : vector<8x128xf32> to vector<8x128xbf16>
    %cst_39 = arith.constant dense<0.000000e+00> : vector<8x512xf32>
    %100 = tpu.matmul %99, %15, %cst_39 {dimension_numbers = #tpu.dot_dimension_numbers<[1], [0], [0], [1], [0, 0, 1, 1], [], []>} : vector<8x128xbf16>, vector<128x512xbf16>, vector<8x512xf32> -> vector<8x512xf32>
    %101 = arith.addf %95, %100 : vector<8x512xf32>
    %102 = vector.extract_strided_slice %98 {offsets = [0, 0], sizes = [8, 128], strides = [1, 1]} : vector<8x512xf32> to vector<8x128xf32>
    %cst_40 = arith.constant 5.000000e-01 : f32
    %103 = vector.broadcast %cst_40 : f32 to vector<8x128xf32>
    %104 = arith.mulf %103, %102 : vector<8x128xf32>
    %105 = math.tanh %104 : vector<8x128xf32>
    %cst_41 = arith.constant 1.000000e+00 : f32
    %106 = vector.broadcast %cst_41 : f32 to vector<8x128xf32>
    %107 = arith.addf %105, %106 : vector<8x128xf32>
    %cst_42 = arith.constant 5.000000e-01 : f32
    %108 = vector.broadcast %cst_42 : f32 to vector<8x128xf32>
    %109 = arith.mulf %108, %107 : vector<8x128xf32>
    %110 = vector.extract_strided_slice %98 {offsets = [0, 128], sizes = [8, 128], strides = [1, 1]} : vector<8x512xf32> to vector<8x128xf32>
    %cst_43 = arith.constant 5.000000e-01 : f32
    %111 = vector.broadcast %cst_43 : f32 to vector<8x128xf32>
    %112 = arith.mulf %111, %110 : vector<8x128xf32>
    %113 = math.tanh %112 : vector<8x128xf32>
    %cst_44 = arith.constant 1.000000e+00 : f32
    %114 = vector.broadcast %cst_44 : f32 to vector<8x128xf32>
    %115 = arith.addf %113, %114 : vector<8x128xf32>
    %cst_45 = arith.constant 5.000000e-01 : f32
    %116 = vector.broadcast %cst_45 : f32 to vector<8x128xf32>
    %117 = arith.mulf %116, %115 : vector<8x128xf32>
    %118 = vector.extract_strided_slice %98 {offsets = [0, 256], sizes = [8, 128], strides = [1, 1]} : vector<8x512xf32> to vector<8x128xf32>
    %119 = math.tanh %118 : vector<8x128xf32>
    %120 = vector.extract_strided_slice %98 {offsets = [0, 384], sizes = [8, 128], strides = [1, 1]} : vector<8x512xf32> to vector<8x128xf32>
    %cst_46 = arith.constant 5.000000e-01 : f32
    %121 = vector.broadcast %cst_46 : f32 to vector<8x128xf32>
    %122 = arith.mulf %121, %120 : vector<8x128xf32>
    %123 = math.tanh %122 : vector<8x128xf32>
    %cst_47 = arith.constant 1.000000e+00 : f32
    %124 = vector.broadcast %cst_47 : f32 to vector<8x128xf32>
    %125 = arith.addf %123, %124 : vector<8x128xf32>
    %cst_48 = arith.constant 5.000000e-01 : f32
    %126 = vector.broadcast %cst_48 : f32 to vector<8x128xf32>
    %127 = arith.mulf %126, %125 : vector<8x128xf32>
    %128 = arith.mulf %117, %58 : vector<8x128xf32>
    %129 = arith.mulf %109, %119 : vector<8x128xf32>
    %130 = arith.addf %128, %129 : vector<8x128xf32>
    %131 = math.tanh %130 : vector<8x128xf32>
    %132 = arith.mulf %127, %131 : vector<8x128xf32>
    %133 = vector.extract_strided_slice %101 {offsets = [0, 0], sizes = [8, 128], strides = [1, 1]} : vector<8x512xf32> to vector<8x128xf32>
    %cst_49 = arith.constant 5.000000e-01 : f32
    %134 = vector.broadcast %cst_49 : f32 to vector<8x128xf32>
    %135 = arith.mulf %134, %133 : vector<8x128xf32>
    %136 = math.tanh %135 : vector<8x128xf32>
    %cst_50 = arith.constant 1.000000e+00 : f32
    %137 = vector.broadcast %cst_50 : f32 to vector<8x128xf32>
    %138 = arith.addf %136, %137 : vector<8x128xf32>
    %cst_51 = arith.constant 5.000000e-01 : f32
    %139 = vector.broadcast %cst_51 : f32 to vector<8x128xf32>
    %140 = arith.mulf %139, %138 : vector<8x128xf32>
    %141 = vector.extract_strided_slice %101 {offsets = [0, 128], sizes = [8, 128], strides = [1, 1]} : vector<8x512xf32> to vector<8x128xf32>
    %cst_52 = arith.constant 5.000000e-01 : f32
    %142 = vector.broadcast %cst_52 : f32 to vector<8x128xf32>
    %143 = arith.mulf %142, %141 : vector<8x128xf32>
    %144 = math.tanh %143 : vector<8x128xf32>
    %cst_53 = arith.constant 1.000000e+00 : f32
    %145 = vector.broadcast %cst_53 : f32 to vector<8x128xf32>
    %146 = arith.addf %144, %145 : vector<8x128xf32>
    %cst_54 = arith.constant 5.000000e-01 : f32
    %147 = vector.broadcast %cst_54 : f32 to vector<8x128xf32>
    %148 = arith.mulf %147, %146 : vector<8x128xf32>
    %149 = vector.extract_strided_slice %101 {offsets = [0, 256], sizes = [8, 128], strides = [1, 1]} : vector<8x512xf32> to vector<8x128xf32>
    %150 = math.tanh %149 : vector<8x128xf32>
    %151 = vector.extract_strided_slice %101 {offsets = [0, 384], sizes = [8, 128], strides = [1, 1]} : vector<8x512xf32> to vector<8x128xf32>
    %cst_55 = arith.constant 5.000000e-01 : f32
    %152 = vector.broadcast %cst_55 : f32 to vector<8x128xf32>
    %153 = arith.mulf %152, %151 : vector<8x128xf32>
    %154 = math.tanh %153 : vector<8x128xf32>
    %cst_56 = arith.constant 1.000000e+00 : f32
    %155 = vector.broadcast %cst_56 : f32 to vector<8x128xf32>
    %156 = arith.addf %154, %155 : vector<8x128xf32>
    %cst_57 = arith.constant 5.000000e-01 : f32
    %157 = vector.broadcast %cst_57 : f32 to vector<8x128xf32>
    %158 = arith.mulf %157, %156 : vector<8x128xf32>
    %159 = arith.mulf %148, %89 : vector<8x128xf32>
    %160 = arith.mulf %140, %150 : vector<8x128xf32>
    %161 = arith.addf %159, %160 : vector<8x128xf32>
    %162 = math.tanh %161 : vector<8x128xf32>
    %163 = arith.mulf %158, %162 : vector<8x128xf32>
    %164 = arith.maximumf %92, %132 : vector<8x128xf32>
    %165 = arith.maximumf %93, %163 : vector<8x128xf32>
    %166 = vector.extract_strided_slice %13 {offsets = [16, 0], sizes = [8, 512], strides = [1, 1]} : vector<64x1024xf32> to vector<8x512xf32>
    %167 = vector.extract_strided_slice %13 {offsets = [40, 512], sizes = [8, 512], strides = [1, 1]} : vector<64x1024xf32> to vector<8x512xf32>
    %168 = arith.truncf %132 : vector<8x128xf32> to vector<8x128xbf16>
    %cst_58 = arith.constant dense<0.000000e+00> : vector<8x512xf32>
    %169 = tpu.matmul %168, %14, %cst_58 {dimension_numbers = #tpu.dot_dimension_numbers<[1], [0], [0], [1], [0, 0, 1, 1], [], []>} : vector<8x128xbf16>, vector<128x512xbf16>, vector<8x512xf32> -> vector<8x512xf32>
    %170 = arith.addf %166, %169 : vector<8x512xf32>
    %171 = arith.truncf %163 : vector<8x128xf32> to vector<8x128xbf16>
    %cst_59 = arith.constant dense<0.000000e+00> : vector<8x512xf32>
    %172 = tpu.matmul %171, %15, %cst_59 {dimension_numbers = #tpu.dot_dimension_numbers<[1], [0], [0], [1], [0, 0, 1, 1], [], []>} : vector<8x128xbf16>, vector<128x512xbf16>, vector<8x512xf32> -> vector<8x512xf32>
    %173 = arith.addf %167, %172 : vector<8x512xf32>
    %174 = vector.extract_strided_slice %170 {offsets = [0, 0], sizes = [8, 128], strides = [1, 1]} : vector<8x512xf32> to vector<8x128xf32>
    %cst_60 = arith.constant 5.000000e-01 : f32
    %175 = vector.broadcast %cst_60 : f32 to vector<8x128xf32>
    %176 = arith.mulf %175, %174 : vector<8x128xf32>
    %177 = math.tanh %176 : vector<8x128xf32>
    %cst_61 = arith.constant 1.000000e+00 : f32
    %178 = vector.broadcast %cst_61 : f32 to vector<8x128xf32>
    %179 = arith.addf %177, %178 : vector<8x128xf32>
    %cst_62 = arith.constant 5.000000e-01 : f32
    %180 = vector.broadcast %cst_62 : f32 to vector<8x128xf32>
    %181 = arith.mulf %180, %179 : vector<8x128xf32>
    %182 = vector.extract_strided_slice %170 {offsets = [0, 128], sizes = [8, 128], strides = [1, 1]} : vector<8x512xf32> to vector<8x128xf32>
    %cst_63 = arith.constant 5.000000e-01 : f32
    %183 = vector.broadcast %cst_63 : f32 to vector<8x128xf32>
    %184 = arith.mulf %183, %182 : vector<8x128xf32>
    %185 = math.tanh %184 : vector<8x128xf32>
    %cst_64 = arith.constant 1.000000e+00 : f32
    %186 = vector.broadcast %cst_64 : f32 to vector<8x128xf32>
    %187 = arith.addf %185, %186 : vector<8x128xf32>
    %cst_65 = arith.constant 5.000000e-01 : f32
    %188 = vector.broadcast %cst_65 : f32 to vector<8x128xf32>
    %189 = arith.mulf %188, %187 : vector<8x128xf32>
    %190 = vector.extract_strided_slice %170 {offsets = [0, 256], sizes = [8, 128], strides = [1, 1]} : vector<8x512xf32> to vector<8x128xf32>
    %191 = math.tanh %190 : vector<8x128xf32>
    %192 = vector.extract_strided_slice %170 {offsets = [0, 384], sizes = [8, 128], strides = [1, 1]} : vector<8x512xf32> to vector<8x128xf32>
    %cst_66 = arith.constant 5.000000e-01 : f32
    %193 = vector.broadcast %cst_66 : f32 to vector<8x128xf32>
    %194 = arith.mulf %193, %192 : vector<8x128xf32>
    %195 = math.tanh %194 : vector<8x128xf32>
    %cst_67 = arith.constant 1.000000e+00 : f32
    %196 = vector.broadcast %cst_67 : f32 to vector<8x128xf32>
    %197 = arith.addf %195, %196 : vector<8x128xf32>
    %cst_68 = arith.constant 5.000000e-01 : f32
    %198 = vector.broadcast %cst_68 : f32 to vector<8x128xf32>
    %199 = arith.mulf %198, %197 : vector<8x128xf32>
    %200 = arith.mulf %189, %130 : vector<8x128xf32>
    %201 = arith.mulf %181, %191 : vector<8x128xf32>
    %202 = arith.addf %200, %201 : vector<8x128xf32>
    %203 = math.tanh %202 : vector<8x128xf32>
    %204 = arith.mulf %199, %203 : vector<8x128xf32>
    %205 = vector.extract_strided_slice %173 {offsets = [0, 0], sizes = [8, 128], strides = [1, 1]} : vector<8x512xf32> to vector<8x128xf32>
    %cst_69 = arith.constant 5.000000e-01 : f32
    %206 = vector.broadcast %cst_69 : f32 to vector<8x128xf32>
    %207 = arith.mulf %206, %205 : vector<8x128xf32>
    %208 = math.tanh %207 : vector<8x128xf32>
    %cst_70 = arith.constant 1.000000e+00 : f32
    %209 = vector.broadcast %cst_70 : f32 to vector<8x128xf32>
    %210 = arith.addf %208, %209 : vector<8x128xf32>
    %cst_71 = arith.constant 5.000000e-01 : f32
    %211 = vector.broadcast %cst_71 : f32 to vector<8x128xf32>
    %212 = arith.mulf %211, %210 : vector<8x128xf32>
    %213 = vector.extract_strided_slice %173 {offsets = [0, 128], sizes = [8, 128], strides = [1, 1]} : vector<8x512xf32> to vector<8x128xf32>
    %cst_72 = arith.constant 5.000000e-01 : f32
    %214 = vector.broadcast %cst_72 : f32 to vector<8x128xf32>
    %215 = arith.mulf %214, %213 : vector<8x128xf32>
    %216 = math.tanh %215 : vector<8x128xf32>
    %cst_73 = arith.constant 1.000000e+00 : f32
    %217 = vector.broadcast %cst_73 : f32 to vector<8x128xf32>
    %218 = arith.addf %216, %217 : vector<8x128xf32>
    %cst_74 = arith.constant 5.000000e-01 : f32
    %219 = vector.broadcast %cst_74 : f32 to vector<8x128xf32>
    %220 = arith.mulf %219, %218 : vector<8x128xf32>
    %221 = vector.extract_strided_slice %173 {offsets = [0, 256], sizes = [8, 128], strides = [1, 1]} : vector<8x512xf32> to vector<8x128xf32>
    %222 = math.tanh %221 : vector<8x128xf32>
    %223 = vector.extract_strided_slice %173 {offsets = [0, 384], sizes = [8, 128], strides = [1, 1]} : vector<8x512xf32> to vector<8x128xf32>
    %cst_75 = arith.constant 5.000000e-01 : f32
    %224 = vector.broadcast %cst_75 : f32 to vector<8x128xf32>
    %225 = arith.mulf %224, %223 : vector<8x128xf32>
    %226 = math.tanh %225 : vector<8x128xf32>
    %cst_76 = arith.constant 1.000000e+00 : f32
    %227 = vector.broadcast %cst_76 : f32 to vector<8x128xf32>
    %228 = arith.addf %226, %227 : vector<8x128xf32>
    %cst_77 = arith.constant 5.000000e-01 : f32
    %229 = vector.broadcast %cst_77 : f32 to vector<8x128xf32>
    %230 = arith.mulf %229, %228 : vector<8x128xf32>
    %231 = arith.mulf %220, %161 : vector<8x128xf32>
    %232 = arith.mulf %212, %222 : vector<8x128xf32>
    %233 = arith.addf %231, %232 : vector<8x128xf32>
    %234 = math.tanh %233 : vector<8x128xf32>
    %235 = arith.mulf %230, %234 : vector<8x128xf32>
    %236 = arith.maximumf %164, %204 : vector<8x128xf32>
    %237 = arith.maximumf %165, %235 : vector<8x128xf32>
    %238 = vector.extract_strided_slice %13 {offsets = [24, 0], sizes = [8, 512], strides = [1, 1]} : vector<64x1024xf32> to vector<8x512xf32>
    %239 = vector.extract_strided_slice %13 {offsets = [32, 512], sizes = [8, 512], strides = [1, 1]} : vector<64x1024xf32> to vector<8x512xf32>
    %240 = arith.truncf %204 : vector<8x128xf32> to vector<8x128xbf16>
    %cst_78 = arith.constant dense<0.000000e+00> : vector<8x512xf32>
    %241 = tpu.matmul %240, %14, %cst_78 {dimension_numbers = #tpu.dot_dimension_numbers<[1], [0], [0], [1], [0, 0, 1, 1], [], []>} : vector<8x128xbf16>, vector<128x512xbf16>, vector<8x512xf32> -> vector<8x512xf32>
    %242 = arith.addf %238, %241 : vector<8x512xf32>
    %243 = arith.truncf %235 : vector<8x128xf32> to vector<8x128xbf16>
    %cst_79 = arith.constant dense<0.000000e+00> : vector<8x512xf32>
    %244 = tpu.matmul %243, %15, %cst_79 {dimension_numbers = #tpu.dot_dimension_numbers<[1], [0], [0], [1], [0, 0, 1, 1], [], []>} : vector<8x128xbf16>, vector<128x512xbf16>, vector<8x512xf32> -> vector<8x512xf32>
    %245 = arith.addf %239, %244 : vector<8x512xf32>
    %246 = vector.extract_strided_slice %242 {offsets = [0, 0], sizes = [8, 128], strides = [1, 1]} : vector<8x512xf32> to vector<8x128xf32>
    %cst_80 = arith.constant 5.000000e-01 : f32
    %247 = vector.broadcast %cst_80 : f32 to vector<8x128xf32>
    %248 = arith.mulf %247, %246 : vector<8x128xf32>
    %249 = math.tanh %248 : vector<8x128xf32>
    %cst_81 = arith.constant 1.000000e+00 : f32
    %250 = vector.broadcast %cst_81 : f32 to vector<8x128xf32>
    %251 = arith.addf %249, %250 : vector<8x128xf32>
    %cst_82 = arith.constant 5.000000e-01 : f32
    %252 = vector.broadcast %cst_82 : f32 to vector<8x128xf32>
    %253 = arith.mulf %252, %251 : vector<8x128xf32>
    %254 = vector.extract_strided_slice %242 {offsets = [0, 128], sizes = [8, 128], strides = [1, 1]} : vector<8x512xf32> to vector<8x128xf32>
    %cst_83 = arith.constant 5.000000e-01 : f32
    %255 = vector.broadcast %cst_83 : f32 to vector<8x128xf32>
    %256 = arith.mulf %255, %254 : vector<8x128xf32>
    %257 = math.tanh %256 : vector<8x128xf32>
    %cst_84 = arith.constant 1.000000e+00 : f32
    %258 = vector.broadcast %cst_84 : f32 to vector<8x128xf32>
    %259 = arith.addf %257, %258 : vector<8x128xf32>
    %cst_85 = arith.constant 5.000000e-01 : f32
    %260 = vector.broadcast %cst_85 : f32 to vector<8x128xf32>
    %261 = arith.mulf %260, %259 : vector<8x128xf32>
    %262 = vector.extract_strided_slice %242 {offsets = [0, 256], sizes = [8, 128], strides = [1, 1]} : vector<8x512xf32> to vector<8x128xf32>
    %263 = math.tanh %262 : vector<8x128xf32>
    %264 = vector.extract_strided_slice %242 {offsets = [0, 384], sizes = [8, 128], strides = [1, 1]} : vector<8x512xf32> to vector<8x128xf32>
    %cst_86 = arith.constant 5.000000e-01 : f32
    %265 = vector.broadcast %cst_86 : f32 to vector<8x128xf32>
    %266 = arith.mulf %265, %264 : vector<8x128xf32>
    %267 = math.tanh %266 : vector<8x128xf32>
    %cst_87 = arith.constant 1.000000e+00 : f32
    %268 = vector.broadcast %cst_87 : f32 to vector<8x128xf32>
    %269 = arith.addf %267, %268 : vector<8x128xf32>
    %cst_88 = arith.constant 5.000000e-01 : f32
    %270 = vector.broadcast %cst_88 : f32 to vector<8x128xf32>
    %271 = arith.mulf %270, %269 : vector<8x128xf32>
    %272 = arith.mulf %261, %202 : vector<8x128xf32>
    %273 = arith.mulf %253, %263 : vector<8x128xf32>
    %274 = arith.addf %272, %273 : vector<8x128xf32>
    %275 = math.tanh %274 : vector<8x128xf32>
    %276 = arith.mulf %271, %275 : vector<8x128xf32>
    %277 = vector.extract_strided_slice %245 {offsets = [0, 0], sizes = [8, 128], strides = [1, 1]} : vector<8x512xf32> to vector<8x128xf32>
    %cst_89 = arith.constant 5.000000e-01 : f32
    %278 = vector.broadcast %cst_89 : f32 to vector<8x128xf32>
    %279 = arith.mulf %278, %277 : vector<8x128xf32>
    %280 = math.tanh %279 : vector<8x128xf32>
    %cst_90 = arith.constant 1.000000e+00 : f32
    %281 = vector.broadcast %cst_90 : f32 to vector<8x128xf32>
    %282 = arith.addf %280, %281 : vector<8x128xf32>
    %cst_91 = arith.constant 5.000000e-01 : f32
    %283 = vector.broadcast %cst_91 : f32 to vector<8x128xf32>
    %284 = arith.mulf %283, %282 : vector<8x128xf32>
    %285 = vector.extract_strided_slice %245 {offsets = [0, 128], sizes = [8, 128], strides = [1, 1]} : vector<8x512xf32> to vector<8x128xf32>
    %cst_92 = arith.constant 5.000000e-01 : f32
    %286 = vector.broadcast %cst_92 : f32 to vector<8x128xf32>
    %287 = arith.mulf %286, %285 : vector<8x128xf32>
    %288 = math.tanh %287 : vector<8x128xf32>
    %cst_93 = arith.constant 1.000000e+00 : f32
    %289 = vector.broadcast %cst_93 : f32 to vector<8x128xf32>
    %290 = arith.addf %288, %289 : vector<8x128xf32>
    %cst_94 = arith.constant 5.000000e-01 : f32
    %291 = vector.broadcast %cst_94 : f32 to vector<8x128xf32>
    %292 = arith.mulf %291, %290 : vector<8x128xf32>
    %293 = vector.extract_strided_slice %245 {offsets = [0, 256], sizes = [8, 128], strides = [1, 1]} : vector<8x512xf32> to vector<8x128xf32>
    %294 = math.tanh %293 : vector<8x128xf32>
    %295 = vector.extract_strided_slice %245 {offsets = [0, 384], sizes = [8, 128], strides = [1, 1]} : vector<8x512xf32> to vector<8x128xf32>
    %cst_95 = arith.constant 5.000000e-01 : f32
    %296 = vector.broadcast %cst_95 : f32 to vector<8x128xf32>
    %297 = arith.mulf %296, %295 : vector<8x128xf32>
    %298 = math.tanh %297 : vector<8x128xf32>
    %cst_96 = arith.constant 1.000000e+00 : f32
    %299 = vector.broadcast %cst_96 : f32 to vector<8x128xf32>
    %300 = arith.addf %298, %299 : vector<8x128xf32>
    %cst_97 = arith.constant 5.000000e-01 : f32
    %301 = vector.broadcast %cst_97 : f32 to vector<8x128xf32>
    %302 = arith.mulf %301, %300 : vector<8x128xf32>
    %303 = arith.mulf %292, %233 : vector<8x128xf32>
    %304 = arith.mulf %284, %294 : vector<8x128xf32>
    %305 = arith.addf %303, %304 : vector<8x128xf32>
    %306 = math.tanh %305 : vector<8x128xf32>
    %307 = arith.mulf %302, %306 : vector<8x128xf32>
    %308 = arith.maximumf %236, %276 : vector<8x128xf32>
    %309 = arith.maximumf %237, %307 : vector<8x128xf32>
    %310 = vector.extract_strided_slice %13 {offsets = [32, 0], sizes = [8, 512], strides = [1, 1]} : vector<64x1024xf32> to vector<8x512xf32>
    %311 = vector.extract_strided_slice %13 {offsets = [24, 512], sizes = [8, 512], strides = [1, 1]} : vector<64x1024xf32> to vector<8x512xf32>
    %312 = arith.truncf %276 : vector<8x128xf32> to vector<8x128xbf16>
    %cst_98 = arith.constant dense<0.000000e+00> : vector<8x512xf32>
    %313 = tpu.matmul %312, %14, %cst_98 {dimension_numbers = #tpu.dot_dimension_numbers<[1], [0], [0], [1], [0, 0, 1, 1], [], []>} : vector<8x128xbf16>, vector<128x512xbf16>, vector<8x512xf32> -> vector<8x512xf32>
    %314 = arith.addf %310, %313 : vector<8x512xf32>
    %315 = arith.truncf %307 : vector<8x128xf32> to vector<8x128xbf16>
    %cst_99 = arith.constant dense<0.000000e+00> : vector<8x512xf32>
    %316 = tpu.matmul %315, %15, %cst_99 {dimension_numbers = #tpu.dot_dimension_numbers<[1], [0], [0], [1], [0, 0, 1, 1], [], []>} : vector<8x128xbf16>, vector<128x512xbf16>, vector<8x512xf32> -> vector<8x512xf32>
    %317 = arith.addf %311, %316 : vector<8x512xf32>
    %318 = vector.extract_strided_slice %314 {offsets = [0, 0], sizes = [8, 128], strides = [1, 1]} : vector<8x512xf32> to vector<8x128xf32>
    %cst_100 = arith.constant 5.000000e-01 : f32
    %319 = vector.broadcast %cst_100 : f32 to vector<8x128xf32>
    %320 = arith.mulf %319, %318 : vector<8x128xf32>
    %321 = math.tanh %320 : vector<8x128xf32>
    %cst_101 = arith.constant 1.000000e+00 : f32
    %322 = vector.broadcast %cst_101 : f32 to vector<8x128xf32>
    %323 = arith.addf %321, %322 : vector<8x128xf32>
    %cst_102 = arith.constant 5.000000e-01 : f32
    %324 = vector.broadcast %cst_102 : f32 to vector<8x128xf32>
    %325 = arith.mulf %324, %323 : vector<8x128xf32>
    %326 = vector.extract_strided_slice %314 {offsets = [0, 128], sizes = [8, 128], strides = [1, 1]} : vector<8x512xf32> to vector<8x128xf32>
    %cst_103 = arith.constant 5.000000e-01 : f32
    %327 = vector.broadcast %cst_103 : f32 to vector<8x128xf32>
    %328 = arith.mulf %327, %326 : vector<8x128xf32>
    %329 = math.tanh %328 : vector<8x128xf32>
    %cst_104 = arith.constant 1.000000e+00 : f32
    %330 = vector.broadcast %cst_104 : f32 to vector<8x128xf32>
    %331 = arith.addf %329, %330 : vector<8x128xf32>
    %cst_105 = arith.constant 5.000000e-01 : f32
    %332 = vector.broadcast %cst_105 : f32 to vector<8x128xf32>
    %333 = arith.mulf %332, %331 : vector<8x128xf32>
    %334 = vector.extract_strided_slice %314 {offsets = [0, 256], sizes = [8, 128], strides = [1, 1]} : vector<8x512xf32> to vector<8x128xf32>
    %335 = math.tanh %334 : vector<8x128xf32>
    %336 = vector.extract_strided_slice %314 {offsets = [0, 384], sizes = [8, 128], strides = [1, 1]} : vector<8x512xf32> to vector<8x128xf32>
    %cst_106 = arith.constant 5.000000e-01 : f32
    %337 = vector.broadcast %cst_106 : f32 to vector<8x128xf32>
    %338 = arith.mulf %337, %336 : vector<8x128xf32>
    %339 = math.tanh %338 : vector<8x128xf32>
    %cst_107 = arith.constant 1.000000e+00 : f32
    %340 = vector.broadcast %cst_107 : f32 to vector<8x128xf32>
    %341 = arith.addf %339, %340 : vector<8x128xf32>
    %cst_108 = arith.constant 5.000000e-01 : f32
    %342 = vector.broadcast %cst_108 : f32 to vector<8x128xf32>
    %343 = arith.mulf %342, %341 : vector<8x128xf32>
    %344 = arith.mulf %333, %274 : vector<8x128xf32>
    %345 = arith.mulf %325, %335 : vector<8x128xf32>
    %346 = arith.addf %344, %345 : vector<8x128xf32>
    %347 = math.tanh %346 : vector<8x128xf32>
    %348 = arith.mulf %343, %347 : vector<8x128xf32>
    %349 = vector.extract_strided_slice %317 {offsets = [0, 0], sizes = [8, 128], strides = [1, 1]} : vector<8x512xf32> to vector<8x128xf32>
    %cst_109 = arith.constant 5.000000e-01 : f32
    %350 = vector.broadcast %cst_109 : f32 to vector<8x128xf32>
    %351 = arith.mulf %350, %349 : vector<8x128xf32>
    %352 = math.tanh %351 : vector<8x128xf32>
    %cst_110 = arith.constant 1.000000e+00 : f32
    %353 = vector.broadcast %cst_110 : f32 to vector<8x128xf32>
    %354 = arith.addf %352, %353 : vector<8x128xf32>
    %cst_111 = arith.constant 5.000000e-01 : f32
    %355 = vector.broadcast %cst_111 : f32 to vector<8x128xf32>
    %356 = arith.mulf %355, %354 : vector<8x128xf32>
    %357 = vector.extract_strided_slice %317 {offsets = [0, 128], sizes = [8, 128], strides = [1, 1]} : vector<8x512xf32> to vector<8x128xf32>
    %cst_112 = arith.constant 5.000000e-01 : f32
    %358 = vector.broadcast %cst_112 : f32 to vector<8x128xf32>
    %359 = arith.mulf %358, %357 : vector<8x128xf32>
    %360 = math.tanh %359 : vector<8x128xf32>
    %cst_113 = arith.constant 1.000000e+00 : f32
    %361 = vector.broadcast %cst_113 : f32 to vector<8x128xf32>
    %362 = arith.addf %360, %361 : vector<8x128xf32>
    %cst_114 = arith.constant 5.000000e-01 : f32
    %363 = vector.broadcast %cst_114 : f32 to vector<8x128xf32>
    %364 = arith.mulf %363, %362 : vector<8x128xf32>
    %365 = vector.extract_strided_slice %317 {offsets = [0, 256], sizes = [8, 128], strides = [1, 1]} : vector<8x512xf32> to vector<8x128xf32>
    %366 = math.tanh %365 : vector<8x128xf32>
    %367 = vector.extract_strided_slice %317 {offsets = [0, 384], sizes = [8, 128], strides = [1, 1]} : vector<8x512xf32> to vector<8x128xf32>
    %cst_115 = arith.constant 5.000000e-01 : f32
    %368 = vector.broadcast %cst_115 : f32 to vector<8x128xf32>
    %369 = arith.mulf %368, %367 : vector<8x128xf32>
    %370 = math.tanh %369 : vector<8x128xf32>
    %cst_116 = arith.constant 1.000000e+00 : f32
    %371 = vector.broadcast %cst_116 : f32 to vector<8x128xf32>
    %372 = arith.addf %370, %371 : vector<8x128xf32>
    %cst_117 = arith.constant 5.000000e-01 : f32
    %373 = vector.broadcast %cst_117 : f32 to vector<8x128xf32>
    %374 = arith.mulf %373, %372 : vector<8x128xf32>
    %375 = arith.mulf %364, %305 : vector<8x128xf32>
    %376 = arith.mulf %356, %366 : vector<8x128xf32>
    %377 = arith.addf %375, %376 : vector<8x128xf32>
    %378 = math.tanh %377 : vector<8x128xf32>
    %379 = arith.mulf %374, %378 : vector<8x128xf32>
    %380 = arith.maximumf %308, %348 : vector<8x128xf32>
    %381 = arith.maximumf %309, %379 : vector<8x128xf32>
    %382 = vector.extract_strided_slice %13 {offsets = [40, 0], sizes = [8, 512], strides = [1, 1]} : vector<64x1024xf32> to vector<8x512xf32>
    %383 = vector.extract_strided_slice %13 {offsets = [16, 512], sizes = [8, 512], strides = [1, 1]} : vector<64x1024xf32> to vector<8x512xf32>
    %384 = arith.truncf %348 : vector<8x128xf32> to vector<8x128xbf16>
    %cst_118 = arith.constant dense<0.000000e+00> : vector<8x512xf32>
    %385 = tpu.matmul %384, %14, %cst_118 {dimension_numbers = #tpu.dot_dimension_numbers<[1], [0], [0], [1], [0, 0, 1, 1], [], []>} : vector<8x128xbf16>, vector<128x512xbf16>, vector<8x512xf32> -> vector<8x512xf32>
    %386 = arith.addf %382, %385 : vector<8x512xf32>
    %387 = arith.truncf %379 : vector<8x128xf32> to vector<8x128xbf16>
    %cst_119 = arith.constant dense<0.000000e+00> : vector<8x512xf32>
    %388 = tpu.matmul %387, %15, %cst_119 {dimension_numbers = #tpu.dot_dimension_numbers<[1], [0], [0], [1], [0, 0, 1, 1], [], []>} : vector<8x128xbf16>, vector<128x512xbf16>, vector<8x512xf32> -> vector<8x512xf32>
    %389 = arith.addf %383, %388 : vector<8x512xf32>
    %390 = vector.extract_strided_slice %386 {offsets = [0, 0], sizes = [8, 128], strides = [1, 1]} : vector<8x512xf32> to vector<8x128xf32>
    %cst_120 = arith.constant 5.000000e-01 : f32
    %391 = vector.broadcast %cst_120 : f32 to vector<8x128xf32>
    %392 = arith.mulf %391, %390 : vector<8x128xf32>
    %393 = math.tanh %392 : vector<8x128xf32>
    %cst_121 = arith.constant 1.000000e+00 : f32
    %394 = vector.broadcast %cst_121 : f32 to vector<8x128xf32>
    %395 = arith.addf %393, %394 : vector<8x128xf32>
    %cst_122 = arith.constant 5.000000e-01 : f32
    %396 = vector.broadcast %cst_122 : f32 to vector<8x128xf32>
    %397 = arith.mulf %396, %395 : vector<8x128xf32>
    %398 = vector.extract_strided_slice %386 {offsets = [0, 128], sizes = [8, 128], strides = [1, 1]} : vector<8x512xf32> to vector<8x128xf32>
    %cst_123 = arith.constant 5.000000e-01 : f32
    %399 = vector.broadcast %cst_123 : f32 to vector<8x128xf32>
    %400 = arith.mulf %399, %398 : vector<8x128xf32>
    %401 = math.tanh %400 : vector<8x128xf32>
    %cst_124 = arith.constant 1.000000e+00 : f32
    %402 = vector.broadcast %cst_124 : f32 to vector<8x128xf32>
    %403 = arith.addf %401, %402 : vector<8x128xf32>
    %cst_125 = arith.constant 5.000000e-01 : f32
    %404 = vector.broadcast %cst_125 : f32 to vector<8x128xf32>
    %405 = arith.mulf %404, %403 : vector<8x128xf32>
    %406 = vector.extract_strided_slice %386 {offsets = [0, 256], sizes = [8, 128], strides = [1, 1]} : vector<8x512xf32> to vector<8x128xf32>
    %407 = math.tanh %406 : vector<8x128xf32>
    %408 = vector.extract_strided_slice %386 {offsets = [0, 384], sizes = [8, 128], strides = [1, 1]} : vector<8x512xf32> to vector<8x128xf32>
    %cst_126 = arith.constant 5.000000e-01 : f32
    %409 = vector.broadcast %cst_126 : f32 to vector<8x128xf32>
    %410 = arith.mulf %409, %408 : vector<8x128xf32>
    %411 = math.tanh %410 : vector<8x128xf32>
    %cst_127 = arith.constant 1.000000e+00 : f32
    %412 = vector.broadcast %cst_127 : f32 to vector<8x128xf32>
    %413 = arith.addf %411, %412 : vector<8x128xf32>
    %cst_128 = arith.constant 5.000000e-01 : f32
    %414 = vector.broadcast %cst_128 : f32 to vector<8x128xf32>
    %415 = arith.mulf %414, %413 : vector<8x128xf32>
    %416 = arith.mulf %405, %346 : vector<8x128xf32>
    %417 = arith.mulf %397, %407 : vector<8x128xf32>
    %418 = arith.addf %416, %417 : vector<8x128xf32>
    %419 = math.tanh %418 : vector<8x128xf32>
    %420 = arith.mulf %415, %419 : vector<8x128xf32>
    %421 = vector.extract_strided_slice %389 {offsets = [0, 0], sizes = [8, 128], strides = [1, 1]} : vector<8x512xf32> to vector<8x128xf32>
    %cst_129 = arith.constant 5.000000e-01 : f32
    %422 = vector.broadcast %cst_129 : f32 to vector<8x128xf32>
    %423 = arith.mulf %422, %421 : vector<8x128xf32>
    %424 = math.tanh %423 : vector<8x128xf32>
    %cst_130 = arith.constant 1.000000e+00 : f32
    %425 = vector.broadcast %cst_130 : f32 to vector<8x128xf32>
    %426 = arith.addf %424, %425 : vector<8x128xf32>
    %cst_131 = arith.constant 5.000000e-01 : f32
    %427 = vector.broadcast %cst_131 : f32 to vector<8x128xf32>
    %428 = arith.mulf %427, %426 : vector<8x128xf32>
    %429 = vector.extract_strided_slice %389 {offsets = [0, 128], sizes = [8, 128], strides = [1, 1]} : vector<8x512xf32> to vector<8x128xf32>
    %cst_132 = arith.constant 5.000000e-01 : f32
    %430 = vector.broadcast %cst_132 : f32 to vector<8x128xf32>
    %431 = arith.mulf %430, %429 : vector<8x128xf32>
    %432 = math.tanh %431 : vector<8x128xf32>
    %cst_133 = arith.constant 1.000000e+00 : f32
    %433 = vector.broadcast %cst_133 : f32 to vector<8x128xf32>
    %434 = arith.addf %432, %433 : vector<8x128xf32>
    %cst_134 = arith.constant 5.000000e-01 : f32
    %435 = vector.broadcast %cst_134 : f32 to vector<8x128xf32>
    %436 = arith.mulf %435, %434 : vector<8x128xf32>
    %437 = vector.extract_strided_slice %389 {offsets = [0, 256], sizes = [8, 128], strides = [1, 1]} : vector<8x512xf32> to vector<8x128xf32>
    %438 = math.tanh %437 : vector<8x128xf32>
    %439 = vector.extract_strided_slice %389 {offsets = [0, 384], sizes = [8, 128], strides = [1, 1]} : vector<8x512xf32> to vector<8x128xf32>
    %cst_135 = arith.constant 5.000000e-01 : f32
    %440 = vector.broadcast %cst_135 : f32 to vector<8x128xf32>
    %441 = arith.mulf %440, %439 : vector<8x128xf32>
    %442 = math.tanh %441 : vector<8x128xf32>
    %cst_136 = arith.constant 1.000000e+00 : f32
    %443 = vector.broadcast %cst_136 : f32 to vector<8x128xf32>
    %444 = arith.addf %442, %443 : vector<8x128xf32>
    %cst_137 = arith.constant 5.000000e-01 : f32
    %445 = vector.broadcast %cst_137 : f32 to vector<8x128xf32>
    %446 = arith.mulf %445, %444 : vector<8x128xf32>
    %447 = arith.mulf %436, %377 : vector<8x128xf32>
    %448 = arith.mulf %428, %438 : vector<8x128xf32>
    %449 = arith.addf %447, %448 : vector<8x128xf32>
    %450 = math.tanh %449 : vector<8x128xf32>
    %451 = arith.mulf %446, %450 : vector<8x128xf32>
    %452 = arith.maximumf %380, %420 : vector<8x128xf32>
    %453 = arith.maximumf %381, %451 : vector<8x128xf32>
    %454 = vector.extract_strided_slice %13 {offsets = [48, 0], sizes = [8, 512], strides = [1, 1]} : vector<64x1024xf32> to vector<8x512xf32>
    %455 = vector.extract_strided_slice %13 {offsets = [8, 512], sizes = [8, 512], strides = [1, 1]} : vector<64x1024xf32> to vector<8x512xf32>
    %456 = arith.truncf %420 : vector<8x128xf32> to vector<8x128xbf16>
    %cst_138 = arith.constant dense<0.000000e+00> : vector<8x512xf32>
    %457 = tpu.matmul %456, %14, %cst_138 {dimension_numbers = #tpu.dot_dimension_numbers<[1], [0], [0], [1], [0, 0, 1, 1], [], []>} : vector<8x128xbf16>, vector<128x512xbf16>, vector<8x512xf32> -> vector<8x512xf32>
    %458 = arith.addf %454, %457 : vector<8x512xf32>
    %459 = arith.truncf %451 : vector<8x128xf32> to vector<8x128xbf16>
    %cst_139 = arith.constant dense<0.000000e+00> : vector<8x512xf32>
    %460 = tpu.matmul %459, %15, %cst_139 {dimension_numbers = #tpu.dot_dimension_numbers<[1], [0], [0], [1], [0, 0, 1, 1], [], []>} : vector<8x128xbf16>, vector<128x512xbf16>, vector<8x512xf32> -> vector<8x512xf32>
    %461 = arith.addf %455, %460 : vector<8x512xf32>
    %462 = vector.extract_strided_slice %458 {offsets = [0, 0], sizes = [8, 128], strides = [1, 1]} : vector<8x512xf32> to vector<8x128xf32>
    %cst_140 = arith.constant 5.000000e-01 : f32
    %463 = vector.broadcast %cst_140 : f32 to vector<8x128xf32>
    %464 = arith.mulf %463, %462 : vector<8x128xf32>
    %465 = math.tanh %464 : vector<8x128xf32>
    %cst_141 = arith.constant 1.000000e+00 : f32
    %466 = vector.broadcast %cst_141 : f32 to vector<8x128xf32>
    %467 = arith.addf %465, %466 : vector<8x128xf32>
    %cst_142 = arith.constant 5.000000e-01 : f32
    %468 = vector.broadcast %cst_142 : f32 to vector<8x128xf32>
    %469 = arith.mulf %468, %467 : vector<8x128xf32>
    %470 = vector.extract_strided_slice %458 {offsets = [0, 128], sizes = [8, 128], strides = [1, 1]} : vector<8x512xf32> to vector<8x128xf32>
    %cst_143 = arith.constant 5.000000e-01 : f32
    %471 = vector.broadcast %cst_143 : f32 to vector<8x128xf32>
    %472 = arith.mulf %471, %470 : vector<8x128xf32>
    %473 = math.tanh %472 : vector<8x128xf32>
    %cst_144 = arith.constant 1.000000e+00 : f32
    %474 = vector.broadcast %cst_144 : f32 to vector<8x128xf32>
    %475 = arith.addf %473, %474 : vector<8x128xf32>
    %cst_145 = arith.constant 5.000000e-01 : f32
    %476 = vector.broadcast %cst_145 : f32 to vector<8x128xf32>
    %477 = arith.mulf %476, %475 : vector<8x128xf32>
    %478 = vector.extract_strided_slice %458 {offsets = [0, 256], sizes = [8, 128], strides = [1, 1]} : vector<8x512xf32> to vector<8x128xf32>
    %479 = math.tanh %478 : vector<8x128xf32>
    %480 = vector.extract_strided_slice %458 {offsets = [0, 384], sizes = [8, 128], strides = [1, 1]} : vector<8x512xf32> to vector<8x128xf32>
    %cst_146 = arith.constant 5.000000e-01 : f32
    %481 = vector.broadcast %cst_146 : f32 to vector<8x128xf32>
    %482 = arith.mulf %481, %480 : vector<8x128xf32>
    %483 = math.tanh %482 : vector<8x128xf32>
    %cst_147 = arith.constant 1.000000e+00 : f32
    %484 = vector.broadcast %cst_147 : f32 to vector<8x128xf32>
    %485 = arith.addf %483, %484 : vector<8x128xf32>
    %cst_148 = arith.constant 5.000000e-01 : f32
    %486 = vector.broadcast %cst_148 : f32 to vector<8x128xf32>
    %487 = arith.mulf %486, %485 : vector<8x128xf32>
    %488 = arith.mulf %477, %418 : vector<8x128xf32>
    %489 = arith.mulf %469, %479 : vector<8x128xf32>
    %490 = arith.addf %488, %489 : vector<8x128xf32>
    %491 = math.tanh %490 : vector<8x128xf32>
    %492 = arith.mulf %487, %491 : vector<8x128xf32>
    %493 = vector.extract_strided_slice %461 {offsets = [0, 0], sizes = [8, 128], strides = [1, 1]} : vector<8x512xf32> to vector<8x128xf32>
    %cst_149 = arith.constant 5.000000e-01 : f32
    %494 = vector.broadcast %cst_149 : f32 to vector<8x128xf32>
    %495 = arith.mulf %494, %493 : vector<8x128xf32>
    %496 = math.tanh %495 : vector<8x128xf32>
    %cst_150 = arith.constant 1.000000e+00 : f32
    %497 = vector.broadcast %cst_150 : f32 to vector<8x128xf32>
    %498 = arith.addf %496, %497 : vector<8x128xf32>
    %cst_151 = arith.constant 5.000000e-01 : f32
    %499 = vector.broadcast %cst_151 : f32 to vector<8x128xf32>
    %500 = arith.mulf %499, %498 : vector<8x128xf32>
    %501 = vector.extract_strided_slice %461 {offsets = [0, 128], sizes = [8, 128], strides = [1, 1]} : vector<8x512xf32> to vector<8x128xf32>
    %cst_152 = arith.constant 5.000000e-01 : f32
    %502 = vector.broadcast %cst_152 : f32 to vector<8x128xf32>
    %503 = arith.mulf %502, %501 : vector<8x128xf32>
    %504 = math.tanh %503 : vector<8x128xf32>
    %cst_153 = arith.constant 1.000000e+00 : f32
    %505 = vector.broadcast %cst_153 : f32 to vector<8x128xf32>
    %506 = arith.addf %504, %505 : vector<8x128xf32>
    %cst_154 = arith.constant 5.000000e-01 : f32
    %507 = vector.broadcast %cst_154 : f32 to vector<8x128xf32>
    %508 = arith.mulf %507, %506 : vector<8x128xf32>
    %509 = vector.extract_strided_slice %461 {offsets = [0, 256], sizes = [8, 128], strides = [1, 1]} : vector<8x512xf32> to vector<8x128xf32>
    %510 = math.tanh %509 : vector<8x128xf32>
    %511 = vector.extract_strided_slice %461 {offsets = [0, 384], sizes = [8, 128], strides = [1, 1]} : vector<8x512xf32> to vector<8x128xf32>
    %cst_155 = arith.constant 5.000000e-01 : f32
    %512 = vector.broadcast %cst_155 : f32 to vector<8x128xf32>
    %513 = arith.mulf %512, %511 : vector<8x128xf32>
    %514 = math.tanh %513 : vector<8x128xf32>
    %cst_156 = arith.constant 1.000000e+00 : f32
    %515 = vector.broadcast %cst_156 : f32 to vector<8x128xf32>
    %516 = arith.addf %514, %515 : vector<8x128xf32>
    %cst_157 = arith.constant 5.000000e-01 : f32
    %517 = vector.broadcast %cst_157 : f32 to vector<8x128xf32>
    %518 = arith.mulf %517, %516 : vector<8x128xf32>
    %519 = arith.mulf %508, %449 : vector<8x128xf32>
    %520 = arith.mulf %500, %510 : vector<8x128xf32>
    %521 = arith.addf %519, %520 : vector<8x128xf32>
    %522 = math.tanh %521 : vector<8x128xf32>
    %523 = arith.mulf %518, %522 : vector<8x128xf32>
    %524 = arith.maximumf %452, %492 : vector<8x128xf32>
    %525 = arith.maximumf %453, %523 : vector<8x128xf32>
    %526 = vector.extract_strided_slice %13 {offsets = [56, 0], sizes = [8, 512], strides = [1, 1]} : vector<64x1024xf32> to vector<8x512xf32>
    %527 = vector.extract_strided_slice %13 {offsets = [0, 512], sizes = [8, 512], strides = [1, 1]} : vector<64x1024xf32> to vector<8x512xf32>
    %528 = arith.truncf %492 : vector<8x128xf32> to vector<8x128xbf16>
    %cst_158 = arith.constant dense<0.000000e+00> : vector<8x512xf32>
    %529 = tpu.matmul %528, %14, %cst_158 {dimension_numbers = #tpu.dot_dimension_numbers<[1], [0], [0], [1], [0, 0, 1, 1], [], []>} : vector<8x128xbf16>, vector<128x512xbf16>, vector<8x512xf32> -> vector<8x512xf32>
    %530 = arith.addf %526, %529 : vector<8x512xf32>
    %531 = arith.truncf %523 : vector<8x128xf32> to vector<8x128xbf16>
    %cst_159 = arith.constant dense<0.000000e+00> : vector<8x512xf32>
    %532 = tpu.matmul %531, %15, %cst_159 {dimension_numbers = #tpu.dot_dimension_numbers<[1], [0], [0], [1], [0, 0, 1, 1], [], []>} : vector<8x128xbf16>, vector<128x512xbf16>, vector<8x512xf32> -> vector<8x512xf32>
    %533 = arith.addf %527, %532 : vector<8x512xf32>
    %534 = vector.extract_strided_slice %530 {offsets = [0, 0], sizes = [8, 128], strides = [1, 1]} : vector<8x512xf32> to vector<8x128xf32>
    %cst_160 = arith.constant 5.000000e-01 : f32
    %535 = vector.broadcast %cst_160 : f32 to vector<8x128xf32>
    %536 = arith.mulf %535, %534 : vector<8x128xf32>
    %537 = math.tanh %536 : vector<8x128xf32>
    %cst_161 = arith.constant 1.000000e+00 : f32
    %538 = vector.broadcast %cst_161 : f32 to vector<8x128xf32>
    %539 = arith.addf %537, %538 : vector<8x128xf32>
    %cst_162 = arith.constant 5.000000e-01 : f32
    %540 = vector.broadcast %cst_162 : f32 to vector<8x128xf32>
    %541 = arith.mulf %540, %539 : vector<8x128xf32>
    %542 = vector.extract_strided_slice %530 {offsets = [0, 128], sizes = [8, 128], strides = [1, 1]} : vector<8x512xf32> to vector<8x128xf32>
    %cst_163 = arith.constant 5.000000e-01 : f32
    %543 = vector.broadcast %cst_163 : f32 to vector<8x128xf32>
    %544 = arith.mulf %543, %542 : vector<8x128xf32>
    %545 = math.tanh %544 : vector<8x128xf32>
    %cst_164 = arith.constant 1.000000e+00 : f32
    %546 = vector.broadcast %cst_164 : f32 to vector<8x128xf32>
    %547 = arith.addf %545, %546 : vector<8x128xf32>
    %cst_165 = arith.constant 5.000000e-01 : f32
    %548 = vector.broadcast %cst_165 : f32 to vector<8x128xf32>
    %549 = arith.mulf %548, %547 : vector<8x128xf32>
    %550 = vector.extract_strided_slice %530 {offsets = [0, 256], sizes = [8, 128], strides = [1, 1]} : vector<8x512xf32> to vector<8x128xf32>
    %551 = math.tanh %550 : vector<8x128xf32>
    %552 = vector.extract_strided_slice %530 {offsets = [0, 384], sizes = [8, 128], strides = [1, 1]} : vector<8x512xf32> to vector<8x128xf32>
    %cst_166 = arith.constant 5.000000e-01 : f32
    %553 = vector.broadcast %cst_166 : f32 to vector<8x128xf32>
    %554 = arith.mulf %553, %552 : vector<8x128xf32>
    %555 = math.tanh %554 : vector<8x128xf32>
    %cst_167 = arith.constant 1.000000e+00 : f32
    %556 = vector.broadcast %cst_167 : f32 to vector<8x128xf32>
    %557 = arith.addf %555, %556 : vector<8x128xf32>
    %cst_168 = arith.constant 5.000000e-01 : f32
    %558 = vector.broadcast %cst_168 : f32 to vector<8x128xf32>
    %559 = arith.mulf %558, %557 : vector<8x128xf32>
    %560 = arith.mulf %549, %490 : vector<8x128xf32>
    %561 = arith.mulf %541, %551 : vector<8x128xf32>
    %562 = arith.addf %560, %561 : vector<8x128xf32>
    %563 = math.tanh %562 : vector<8x128xf32>
    %564 = arith.mulf %559, %563 : vector<8x128xf32>
    %565 = vector.extract_strided_slice %533 {offsets = [0, 0], sizes = [8, 128], strides = [1, 1]} : vector<8x512xf32> to vector<8x128xf32>
    %cst_169 = arith.constant 5.000000e-01 : f32
    %566 = vector.broadcast %cst_169 : f32 to vector<8x128xf32>
    %567 = arith.mulf %566, %565 : vector<8x128xf32>
    %568 = math.tanh %567 : vector<8x128xf32>
    %cst_170 = arith.constant 1.000000e+00 : f32
    %569 = vector.broadcast %cst_170 : f32 to vector<8x128xf32>
    %570 = arith.addf %568, %569 : vector<8x128xf32>
    %cst_171 = arith.constant 5.000000e-01 : f32
    %571 = vector.broadcast %cst_171 : f32 to vector<8x128xf32>
    %572 = arith.mulf %571, %570 : vector<8x128xf32>
    %573 = vector.extract_strided_slice %533 {offsets = [0, 128], sizes = [8, 128], strides = [1, 1]} : vector<8x512xf32> to vector<8x128xf32>
    %cst_172 = arith.constant 5.000000e-01 : f32
    %574 = vector.broadcast %cst_172 : f32 to vector<8x128xf32>
    %575 = arith.mulf %574, %573 : vector<8x128xf32>
    %576 = math.tanh %575 : vector<8x128xf32>
    %cst_173 = arith.constant 1.000000e+00 : f32
    %577 = vector.broadcast %cst_173 : f32 to vector<8x128xf32>
    %578 = arith.addf %576, %577 : vector<8x128xf32>
    %cst_174 = arith.constant 5.000000e-01 : f32
    %579 = vector.broadcast %cst_174 : f32 to vector<8x128xf32>
    %580 = arith.mulf %579, %578 : vector<8x128xf32>
    %581 = vector.extract_strided_slice %533 {offsets = [0, 256], sizes = [8, 128], strides = [1, 1]} : vector<8x512xf32> to vector<8x128xf32>
    %582 = math.tanh %581 : vector<8x128xf32>
    %583 = vector.extract_strided_slice %533 {offsets = [0, 384], sizes = [8, 128], strides = [1, 1]} : vector<8x512xf32> to vector<8x128xf32>
    %cst_175 = arith.constant 5.000000e-01 : f32
    %584 = vector.broadcast %cst_175 : f32 to vector<8x128xf32>
    %585 = arith.mulf %584, %583 : vector<8x128xf32>
    %586 = math.tanh %585 : vector<8x128xf32>
    %cst_176 = arith.constant 1.000000e+00 : f32
    %587 = vector.broadcast %cst_176 : f32 to vector<8x128xf32>
    %588 = arith.addf %586, %587 : vector<8x128xf32>
    %cst_177 = arith.constant 5.000000e-01 : f32
    %589 = vector.broadcast %cst_177 : f32 to vector<8x128xf32>
    %590 = arith.mulf %589, %588 : vector<8x128xf32>
    %591 = arith.mulf %580, %521 : vector<8x128xf32>
    %592 = arith.mulf %572, %582 : vector<8x128xf32>
    %593 = arith.addf %591, %592 : vector<8x128xf32>
    %594 = math.tanh %593 : vector<8x128xf32>
    %595 = arith.mulf %590, %594 : vector<8x128xf32>
    %596 = arith.maximumf %524, %564 : vector<8x128xf32>
    %597 = arith.maximumf %525, %595 : vector<8x128xf32>
    %c0_178 = arith.constant 0 : index
    %c0_179 = arith.constant 0 : index
    %598 = vector.load %arg6[%c0_178, %c0_179] : memref<8x256xf32, #tpu.memory_space<vmem>>, vector<8x128xf32>
    tpu.vector_store %arg6[%c0_178, %c0_179], %596 {strides = array<i32>} : memref<8x256xf32, #tpu.memory_space<vmem>>, vector<8x128xf32>,
    %c0_180 = arith.constant 0 : index
    %c128 = arith.constant 128 : index
    %599 = vector.load %arg6[%c0_180, %c128] : memref<8x256xf32, #tpu.memory_space<vmem>>, vector<8x128xf32>
    tpu.vector_store %arg6[%c0_180, %c128], %597 {strides = array<i32>} : memref<8x256xf32, #tpu.memory_space<vmem>>, vector<8x128xf32>,
    return
  }
}

</mosaic_0001>

<llo_original>
// kernel: sentence_encoder_forward.1
$region0: #{sentence_encoder_forward.1}
  #allocation0 [shape = 'u32[]', space=smem, size = 0x4, offset = 0x4, fixed_abs, tag = 'smem constant byte address 0x4 - core index']
  #allocation1 [shape = 'u32[144,128]{1,0:T(1,128)}', space=vmem, size = 0x12000, scoped, tag = 'internal scratch']
  %s0 = inlined_call_operand.vmem [shape: s32[64,1], index: 0, kind: input, shape index: {}]
  %s1 = inlined_call_operand.vmem [shape: f32[32,128], index: 1, kind: input, shape index: {}]
  %s2 = inlined_call_operand.hbm [shape: bf16[128,1024], index: 2, kind: input, shape index: {}]
  %s3 = inlined_call_operand.hbm [shape: bf16[128,512], index: 3, kind: input, shape index: {}]
  %s4 = inlined_call_operand.hbm [shape: bf16[128,512], index: 4, kind: input, shape index: {}]
  %s5 = inlined_call_operand.vmem [shape: f32[1,1024], index: 5, kind: input, shape index: {}]
  %s6 = inlined_call_operand.hbm [shape: f32[8,256], index: 6, kind: output, shape index: {}]
  %s7 = sld [smem:[#allocation0]]
  $region46: #{sentence_encoder_forward.1} parent=0
    _
  %s9 = ssub.s32 1, %s7
  %s10 = scalar_select 0, %s9, %s7
  $region1: #{sentence_encoder_forward.1} parent=0
    #allocation2 [shape = 'u8[262144]{0}', space=vmem, size = 0x40000, scoped, tag = 'input window, operand 2, single buffered']
    #allocation3 [shape = 's32[1]{0}', space=sflag, size = 0x4, scoped, tag = 'scoped memory for sentence_encoder_forward.1']
    #allocation4 [shape = 's32[1]{0}', space=sflag, size = 0x4, scoped, tag = 'scoped memory for sentence_encoder_forward.1']
    #allocation5 [shape = 'u8[131072]{0}', space=vmem, size = 0x20000, scoped, tag = 'input window, operand 3, single buffered']
    #allocation6 [shape = 's32[1]{0}', space=sflag, size = 0x4, scoped, tag = 'scoped memory for sentence_encoder_forward.1']
    #allocation7 [shape = 'u8[131072]{0}', space=vmem, size = 0x20000, scoped, tag = 'input window, operand 4, single buffered']
    #allocation8 [shape = 'u8[8192]{0}', space=vmem, size = 0x2000, scoped, tag = 'output window, operand 0, single buffered']
    %11 = vsyncpa [#allocation3], 0
    %12 = vsyncpa [#allocation6], 0
    %13 = vsyncpa [#allocation4], 0
    // Predicated region
    $region2: #{sentence_encoder_forward.1} parent=1 // pred_check
      _
    $region3: #{sentence_encoder_forward.1} parent=1 // pred_check_branch
      %15 = sbr.rel (0) target = $region5
    $region4: #{sentence_encoder_forward.1} parent=1 // pred_region
      _
    $region5: #{sentence_encoder_forward.1} parent=1 // pred_fallthru
      _
    // Predicated region
    $region6: #{sentence_encoder_forward.1} parent=1 // pred_check
      _
    $region7: #{sentence_encoder_forward.1} parent=1 // pred_check_branch
      %17 = sbr.rel (0) target = $region9
    $region8: #{sentence_encoder_forward.1} parent=1 // pred_region
      _
    $region9: #{sentence_encoder_forward.1} parent=1 // pred_fallthru
      _
    // Predicated region
    $region10: #{sentence_encoder_forward.1} parent=1 // pred_check
      _
    $region11: #{sentence_encoder_forward.1} parent=1 // pred_check_branch
      %19 = sbr.rel (0) target = $region13
    $region12: #{sentence_encoder_forward.1} parent=1 // pred_region
      %s21 = ssub.s32 8192, 8192
      %22 = vsyncadd [#allocation3], %s21
      %s23 = sshll.u32 [#allocation2], 4
      %s24 = int_to_ptr.vmem [resolvable:$true] %s23
      %29 = dma.hbm_to_vmem [thread:$0]  %s2, 8192, %s24, [#allocation3], 512, 512, 32
    $region13: #{sentence_encoder_forward.1} parent=1 // pred_fallthru
      _
    // Predicated region
    $region14: #{sentence_encoder_forward.1} parent=1 // pred_check
      _
    $region15: #{sentence_encoder_forward.1} parent=1 // pred_check_branch
      %31 = sbr.rel (0) target = $region17
    $region16: #{sentence_encoder_forward.1} parent=1 // pred_region
      %s33 = ssub.s32 4096, 4096
      %34 = vsyncadd [#allocation6], %s33
      %s35 = sshll.u32 [#allocation5], 4
      %s36 = int_to_ptr.vmem [resolvable:$true] %s35
      %41 = dma.hbm_to_vmem [thread:$0]  %s3, 4096, %s36, [#allocation6], 256, 256, 16
    $region17: #{sentence_encoder_forward.1} parent=1 // pred_fallthru
      _
    // Predicated region
    $region18: #{sentence_encoder_forward.1} parent=1 // pred_check
      _
    $region19: #{sentence_encoder_forward.1} parent=1 // pred_check_branch
      %43 = sbr.rel (0) target = $region21
    $region20: #{sentence_encoder_forward.1} parent=1 // pred_region
      %s45 = ssub.s32 4096, 4096
      %46 = vsyncadd [#allocation6], %s45
      %s47 = sshll.u32 [#allocation7], 4
      %s48 = int_to_ptr.vmem [resolvable:$true] %s47
      %53 = dma.hbm_to_vmem [thread:$0]  %s4, 4096, %s48, [#allocation6], 256, 256, 16
    $region21: #{sentence_encoder_forward.1} parent=1 // pred_fallthru
      _
    // Predicated region
    $region22: #{sentence_encoder_forward.1} parent=1 // pred_check
      _
    $region23: #{sentence_encoder_forward.1} parent=1 // pred_check_branch
      %55 = sbr.rel (0) target = $region25
    $region24: #{sentence_encoder_forward.1} parent=1 // pred_region
      _
    $region25: #{sentence_encoder_forward.1} parent=1 // pred_fallthru
      _
    // Predicated region
    $region26: #{sentence_encoder_forward.1} parent=1 // pred_check
      _
    $region27: #{sentence_encoder_forward.1} parent=1 // pred_check_branch
      %57 = sbr.rel (0) target = $region29
    $region28: #{sentence_encoder_forward.1} parent=1 // pred_region
      %58 = dma.done [#allocation3], 8192
    $region29: #{sentence_encoder_forward.1} parent=1 // pred_fallthru
      _
    // Predicated region
    $region30: #{sentence_encoder_forward.1} parent=1 // pred_check
      _
    $region31: #{sentence_encoder_forward.1} parent=1 // pred_check_branch
      %60 = sbr.rel (0) target = $region33
    $region32: #{sentence_encoder_forward.1} parent=1 // pred_region
      %61 = dma.done [#allocation6], 4096
    $region33: #{sentence_encoder_forward.1} parent=1 // pred_fallthru
      _
    // Predicated region
    $region34: #{sentence_encoder_forward.1} parent=1 // pred_check
      _
    $region35: #{sentence_encoder_forward.1} parent=1 // pred_check_branch
      %63 = sbr.rel (0) target = $region37
    $region36: #{sentence_encoder_forward.1} parent=1 // pred_region
      %64 = dma.done [#allocation6], 4096
    $region37: #{sentence_encoder_forward.1} parent=1 // pred_fallthru
      _
    %v66 = vld [vmem:[%s0] sm:$0xff]
    %v67 = vld [vmem:[%s0 + $0x8] sm:$0xff]
    %v68 = vld [vmem:[%s0 + $0x10] sm:$0xff]
    %v69 = vld [vmem:[%s0 + $0x18] sm:$0xff]
    %v70 = vld [vmem:[%s0 + $0x20] sm:$0xff]
    %v71 = vld [vmem:[%s0 + $0x28] sm:$0xff]
    %v72 = vld [vmem:[%s0 + $0x30] sm:$0xff]
    %v73 = vld [vmem:[%s0 + $0x38] sm:$0xff]
    %v74 = vlaneseq
    %v75 = vand.u32 %v74, 127
    %76 = vset.pattern.permute.xlu0 0
    %77 = vperm.xlu0 %76, %v66
    %v78 = vpop.permute.xlu0 %77
    %79 = vset.pattern.permute.xlu0 0
    %80 = vperm.xlu0 %79, %v67
    %v81 = vpop.permute.xlu0 %80
    %82 = vset.pattern.permute.xlu0 0
    %83 = vperm.xlu0 %82, %v68
    %v84 = vpop.permute.xlu0 %83
    %85 = vset.pattern.permute.xlu0 0
    %86 = vperm.xlu0 %85, %v69
    %v87 = vpop.permute.xlu0 %86
    %88 = vset.pattern.permute.xlu0 0
    %89 = vperm.xlu0 %88, %v70
    %v90 = vpop.permute.xlu0 %89
    %91 = vset.pattern.permute.xlu0 0
    %92 = vperm.xlu0 %91, %v71
    %v93 = vpop.permute.xlu0 %92
    %94 = vset.pattern.permute.xlu0 0
    %95 = vperm.xlu0 %94, %v72
    %v96 = vpop.permute.xlu0 %95
    %97 = vset.pattern.permute.xlu0 0
    %98 = vperm.xlu0 %97, %v73
    %v99 = vpop.permute.xlu0 %98
    %vm100 = vcmp.eq.s32.totalorder %v78, %v75
    %vm101 = vcmp.eq.s32.totalorder %v81, %v75
    %vm102 = vcmp.eq.s32.totalorder %v84, %v75
    %vm103 = vcmp.eq.s32.totalorder %v87, %v75
    %vm104 = vcmp.eq.s32.totalorder %v90, %v75
    %vm105 = vcmp.eq.s32.totalorder %v93, %v75
    %vm106 = vcmp.eq.s32.totalorder %v96, %v75
    %vm107 = vcmp.eq.s32.totalorder %v99, %v75
    %v108 = vsel %vm100, 1, 0
    %v109 = vsel %vm101, 1, 0
    %v110 = vsel %vm102, 1, 0
    %v111 = vsel %vm103, 1, 0
    %v112 = vsel %vm104, 1, 0
    %v113 = vsel %vm105, 1, 0
    %v114 = vsel %vm106, 1, 0
    %v115 = vsel %vm107, 1, 0
    %v116 = vcvt.s32.f32 %v108
    %v117 = vcvt.s32.f32 %v109
    %v118 = vcvt.s32.f32 %v110
    %v119 = vcvt.s32.f32 %v111
    %v120 = vcvt.s32.f32 %v112
    %v121 = vcvt.s32.f32 %v113
    %v122 = vcvt.s32.f32 %v114
    %v123 = vcvt.s32.f32 %v115
    %v124 = vld [vmem:[%s1] sm:$0xff]
    %v125 = vld [vmem:[%s1 + $0x8] sm:$0xff]
    %v126 = vld [vmem:[%s1 + $0x10] sm:$0xff]
    %v127 = vld [vmem:[%s1 + $0x18] sm:$0xff]
    %vm128 = vcmask 261120
    %v130 = vsel %vm128, %v116, 0
    %v133 = vsel %vm128, %v117, 0
    %v136 = vsel %vm128, %v118, 0
    %v139 = vsel %vm128, %v119, 0
    %v142 = vsel %vm128, %v120, 0
    %v145 = vsel %vm128, %v121, 0
    %v148 = vsel %vm128, %v122, 0
    %v151 = vsel %vm128, %v123, 0
    %153 = vmatprep.subr.mxu0 0.0
    %154 = vmatpush1.msra.mxu0 %v124
    %155 = vmatprep.subr.mxu0 0.0
    %156 = vmatpush1.msra.mxu0 %v125
    %157 = vmatprep.subr.mxu0 0.0
    %158 = vmatpush1.msra.mxu0 %v126
    %159 = vmatprep.subr.mxu0 0.0
    %160 = vmatpush1.msra.mxu0 %v127
    %161 = vmatprep.subr.mxu0 0.0
    %162 = vmatpush1.msra.mxu0 0.0
    %163 = vmatprep.subr.mxu0 0.0
    %164 = vmatpush1.msra.mxu0 0.0
    %165 = vmatprep.subr.mxu0 0.0
    %166 = vmatpush1.msra.mxu0 0.0
    %167 = vmatprep.subr.mxu0 0.0
    %168 = vmatpush1.msra.mxu0 0.0
    %169 = vmatprep.subr.mxu0 0.0
    %170 = vmatpush1.msra.mxu0 0.0
    %171 = vmatprep.subr.mxu0 0.0
    %172 = vmatpush1.msra.mxu0 0.0
    %173 = vmatprep.subr.mxu0 0.0
    %174 = vmatpush1.msra.mxu0 0.0
    %175 = vmatprep.subr.mxu0 0.0
    %176 = vmatpush1.msra.mxu0 0.0
    %177 = vmatprep.subr.mxu0 0.0
    %178 = vmatpush1.msra.mxu0 0.0
    %179 = vmatprep.subr.mxu0 0.0
    %180 = vmatpush1.msra.mxu0 0.0
    %181 = vmatprep.subr.mxu0 0.0
    %182 = vmatpush1.msra.mxu0 0.0
    %183 = vmatprep.subr.mxu0 0.0
    %184 = vmatpush1.msra.mxu0 0.0
    %185 = vmatprep.subr.mxu0 0.0
    %186 = vmatpush1.msra.mxu0 0.0
    %187 = vmatprep.subr.mxu0 0.0
    %188 = vmatpush1.msra.mxu0 0.0
    %189 = vmatprep.subr.mxu0 0.0
    %190 = vmatpush1.msra.mxu0 0.0
    %191 = vmatprep.subr.mxu0 0.0
    %192 = vmatpush1.msra.mxu0 0.0
    %193 = vmatprep.subr.mxu0 0.0
    %194 = vmatpush1.msra.mxu0 0.0
    %195 = vmatprep.subr.mxu0 0.0
    %196 = vmatpush1.msra.mxu0 0.0
    %197 = vmatprep.subr.mxu0 0.0
    %198 = vmatpush1.msra.mxu0 0.0
    %199 = vmatprep.subr.mxu0 0.0
    %200 = vmatpush1.msra.mxu0 0.0
    %201 = vmatprep.subr.mxu0 0.0
    %202 = vmatpush1.msra.mxu0 0.0
    %203 = vmatprep.subr.mxu0 0.0
    %204 = vmatpush1.msra.mxu0 0.0
    %205 = vmatprep.subr.mxu0 0.0
    %206 = vmatpush1.msra.mxu0 0.0
    %207 = vmatprep.subr.mxu0 0.0
    %208 = vmatpush1.msra.mxu0 0.0
    %209 = vmatprep.subr.mxu0 0.0
    %210 = vmatpush1.msra.mxu0 0.0
    %211 = vmatprep.subr.mxu0 0.0
    %212 = vmatpush1.msra.mxu0 0.0
    %213 = vmatprep.subr.mxu0 0.0
    %214 = vmatpush1.msra.mxu0 0.0
    %215 = vmatprep.subr.mxu0 0.0
    %216 = vmatpush1.msra.mxu0 0.0
    %217 = vmatprep.mubr.f32.mxu0 0.0
    %218 = vmatmul.mubr.f32.gmra.mrb[0].mxu0 %v130
    %v219 = vpop.f32.mrb[0].mxu0
    %v220 = vadd.f32 0.0, %v219
    %v221 = vpop.f32.mrb[0].mxu0
    %222 = vmatprep.mubr.f32.mxu0 0.0
    %223 = vmatmul.mubr.f32.gmra.mrb[0].mxu0 %v133
    %v224 = vpop.f32.mrb[0].mxu0
    %v225 = vadd.f32 0.0, %v224
    %v226 = vpop.f32.mrb[0].mxu0
    %227 = vmatprep.mubr.f32.mxu0 0.0
    %228 = vmatmul.mubr.f32.gmra.mrb[0].mxu0 %v136
    %v229 = vpop.f32.mrb[0].mxu0
    %v230 = vadd.f32 0.0, %v229
    %v231 = vpop.f32.mrb[0].mxu0
    %232 = vmatprep.mubr.f32.mxu0 0.0
    %233 = vmatmul.mubr.f32.gmra.mrb[0].mxu0 %v139
    %v234 = vpop.f32.mrb[0].mxu0
    %v235 = vadd.f32 0.0, %v234
    %v236 = vpop.f32.mrb[0].mxu0
    %237 = vmatprep.mubr.f32.mxu0 0.0
    %238 = vmatmul.mubr.f32.gmra.mrb[0].mxu0 %v142
    %v239 = vpop.f32.mrb[0].mxu0
    %v240 = vadd.f32 0.0, %v239
    %v241 = vpop.f32.mrb[0].mxu0
    %242 = vmatprep.mubr.f32.mxu0 0.0
    %243 = vmatmul.mubr.f32.gmra.mrb[0].mxu0 %v145
    %v244 = vpop.f32.mrb[0].mxu0
    %v245 = vadd.f32 0.0, %v244
    %v246 = vpop.f32.mrb[0].mxu0
    %247 = vmatprep.mubr.f32.mxu0 0.0
    %248 = vmatmul.mubr.f32.gmra.mrb[0].mxu0 %v148
    %v249 = vpop.f32.mrb[0].mxu0
    %v250 = vadd.f32 0.0, %v249
    %v251 = vpop.f32.mrb[0].mxu0
    %252 = vmatprep.mubr.f32.mxu0 0.0
    %253 = vmatmul.mubr.f32.gmra.mrb[0].mxu0 %v151
    %v254 = vpop.f32.mrb[0].mxu0
    %v255 = vadd.f32 0.0, %v254
    %v256 = vpop.f32.mrb[0].mxu0
    %257 = vdwg.mxu0
    %v258 = vpack.c.bf16 %v225, %v220
    %v259 = vpack.c.bf16 %v235, %v230
    %v260 = vpack.c.bf16 %v245, %v240
    %v261 = vpack.c.bf16 %v255, %v250
    %v262 = vld [vmem:[#allocation2] sm:$0xff]
    %v263 = vld [vmem:[#allocation2 + $0x8] sm:$0xff]
    %v264 = vld [vmem:[#allocation2 + $0x10] sm:$0xff]
    %v265 = vld [vmem:[#allocation2 + $0x18] sm:$0xff]
    %v266 = vld [vmem:[#allocation2 + $0x20] sm:$0xff]
    %v267 = vld [vmem:[#allocation2 + $0x28] sm:$0xff]
    %v268 = vld [vmem:[#allocation2 + $0x30] sm:$0xff]
    %v269 = vld [vmem:[#allocation2 + $0x38] sm:$0xff]
    %v270 = vld [vmem:[#allocation2 + $0x40] sm:$0xff]
    %v271 = vld [vmem:[#allocation2 + $0x48] sm:$0xff]
    %v272 = vld [vmem:[#allocation2 + $0x50] sm:$0xff]
    %v273 = vld [vmem:[#allocation2 + $0x58] sm:$0xff]
    %v274 = vld [vmem:[#allocation2 + $0x60] sm:$0xff]
    %v275 = vld [vmem:[#allocation2 + $0x68] sm:$0xff]
    %v276 = vld [vmem:[#allocation2 + $0x70] sm:$0xff]
    %v277 = vld [vmem:[#allocation2 + $0x78] sm:$0xff]
    %v278 = vld [vmem:[#allocation2 + $0x80] sm:$0xff]
    %v279 = vld [vmem:[#allocation2 + $0x88] sm:$0xff]
    %v280 = vld [vmem:[#allocation2 + $0x90] sm:$0xff]
    %v281 = vld [vmem:[#allocation2 + $0x98] sm:$0xff]
    %v282 = vld [vmem:[#allocation2 + $0xa0] sm:$0xff]
    %v283 = vld [vmem:[#allocation2 + $0xa8] sm:$0xff]
    %v284 = vld [vmem:[#allocation2 + $0xb0] sm:$0xff]
    %v285 = vld [vmem:[#allocation2 + $0xb8] sm:$0xff]
    %v286 = vld [vmem:[#allocation2 + $0xc0] sm:$0xff]
    %v287 = vld [vmem:[#allocation2 + $0xc8] sm:$0xff]
    %v288 = vld [vmem:[#allocation2 + $0xd0] sm:$0xff]
    %v289 = vld [vmem:[#allocation2 + $0xd8] sm:$0xff]
    %v290 = vld [vmem:[#allocation2 + $0xe0] sm:$0xff]
    %v291 = vld [vmem:[#allocation2 + $0xe8] sm:$0xff]
    %v292 = vld [vmem:[#allocation2 + $0xf0] sm:$0xff]
    %v293 = vld [vmem:[#allocation2 + $0xf8] sm:$0xff]
    %v294 = vld [vmem:[#allocation2 + $0x100] sm:$0xff]
    %v295 = vld [vmem:[#allocation2 + $0x108] sm:$0xff]
    %v296 = vld [vmem:[#allocation2 + $0x110] sm:$0xff]
    %v297 = vld [vmem:[#allocation2 + $0x118] sm:$0xff]
    %v298 = vld [vmem:[#allocation2 + $0x120] sm:$0xff]
    %v299 = vld [vmem:[#allocation2 + $0x128] sm:$0xff]
    %v300 = vld [vmem:[#allocation2 + $0x130] sm:$0xff]
    %v301 = vld [vmem:[#allocation2 + $0x138] sm:$0xff]
    %v302 = vld [vmem:[#allocation2 + $0x140] sm:$0xff]
    %v303 = vld [vmem:[#allocation2 + $0x148] sm:$0xff]
    %v304 = vld [vmem:[#allocation2 + $0x150] sm:$0xff]
    %v305 = vld [vmem:[#allocation2 + $0x158] sm:$0xff]
    %v306 = vld [vmem:[#allocation2 + $0x160] sm:$0xff]
    %v307 = vld [vmem:[#allocation2 + $0x168] sm:$0xff]
    %v308 = vld [vmem:[#allocation2 + $0x170] sm:$0xff]
    %v309 = vld [vmem:[#allocation2 + $0x178] sm:$0xff]
    %v310 = vld [vmem:[#allocation2 + $0x180] sm:$0xff]
    %v311 = vld [vmem:[#allocation2 + $0x188] sm:$0xff]
    %v312 = vld [vmem:[#allocation2 + $0x190] sm:$0xff]
    %v313 = vld [vmem:[#allocation2 + $0x198] sm:$0xff]
    %v314 = vld [vmem:[#allocation2 + $0x1a0] sm:$0xff]
    %v315 = vld [vmem:[#allocation2 + $0x1a8] sm:$0xff]
    %v316 = vld [vmem:[#allocation2 + $0x1b0] sm:$0xff]
    %v317 = vld [vmem:[#allocation2 + $0x1b8] sm:$0xff]
    %v318 = vld [vmem:[#allocation2 + $0x1c0] sm:$0xff]
    %v319 = vld [vmem:[#allocation2 + $0x1c8] sm:$0xff]
    %v320 = vld [vmem:[#allocation2 + $0x1d0] sm:$0xff]
    %v321 = vld [vmem:[#allocation2 + $0x1d8] sm:$0xff]
    %v322 = vld [vmem:[#allocation2 + $0x1e0] sm:$0xff]
    %v323 = vld [vmem:[#allocation2 + $0x1e8] sm:$0xff]
    %v324 = vld [vmem:[#allocation2 + $0x1f0] sm:$0xff]
    %v325 = vld [vmem:[#allocation2 + $0x1f8] sm:$0xff]
    %v326 = vld [vmem:[%s5] sm:$0xff]
    %v328 = vlaneseq
    %v329 = vshrl.u32 %v328, 7
    %v330 = vsub.s32 0, %v329
    %v331 = vrot.slane %v326, %v330
    %v332 = vlaneseq
    %v333 = vshrl.u32 %v332, 7
    %v334 = vsub.s32 1, %v333
    %v335 = vrot.slane %v326, %v334
    %v336 = vlaneseq
    %v337 = vshrl.u32 %v336, 7
    %v338 = vsub.s32 2, %v337
    %v339 = vrot.slane %v326, %v338
    %v340 = vlaneseq
    %v341 = vshrl.u32 %v340, 7
    %v342 = vsub.s32 3, %v341
    %v343 = vrot.slane %v326, %v342
    %v344 = vlaneseq
    %v345 = vshrl.u32 %v344, 7
    %v346 = vsub.s32 4, %v345
    %v347 = vrot.slane %v326, %v346
    %v348 = vlaneseq
    %v349 = vshrl.u32 %v348, 7
    %v350 = vsub.s32 5, %v349
    %v351 = vrot.slane %v326, %v350
    %v352 = vlaneseq
    %v353 = vshrl.u32 %v352, 7
    %v354 = vsub.s32 6, %v353
    %v355 = vrot.slane %v326, %v354
    %v356 = vlaneseq
    %v357 = vshrl.u32 %v356, 7
    %v358 = vsub.s32 7, %v357
    %v359 = vrot.slane %v326, %v358
    %v432 = vunpack.c.l.b16 %v262
    %v433 = vunpack.c.h.b16 %v262
    %v434 = vunpack.c.l.b16 %v263
    %v435 = vunpack.c.h.b16 %v263
    %v436 = vunpack.c.l.b16 %v264
    %v437 = vunpack.c.h.b16 %v264
    %v438 = vunpack.c.l.b16 %v265
    %v439 = vunpack.c.h.b16 %v265
    %v440 = vunpack.c.l.b16 %v266
    %v441 = vunpack.c.h.b16 %v266
    %v442 = vunpack.c.l.b16 %v267
    %v443 = vunpack.c.h.b16 %v267
    %v444 = vunpack.c.l.b16 %v268
    %v445 = vunpack.c.h.b16 %v268
    %v446 = vunpack.c.l.b16 %v269
    %v447 = vunpack.c.h.b16 %v269
    %v448 = vunpack.c.l.b16 %v270
    %v449 = vunpack.c.h.b16 %v270
    %v450 = vunpack.c.l.b16 %v271
    %v451 = vunpack.c.h.b16 %v271
    %v452 = vunpack.c.l.b16 %v272
    %v453 = vunpack.c.h.b16 %v272
    %v454 = vunpack.c.l.b16 %v273
    %v455 = vunpack.c.h.b16 %v273
    %v456 = vunpack.c.l.b16 %v274
    %v457 = vunpack.c.h.b16 %v274
    %v458 = vunpack.c.l.b16 %v275
    %v459 = vunpack.c.h.b16 %v275
    %v460 = vunpack.c.l.b16 %v276
    %v461 = vunpack.c.h.b16 %v276
    %v462 = vunpack.c.l.b16 %v277
    %v463 = vunpack.c.h.b16 %v277
    %v464 = vunpack.c.l.b16 %v278
    %v465 = vunpack.c.h.b16 %v278
    %v466 = vunpack.c.l.b16 %v279
    %v467 = vunpack.c.h.b16 %v279
    %v468 = vunpack.c.l.b16 %v280
    %v469 = vunpack.c.h.b16 %v280
    %v470 = vunpack.c.l.b16 %v281
    %v471 = vunpack.c.h.b16 %v281
    %v472 = vunpack.c.l.b16 %v282
    %v473 = vunpack.c.h.b16 %v282
    %v474 = vunpack.c.l.b16 %v283
    %v475 = vunpack.c.h.b16 %v283
    %v476 = vunpack.c.l.b16 %v284
    %v477 = vunpack.c.h.b16 %v284
    %v478 = vunpack.c.l.b16 %v285
    %v479 = vunpack.c.h.b16 %v285
    %v480 = vunpack.c.l.b16 %v286
    %v481 = vunpack.c.h.b16 %v286
    %v482 = vunpack.c.l.b16 %v287
    %v483 = vunpack.c.h.b16 %v287
    %v484 = vunpack.c.l.b16 %v288
    %v485 = vunpack.c.h.b16 %v288
    %v486 = vunpack.c.l.b16 %v289
    %v487 = vunpack.c.h.b16 %v289
    %v488 = vunpack.c.l.b16 %v290
    %v489 = vunpack.c.h.b16 %v290
    %v490 = vunpack.c.l.b16 %v291
    %v491 = vunpack.c.h.b16 %v291
    %v492 = vunpack.c.l.b16 %v292
    %v493 = vunpack.c.h.b16 %v292
    %v494 = vunpack.c.l.b16 %v293
    %v495 = vunpack.c.h.b16 %v293
    %v496 = vunpack.c.l.b16 %v294
    %v497 = vunpack.c.h.b16 %v294
    %v498 = vunpack.c.l.b16 %v295
    %v499 = vunpack.c.h.b16 %v295
    %v500 = vunpack.c.l.b16 %v296
    %v501 = vunpack.c.h.b16 %v296
    %v502 = vunpack.c.l.b16 %v297
    %v503 = vunpack.c.h.b16 %v297
    %v504 = vunpack.c.l.b16 %v298
    %v505 = vunpack.c.h.b16 %v298
    %v506 = vunpack.c.l.b16 %v299
    %v507 = vunpack.c.h.b16 %v299
    %v508 = vunpack.c.l.b16 %v300
    %v509 = vunpack.c.h.b16 %v300
    %v510 = vunpack.c.l.b16 %v301
    %v511 = vunpack.c.h.b16 %v301
    %v512 = vunpack.c.l.b16 %v302
    %v513 = vunpack.c.h.b16 %v302
    %v514 = vunpack.c.l.b16 %v303
    %v515 = vunpack.c.h.b16 %v303
    %v516 = vunpack.c.l.b16 %v304
    %v517 = vunpack.c.h.b16 %v304
    %v518 = vunpack.c.l.b16 %v305
    %v519 = vunpack.c.h.b16 %v305
    %v520 = vunpack.c.l.b16 %v306
    %v521 = vunpack.c.h.b16 %v306
    %v522 = vunpack.c.l.b16 %v307
    %v523 = vunpack.c.h.b16 %v307
    %v524 = vunpack.c.l.b16 %v308
    %v525 = vunpack.c.h.b16 %v308
    %v526 = vunpack.c.l.b16 %v309
    %v527 = vunpack.c.h.b16 %v309
    %v528 = vunpack.c.l.b16 %v310
    %v529 = vunpack.c.h.b16 %v310
    %v530 = vunpack.c.l.b16 %v311
    %v531 = vunpack.c.h.b16 %v311
    %v532 = vunpack.c.l.b16 %v312
    %v533 = vunpack.c.h.b16 %v312
    %v534 = vunpack.c.l.b16 %v313
    %v535 = vunpack.c.h.b16 %v313
    %v536 = vunpack.c.l.b16 %v314
    %v537 = vunpack.c.h.b16 %v314
    %v538 = vunpack.c.l.b16 %v315
    %v539 = vunpack.c.h.b16 %v315
    %v540 = vunpack.c.l.b16 %v316
    %v541 = vunpack.c.h.b16 %v316
    %v542 = vunpack.c.l.b16 %v317
    %v543 = vunpack.c.h.b16 %v317
    %v544 = vunpack.c.l.b16 %v318
    %v545 = vunpack.c.h.b16 %v318
    %v546 = vunpack.c.l.b16 %v319
    %v547 = vunpack.c.h.b16 %v319
    %v548 = vunpack.c.l.b16 %v320
    %v549 = vunpack.c.h.b16 %v320
    %v550 = vunpack.c.l.b16 %v321
    %v551 = vunpack.c.h.b16 %v321
    %v552 = vunpack.c.l.b16 %v322
    %v553 = vunpack.c.h.b16 %v322
    %v554 = vunpack.c.l.b16 %v323
    %v555 = vunpack.c.h.b16 %v323
    %v556 = vunpack.c.l.b16 %v324
    %v557 = vunpack.c.h.b16 %v324
    %v558 = vunpack.c.l.b16 %v325
    %v559 = vunpack.c.h.b16 %v325
    %v560 = vpack.c.b16 %v440, %v432
    %v561 = vpack.c.b16 %v441, %v433
    %v562 = vpack.c.b16 %v442, %v434
    %v563 = vpack.c.b16 %v443, %v435
    %v564 = vpack.c.b16 %v444, %v436
    %v565 = vpack.c.b16 %v445, %v437
    %v566 = vpack.c.b16 %v446, %v438
    %v567 = vpack.c.b16 %v447, %v439
    %v568 = vpack.c.b16 %v456, %v448
    %v569 = vpack.c.b16 %v457, %v449
    %v570 = vpack.c.b16 %v458, %v450
    %v571 = vpack.c.b16 %v459, %v451
    %v572 = vpack.c.b16 %v460, %v452
    %v573 = vpack.c.b16 %v461, %v453
    %v574 = vpack.c.b16 %v462, %v454
    %v575 = vpack.c.b16 %v463, %v455
    %v576 = vpack.c.b16 %v472, %v464
    %v577 = vpack.c.b16 %v473, %v465
    %v578 = vpack.c.b16 %v474, %v466
    %v579 = vpack.c.b16 %v475, %v467
    %v580 = vpack.c.b16 %v476, %v468
    %v581 = vpack.c.b16 %v477, %v469
    %v582 = vpack.c.b16 %v478, %v470
    %v583 = vpack.c.b16 %v479, %v471
    %v584 = vpack.c.b16 %v488, %v480
    %v585 = vpack.c.b16 %v489, %v481
    %v586 = vpack.c.b16 %v490, %v482
    %v587 = vpack.c.b16 %v491, %v483
    %v588 = vpack.c.b16 %v492, %v484
    %v589 = vpack.c.b16 %v493, %v485
    %v590 = vpack.c.b16 %v494, %v486
    %v591 = vpack.c.b16 %v495, %v487
    %v592 = vpack.c.b16 %v504, %v496
    %v593 = vpack.c.b16 %v505, %v497
    %v594 = vpack.c.b16 %v506, %v498
    %v595 = vpack.c.b16 %v507, %v499
    %v596 = vpack.c.b16 %v508, %v500
    %v597 = vpack.c.b16 %v509, %v501
    %v598 = vpack.c.b16 %v510, %v502
    %v599 = vpack.c.b16 %v511, %v503
    %v600 = vpack.c.b16 %v520, %v512
    %v601 = vpack.c.b16 %v521, %v513
    %v602 = vpack.c.b16 %v522, %v514
    %v603 = vpack.c.b16 %v523, %v515
    %v604 = vpack.c.b16 %v524, %v516
    %v605 = vpack.c.b16 %v525, %v517
    %v606 = vpack.c.b16 %v526, %v518
    %v607 = vpack.c.b16 %v527, %v519
    %v608 = vpack.c.b16 %v536, %v528
    %v609 = vpack.c.b16 %v537, %v529
    %v610 = vpack.c.b16 %v538, %v530
    %v611 = vpack.c.b16 %v539, %v531
    %v612 = vpack.c.b16 %v540, %v532
    %v613 = vpack.c.b16 %v541, %v533
    %v614 = vpack.c.b16 %v542, %v534
    %v615 = vpack.c.b16 %v543, %v535
    %v616 = vpack.c.b16 %v552, %v544
    %v617 = vpack.c.b16 %v553, %v545
    %v618 = vpack.c.b16 %v554, %v546
    %v619 = vpack.c.b16 %v555, %v547
    %v620 = vpack.c.b16 %v556, %v548
    %v621 = vpack.c.b16 %v557, %v549
    %v622 = vpack.c.b16 %v558, %v550
    %v623 = vpack.c.b16 %v559, %v551
    %688 = vmatprep.subr.bf16.mxu0 %v561
    %689 = vmatpush1.bf16.msra.mxu0 %v560
    %690 = vmatprep.subr.bf16.mxu0 %v569
    %691 = vmatpush1.bf16.msra.mxu0 %v568
    %692 = vmatprep.subr.bf16.mxu0 %v577
    %693 = vmatpush1.bf16.msra.mxu0 %v576
    %694 = vmatprep.subr.bf16.mxu0 %v585
    %695 = vmatpush1.bf16.msra.mxu0 %v584
    %696 = vmatprep.subr.bf16.mxu0 %v593
    %697 = vmatpush1.bf16.msra.mxu0 %v592
    %698 = vmatprep.subr.bf16.mxu0 %v601
    %699 = vmatpush1.bf16.msra.mxu0 %v600
    %700 = vmatprep.subr.bf16.mxu0 %v609
    %701 = vmatpush1.bf16.msra.mxu0 %v608
    %702 = vmatprep.subr.bf16.mxu0 %v617
    %703 = vmatpush1.bf16.msra.mxu0 %v616
    %704 = vmatprep.subr.bf16.mxu0 0
    %705 = vmatpush1.bf16.msra.mxu0 0
    %706 = vmatprep.subr.bf16.mxu0 0
    %707 = vmatpush1.bf16.msra.mxu0 0
    %708 = vmatprep.subr.bf16.mxu0 0
    %709 = vmatpush1.bf16.msra.mxu0 0
    %710 = vmatprep.subr.bf16.mxu0 0
    %711 = vmatpush1.bf16.msra.mxu0 0
    %712 = vmatprep.subr.bf16.mxu0 0
    %713 = vmatpush1.bf16.msra.mxu0 0
    %714 = vmatprep.subr.bf16.mxu0 0
    %715 = vmatpush1.bf16.msra.mxu0 0
    %716 = vmatprep.subr.bf16.mxu0 0
    %717 = vmatpush1.bf16.msra.mxu0 0
    %718 = vmatprep.subr.bf16.mxu0 0
    %719 = vmatpush1.bf16.msra.mxu0 0
    %720 = vmatprep.mubr.bf16.mxu0 0
    %721 = vmatmul.mubr.bf16.gmra.mrb[0].mxu0 %v258
    %v722 = vpop.f32.mrb[0].mxu0
    %v723 = vadd.f32 %v331, %v722
    %v724 = vpop.f32.mrb[0].mxu0
    %v725 = vadd.f32 %v335, %v724
    %v726 = vpop.f32.mrb[0].mxu0
    %v727 = vadd.f32 %v331, %v726
    %v728 = vpop.f32.mrb[0].mxu0
    %v729 = vadd.f32 %v335, %v728
    %730 = vmatprep.mubr.bf16.mxu0 0
    %731 = vmatmul.mubr.bf16.gmra.mrb[0].mxu0 %v259
    %v732 = vpop.f32.mrb[0].mxu0
    %v733 = vadd.f32 %v331, %v732
    %v734 = vpop.f32.mrb[0].mxu0
    %v735 = vadd.f32 %v335, %v734
    %v736 = vpop.f32.mrb[0].mxu0
    %v737 = vadd.f32 %v331, %v736
    %v738 = vpop.f32.mrb[0].mxu0
    %v739 = vadd.f32 %v335, %v738
    %740 = vmatprep.mubr.bf16.mxu0 0
    %741 = vmatmul.mubr.bf16.gmra.mrb[0].mxu0 %v260
    %v742 = vpop.f32.mrb[0].mxu0
    %v743 = vadd.f32 %v331, %v742
    %v744 = vpop.f32.mrb[0].mxu0
    %v745 = vadd.f32 %v335, %v744
    %v746 = vpop.f32.mrb[0].mxu0
    %v747 = vadd.f32 %v331, %v746
    %v748 = vpop.f32.mrb[0].mxu0
    %v749 = vadd.f32 %v335, %v748
    %750 = vmatprep.mubr.bf16.mxu0 0
    %751 = vmatmul.mubr.bf16.gmra.mrb[0].mxu0 %v261
    %v752 = vpop.f32.mrb[0].mxu0
    %v753 = vadd.f32 %v331, %v752
    %v754 = vpop.f32.mrb[0].mxu0
    %v755 = vadd.f32 %v335, %v754
    %v756 = vpop.f32.mrb[0].mxu0
    %v757 = vadd.f32 %v331, %v756
    %v758 = vpop.f32.mrb[0].mxu0
    %v759 = vadd.f32 %v335, %v758
    %760 = vdwg.mxu0
    %761 = vmatprep.subr.bf16.mxu0 %v563
    %762 = vmatpush1.bf16.msra.mxu0 %v562
    %763 = vmatprep.subr.bf16.mxu0 %v571
    %764 = vmatpush1.bf16.msra.mxu0 %v570
    %765 = vmatprep.subr.bf16.mxu0 %v579
    %766 = vmatpush1.bf16.msra.mxu0 %v578
    %767 = vmatprep.subr.bf16.mxu0 %v587
    %768 = vmatpush1.bf16.msra.mxu0 %v586
    %769 = vmatprep.subr.bf16.mxu0 %v595
    %770 = vmatpush1.bf16.msra.mxu0 %v594
    %771 = vmatprep.subr.bf16.mxu0 %v603
    %772 = vmatpush1.bf16.msra.mxu0 %v602
    %773 = vmatprep.subr.bf16.mxu0 %v611
    %774 = vmatpush1.bf16.msra.mxu0 %v610
    %775 = vmatprep.subr.bf16.mxu0 %v619
    %776 = vmatpush1.bf16.msra.mxu0 %v618
    %777 = vmatprep.subr.bf16.mxu0 0
    %778 = vmatpush1.bf16.msra.mxu0 0
    %779 = vmatprep.subr.bf16.mxu0 0
    %780 = vmatpush1.bf16.msra.mxu0 0
    %781 = vmatprep.subr.bf16.mxu0 0
    %782 = vmatpush1.bf16.msra.mxu0 0
    %783 = vmatprep.subr.bf16.mxu0 0
    %784 = vmatpush1.bf16.msra.mxu0 0
    %785 = vmatprep.subr.bf16.mxu0 0
    %786 = vmatpush1.bf16.msra.mxu0 0
    %787 = vmatprep.subr.bf16.mxu0 0
    %788 = vmatpush1.bf16.msra.mxu0 0
    %789 = vmatprep.subr.bf16.mxu0 0
    %790 = vmatpush1.bf16.msra.mxu0 0
    %791 = vmatprep.subr.bf16.mxu0 0
    %792 = vmatpush1.bf16.msra.mxu0 0
    %793 = vmatprep.mubr.bf16.mxu0 0
    %794 = vmatmul.mubr.bf16.gmra.mrb[0].mxu0 %v258
    %v795 = vpop.f32.mrb[0].mxu0
    %v796 = vadd.f32 %v339, %v795
    %v797 = vpop.f32.mrb[0].mxu0
    %v798 = vadd.f32 %v343, %v797
    %v799 = vpop.f32.mrb[0].mxu0
    %v800 = vadd.f32 %v339, %v799
    %v801 = vpop.f32.mrb[0].mxu0
    %v802 = vadd.f32 %v343, %v801
    %803 = vmatprep.mubr.bf16.mxu0 0
    %804 = vmatmul.mubr.bf16.gmra.mrb[0].mxu0 %v259
    %v805 = vpop.f32.mrb[0].mxu0
    %v806 = vadd.f32 %v339, %v805
    %v807 = vpop.f32.mrb[0].mxu0
    %v808 = vadd.f32 %v343, %v807
    %v809 = vpop.f32.mrb[0].mxu0
    %v810 = vadd.f32 %v339, %v809
    %v811 = vpop.f32.mrb[0].mxu0
    %v812 = vadd.f32 %v343, %v811
    %813 = vmatprep.mubr.bf16.mxu0 0
    %814 = vmatmul.mubr.bf16.gmra.mrb[0].mxu0 %v260
    %v815 = vpop.f32.mrb[0].mxu0
    %v816 = vadd.f32 %v339, %v815
    %v817 = vpop.f32.mrb[0].mxu0
    %v818 = vadd.f32 %v343, %v817
    %v819 = vpop.f32.mrb[0].mxu0
    %v820 = vadd.f32 %v339, %v819
    %v821 = vpop.f32.mrb[0].mxu0
    %v822 = vadd.f32 %v343, %v821
    %823 = vmatprep.mubr.bf16.mxu0 0
    %824 = vmatmul.mubr.bf16.gmra.mrb[0].mxu0 %v261
    %v825 = vpop.f32.mrb[0].mxu0
    %v826 = vadd.f32 %v339, %v825
    %v827 = vpop.f32.mrb[0].mxu0
    %v828 = vadd.f32 %v343, %v827
    %v829 = vpop.f32.mrb[0].mxu0
    %v830 = vadd.f32 %v339, %v829
    %v831 = vpop.f32.mrb[0].mxu0
    %v832 = vadd.f32 %v343, %v831
    %833 = vdwg.mxu0
    %834 = vmatprep.subr.bf16.mxu0 %v565
    %835 = vmatpush1.bf16.msra.mxu0 %v564
    %836 = vmatprep.subr.bf16.mxu0 %v573
    %837 = vmatpush1.bf16.msra.mxu0 %v572
    %838 = vmatprep.subr.bf16.mxu0 %v581
    %839 = vmatpush1.bf16.msra.mxu0 %v580
    %840 = vmatprep.subr.bf16.mxu0 %v589
    %841 = vmatpush1.bf16.msra.mxu0 %v588
    %842 = vmatprep.subr.bf16.mxu0 %v597
    %843 = vmatpush1.bf16.msra.mxu0 %v596
    %844 = vmatprep.subr.bf16.mxu0 %v605
    %845 = vmatpush1.bf16.msra.mxu0 %v604
    %846 = vmatprep.subr.bf16.mxu0 %v613
    %847 = vmatpush1.bf16.msra.mxu0 %v612
    %848 = vmatprep.subr.bf16.mxu0 %v621
    %849 = vmatpush1.bf16.msra.mxu0 %v620
    %850 = vmatprep.subr.bf16.mxu0 0
    %851 = vmatpush1.bf16.msra.mxu0 0
    %852 = vmatprep.subr.bf16.mxu0 0
    %853 = vmatpush1.bf16.msra.mxu0 0
    %854 = vmatprep.subr.bf16.mxu0 0
    %855 = vmatpush1.bf16.msra.mxu0 0
    %856 = vmatprep.subr.bf16.mxu0 0
    %857 = vmatpush1.bf16.msra.mxu0 0
    %858 = vmatprep.subr.bf16.mxu0 0
    %859 = vmatpush1.bf16.msra.mxu0 0
    %860 = vmatprep.subr.bf16.mxu0 0
    %861 = vmatpush1.bf16.msra.mxu0 0
    %862 = vmatprep.subr.bf16.mxu0 0
    %863 = vmatpush1.bf16.msra.mxu0 0
    %864 = vmatprep.subr.bf16.mxu0 0
    %865 = vmatpush1.bf16.msra.mxu0 0
    %866 = vmatprep.mubr.bf16.mxu0 0
    %867 = vmatmul.mubr.bf16.gmra.mrb[0].mxu0 %v258
    %v868 = vpop.f32.mrb[0].mxu0
    %v869 = vadd.f32 %v347, %v868
    %v870 = vpop.f32.mrb[0].mxu0
    %v871 = vadd.f32 %v351, %v870
    %v872 = vpop.f32.mrb[0].mxu0
    %v873 = vadd.f32 %v347, %v872
    %v874 = vpop.f32.mrb[0].mxu0
    %v875 = vadd.f32 %v351, %v874
    %876 = vmatprep.mubr.bf16.mxu0 0
    %877 = vmatmul.mubr.bf16.gmra.mrb[0].mxu0 %v259
    %v878 = vpop.f32.mrb[0].mxu0
    %v879 = vadd.f32 %v347, %v878
    %v880 = vpop.f32.mrb[0].mxu0
    %v881 = vadd.f32 %v351, %v880
    %v882 = vpop.f32.mrb[0].mxu0
    %v883 = vadd.f32 %v347, %v882
    %v884 = vpop.f32.mrb[0].mxu0
    %v885 = vadd.f32 %v351, %v884
    %886 = vmatprep.mubr.bf16.mxu0 0
    %887 = vmatmul.mubr.bf16.gmra.mrb[0].mxu0 %v260
    %v888 = vpop.f32.mrb[0].mxu0
    %v889 = vadd.f32 %v347, %v888
    %v890 = vpop.f32.mrb[0].mxu0
    %v891 = vadd.f32 %v351, %v890
    %v892 = vpop.f32.mrb[0].mxu0
    %v893 = vadd.f32 %v347, %v892
    %v894 = vpop.f32.mrb[0].mxu0
    %v895 = vadd.f32 %v351, %v894
    %896 = vmatprep.mubr.bf16.mxu0 0
    %897 = vmatmul.mubr.bf16.gmra.mrb[0].mxu0 %v261
    %v898 = vpop.f32.mrb[0].mxu0
    %v899 = vadd.f32 %v347, %v898
    %v900 = vpop.f32.mrb[0].mxu0
    %v901 = vadd.f32 %v351, %v900
    %v902 = vpop.f32.mrb[0].mxu0
    %v903 = vadd.f32 %v347, %v902
    %v904 = vpop.f32.mrb[0].mxu0
    %v905 = vadd.f32 %v351, %v904
    %906 = vdwg.mxu0
    %907 = vmatprep.subr.bf16.mxu0 %v567
    %908 = vmatpush1.bf16.msra.mxu0 %v566
    %909 = vmatprep.subr.bf16.mxu0 %v575
    %910 = vmatpush1.bf16.msra.mxu0 %v574
    %911 = vmatprep.subr.bf16.mxu0 %v583
    %912 = vmatpush1.bf16.msra.mxu0 %v582
    %913 = vmatprep.subr.bf16.mxu0 %v591
    %914 = vmatpush1.bf16.msra.mxu0 %v590
    %915 = vmatprep.subr.bf16.mxu0 %v599
    %916 = vmatpush1.bf16.msra.mxu0 %v598
    %917 = vmatprep.subr.bf16.mxu0 %v607
    %918 = vmatpush1.bf16.msra.mxu0 %v606
    %919 = vmatprep.subr.bf16.mxu0 %v615
    %920 = vmatpush1.bf16.msra.mxu0 %v614
    %921 = vmatprep.subr.bf16.mxu0 %v623
    %922 = vmatpush1.bf16.msra.mxu0 %v622
    %923 = vmatprep.subr.bf16.mxu0 0
    %924 = vmatpush1.bf16.msra.mxu0 0
    %925 = vmatprep.subr.bf16.mxu0 0
    %926 = vmatpush1.bf16.msra.mxu0 0
    %927 = vmatprep.subr.bf16.mxu0 0
    %928 = vmatpush1.bf16.msra.mxu0 0
    %929 = vmatprep.subr.bf16.mxu0 0
    %930 = vmatpush1.bf16.msra.mxu0 0
    %931 = vmatprep.subr.bf16.mxu0 0
    %932 = vmatpush1.bf16.msra.mxu0 0
    %933 = vmatprep.subr.bf16.mxu0 0
    %934 = vmatpush1.bf16.msra.mxu0 0
    %935 = vmatprep.subr.bf16.mxu0 0
    %936 = vmatpush1.bf16.msra.mxu0 0
    %937 = vmatprep.subr.bf16.mxu0 0
    %938 = vmatpush1.bf16.msra.mxu0 0
    %939 = vmatprep.mubr.bf16.mxu0 0
    %940 = vmatmul.mubr.bf16.gmra.mrb[0].mxu0 %v258
    %v941 = vpop.f32.mrb[0].mxu0
    %v942 = vadd.f32 %v355, %v941
    %v943 = vpop.f32.mrb[0].mxu0
    %v944 = vadd.f32 %v359, %v943
    %v945 = vpop.f32.mrb[0].mxu0
    %v946 = vadd.f32 %v355, %v945
    %v947 = vpop.f32.mrb[0].mxu0
    %v948 = vadd.f32 %v359, %v947
    %949 = vmatprep.mubr.bf16.mxu0 0
    %950 = vmatmul.mubr.bf16.gmra.mrb[0].mxu0 %v259
    %v951 = vpop.f32.mrb[0].mxu0
    %v952 = vadd.f32 %v355, %v951
    %v953 = vpop.f32.mrb[0].mxu0
    %v954 = vadd.f32 %v359, %v953
    %v955 = vpop.f32.mrb[0].mxu0
    %v956 = vadd.f32 %v355, %v955
    %v957 = vpop.f32.mrb[0].mxu0
    %v958 = vadd.f32 %v359, %v957
    %959 = vmatprep.mubr.bf16.mxu0 0
    %960 = vmatmul.mubr.bf16.gmra.mrb[0].mxu0 %v260
    %v961 = vpop.f32.mrb[0].mxu0
    %v962 = vadd.f32 %v355, %v961
    %v963 = vpop.f32.mrb[0].mxu0
    %v964 = vadd.f32 %v359, %v963
    %v965 = vpop.f32.mrb[0].mxu0
    %v966 = vadd.f32 %v355, %v965
    %v967 = vpop.f32.mrb[0].mxu0
    %v968 = vadd.f32 %v359, %v967
    %969 = vmatprep.mubr.bf16.mxu0 0
    %970 = vmatmul.mubr.bf16.gmra.mrb[0].mxu0 %v261
    %v971 = vpop.f32.mrb[0].mxu0
    %v972 = vadd.f32 %v355, %v971
    %v973 = vpop.f32.mrb[0].mxu0
    %v974 = vadd.f32 %v359, %v973
    %v975 = vpop.f32.mrb[0].mxu0
    %v976 = vadd.f32 %v355, %v975
    %v977 = vpop.f32.mrb[0].mxu0
    %v978 = vadd.f32 %v359, %v977
    %979 = vdwg.mxu0
    %v980 = vld [vmem:[#allocation5] sm:$0xff]
    %v981 = vld [vmem:[#allocation5 + $0x8] sm:$0xff]
    %v982 = vld [vmem:[#allocation5 + $0x10] sm:$0xff]
    %v983 = vld [vmem:[#allocation5 + $0x18] sm:$0xff]
    %v984 = vld [vmem:[#allocation5 + $0x20] sm:$0xff]
    %v985 = vld [vmem:[#allocation5 + $0x28] sm:$0xff]
    %v986 = vld [vmem:[#allocation5 + $0x30] sm:$0xff]
    %v987 = vld [vmem:[#allocation5 + $0x38] sm:$0xff]
    %v988 = vld [vmem:[#allocation5 + $0x40] sm:$0xff]
    %v989 = vld [vmem:[#allocation5 + $0x48] sm:$0xff]
    %v990 = vld [vmem:[#allocation5 + $0x50] sm:$0xff]
    %v991 = vld [vmem:[#allocation5 + $0x58] sm:$0xff]
    %v992 = vld [vmem:[#allocation5 + $0x60] sm:$0xff]
    %v993 = vld [vmem:[#allocation5 + $0x68] sm:$0xff]
    %v994 = vld [vmem:[#allocation5 + $0x70] sm:$0xff]
    %v995 = vld [vmem:[#allocation5 + $0x78] sm:$0xff]
    %v996 = vld [vmem:[#allocation5 + $0x80] sm:$0xff]
    %v997 = vld [vmem:[#allocation5 + $0x88] sm:$0xff]
    %v998 = vld [vmem:[#allocation5 + $0x90] sm:$0xff]
    %v999 = vld [vmem:[#allocation5 + $0x98] sm:$0xff]
    %v1000 = vld [vmem:[#allocation5 + $0xa0] sm:$0xff]
    %v1001 = vld [vmem:[#allocation5 + $0xa8] sm:$0xff]
    %v1002 = vld [vmem:[#allocation5 + $0xb0] sm:$0xff]
    %v1003 = vld [vmem:[#allocation5 + $0xb8] sm:$0xff]
    %v1004 = vld [vmem:[#allocation5 + $0xc0] sm:$0xff]
    %v1005 = vld [vmem:[#allocation5 + $0xc8] sm:$0xff]
    %v1006 = vld [vmem:[#allocation5 + $0xd0] sm:$0xff]
    %v1007 = vld [vmem:[#allocation5 + $0xd8] sm:$0xff]
    %v1008 = vld [vmem:[#allocation5 + $0xe0] sm:$0xff]
    %v1009 = vld [vmem:[#allocation5 + $0xe8] sm:$0xff]
    %v1010 = vld [vmem:[#allocation5 + $0xf0] sm:$0xff]
    %v1011 = vld [vmem:[#allocation5 + $0xf8] sm:$0xff]
    %v1012 = vld [vmem:[#allocation7] sm:$0xff]
    %v1013 = vld [vmem:[#allocation7 + $0x8] sm:$0xff]
    %v1014 = vld [vmem:[#allocation7 + $0x10] sm:$0xff]
    %v1015 = vld [vmem:[#allocation7 + $0x18] sm:$0xff]
    %v1016 = vld [vmem:[#allocation7 + $0x20] sm:$0xff]
    %v1017 = vld [vmem:[#allocation7 + $0x28] sm:$0xff]
    %v1018 = vld [vmem:[#allocation7 + $0x30] sm:$0xff]
    %v1019 = vld [vmem:[#allocation7 + $0x38] sm:$0xff]
    %v1020 = vld [vmem:[#allocation7 + $0x40] sm:$0xff]
    %v1021 = vld [vmem:[#allocation7 + $0x48] sm:$0xff]
    %v1022 = vld [vmem:[#allocation7 + $0x50] sm:$0xff]
    %v1023 = vld [vmem:[#allocation7 + $0x58] sm:$0xff]
    %v1024 = vld [vmem:[#allocation7 + $0x60] sm:$0xff]
    %v1025 = vld [vmem:[#allocation7 + $0x68] sm:$0xff]
    %v1026 = vld [vmem:[#allocation7 + $0x70] sm:$0xff]
    %v1027 = vld [vmem:[#allocation7 + $0x78] sm:$0xff]
    %v1028 = vld [vmem:[#allocation7 + $0x80] sm:$0xff]
    %v1029 = vld [vmem:[#allocation7 + $0x88] sm:$0xff]
    %v1030 = vld [vmem:[#allocation7 + $0x90] sm:$0xff]
    %v1031 = vld [vmem:[#allocation7 + $0x98] sm:$0xff]
    %v1032 = vld [vmem:[#allocation7 + $0xa0] sm:$0xff]
    %v1033 = vld [vmem:[#allocation7 + $0xa8] sm:$0xff]
    %v1034 = vld [vmem:[#allocation7 + $0xb0] sm:$0xff]
    %v1035 = vld [vmem:[#allocation7 + $0xb8] sm:$0xff]
    %v1036 = vld [vmem:[#allocation7 + $0xc0] sm:$0xff]
    %v1037 = vld [vmem:[#allocation7 + $0xc8] sm:$0xff]
    %v1038 = vld [vmem:[#allocation7 + $0xd0] sm:$0xff]
    %v1039 = vld [vmem:[#allocation7 + $0xd8] sm:$0xff]
    %v1040 = vld [vmem:[#allocation7 + $0xe0] sm:$0xff]
    %v1041 = vld [vmem:[#allocation7 + $0xe8] sm:$0xff]
    %v1042 = vld [vmem:[#allocation7 + $0xf0] sm:$0xff]
    %v1043 = vld [vmem:[#allocation7 + $0xf8] sm:$0xff]
    %v1076 = vunpack.c.l.b16 %v980
    %v1077 = vunpack.c.h.b16 %v980
    %v1078 = vunpack.c.l.b16 %v981
    %v1079 = vunpack.c.h.b16 %v981
    %v1080 = vunpack.c.l.b16 %v982
    %v1081 = vunpack.c.h.b16 %v982
    %v1082 = vunpack.c.l.b16 %v983
    %v1083 = vunpack.c.h.b16 %v983
    %v1084 = vunpack.c.l.b16 %v984
    %v1085 = vunpack.c.h.b16 %v984
    %v1086 = vunpack.c.l.b16 %v985
    %v1087 = vunpack.c.h.b16 %v985
    %v1088 = vunpack.c.l.b16 %v986
    %v1089 = vunpack.c.h.b16 %v986
    %v1090 = vunpack.c.l.b16 %v987
    %v1091 = vunpack.c.h.b16 %v987
    %v1092 = vunpack.c.l.b16 %v988
    %v1093 = vunpack.c.h.b16 %v988
    %v1094 = vunpack.c.l.b16 %v989
    %v1095 = vunpack.c.h.b16 %v989
    %v1096 = vunpack.c.l.b16 %v990
    %v1097 = vunpack.c.h.b16 %v990
    %v1098 = vunpack.c.l.b16 %v991
    %v1099 = vunpack.c.h.b16 %v991
    %v1100 = vunpack.c.l.b16 %v992
    %v1101 = vunpack.c.h.b16 %v992
    %v1102 = vunpack.c.l.b16 %v993
    %v1103 = vunpack.c.h.b16 %v993
    %v1104 = vunpack.c.l.b16 %v994
    %v1105 = vunpack.c.h.b16 %v994
    %v1106 = vunpack.c.l.b16 %v995
    %v1107 = vunpack.c.h.b16 %v995
    %v1108 = vunpack.c.l.b16 %v996
    %v1109 = vunpack.c.h.b16 %v996
    %v1110 = vunpack.c.l.b16 %v997
    %v1111 = vunpack.c.h.b16 %v997
    %v1112 = vunpack.c.l.b16 %v998
    %v1113 = vunpack.c.h.b16 %v998
    %v1114 = vunpack.c.l.b16 %v999
    %v1115 = vunpack.c.h.b16 %v999
    %v1116 = vunpack.c.l.b16 %v1000
    %v1117 = vunpack.c.h.b16 %v1000
    %v1118 = vunpack.c.l.b16 %v1001
    %v1119 = vunpack.c.h.b16 %v1001
    %v1120 = vunpack.c.l.b16 %v1002
    %v1121 = vunpack.c.h.b16 %v1002
    %v1122 = vunpack.c.l.b16 %v1003
    %v1123 = vunpack.c.h.b16 %v1003
    %v1124 = vunpack.c.l.b16 %v1004
    %v1125 = vunpack.c.h.b16 %v1004
    %v1126 = vunpack.c.l.b16 %v1005
    %v1127 = vunpack.c.h.b16 %v1005
    %v1128 = vunpack.c.l.b16 %v1006
    %v1129 = vunpack.c.h.b16 %v1006
    %v1130 = vunpack.c.l.b16 %v1007
    %v1131 = vunpack.c.h.b16 %v1007
    %v1132 = vunpack.c.l.b16 %v1008
    %v1133 = vunpack.c.h.b16 %v1008
    %v1134 = vunpack.c.l.b16 %v1009
    %v1135 = vunpack.c.h.b16 %v1009
    %v1136 = vunpack.c.l.b16 %v1010
    %v1137 = vunpack.c.h.b16 %v1010
    %v1138 = vunpack.c.l.b16 %v1011
    %v1139 = vunpack.c.h.b16 %v1011
    %v1140 = vpack.c.b16 %v1080, %v1076
    %v1141 = vpack.c.b16 %v1081, %v1077
    %v1142 = vpack.c.b16 %v1082, %v1078
    %v1143 = vpack.c.b16 %v1083, %v1079
    %v1144 = vpack.c.b16 %v1088, %v1084
    %v1145 = vpack.c.b16 %v1089, %v1085
    %v1146 = vpack.c.b16 %v1090, %v1086
    %v1147 = vpack.c.b16 %v1091, %v1087
    %v1148 = vpack.c.b16 %v1096, %v1092
    %v1149 = vpack.c.b16 %v1097, %v1093
    %v1150 = vpack.c.b16 %v1098, %v1094
    %v1151 = vpack.c.b16 %v1099, %v1095
    %v1152 = vpack.c.b16 %v1104, %v1100
    %v1153 = vpack.c.b16 %v1105, %v1101
    %v1154 = vpack.c.b16 %v1106, %v1102
    %v1155 = vpack.c.b16 %v1107, %v1103
    %v1156 = vpack.c.b16 %v1112, %v1108
    %v1157 = vpack.c.b16 %v1113, %v1109
    %v1158 = vpack.c.b16 %v1114, %v1110
    %v1159 = vpack.c.b16 %v1115, %v1111
    %v1160 = vpack.c.b16 %v1120, %v1116
    %v1161 = vpack.c.b16 %v1121, %v1117
    %v1162 = vpack.c.b16 %v1122, %v1118
    %v1163 = vpack.c.b16 %v1123, %v1119
    %v1164 = vpack.c.b16 %v1128, %v1124
    %v1165 = vpack.c.b16 %v1129, %v1125
    %v1166 = vpack.c.b16 %v1130, %v1126
    %v1167 = vpack.c.b16 %v1131, %v1127
    %v1168 = vpack.c.b16 %v1136, %v1132
    %v1169 = vpack.c.b16 %v1137, %v1133
    %v1170 = vpack.c.b16 %v1138, %v1134
    %v1171 = vpack.c.b16 %v1139, %v1135
    %1204 = vmatprep.subr.bf16.mxu0 %v1141
    %1205 = vmatpush1.bf16.msra.mxu0 %v1140
    %1206 = vmatprep.subr.bf16.mxu0 %v1145
    %1207 = vmatpush1.bf16.msra.mxu0 %v1144
    %1208 = vmatprep.subr.bf16.mxu0 %v1149
    %1209 = vmatpush1.bf16.msra.mxu0 %v1148
    %1210 = vmatprep.subr.bf16.mxu0 %v1153
    %1211 = vmatpush1.bf16.msra.mxu0 %v1152
    %1212 = vmatprep.subr.bf16.mxu0 %v1157
    %1213 = vmatpush1.bf16.msra.mxu0 %v1156
    %1214 = vmatprep.subr.bf16.mxu0 %v1161
    %1215 = vmatpush1.bf16.msra.mxu0 %v1160
    %1216 = vmatprep.subr.bf16.mxu0 %v1165
    %1217 = vmatpush1.bf16.msra.mxu0 %v1164
    %1218 = vmatprep.subr.bf16.mxu0 %v1169
    %1219 = vmatpush1.bf16.msra.mxu0 %v1168
    %1220 = vmatprep.subr.bf16.mxu0 0
    %1221 = vmatpush1.bf16.msra.mxu0 0
    %1222 = vmatprep.subr.bf16.mxu0 0
    %1223 = vmatpush1.bf16.msra.mxu0 0
    %1224 = vmatprep.subr.bf16.mxu0 0
    %1225 = vmatpush1.bf16.msra.mxu0 0
    %1226 = vmatprep.subr.bf16.mxu0 0
    %1227 = vmatpush1.bf16.msra.mxu0 0
    %1228 = vmatprep.subr.bf16.mxu0 0
    %1229 = vmatpush1.bf16.msra.mxu0 0
    %1230 = vmatprep.subr.bf16.mxu0 0
    %1231 = vmatpush1.bf16.msra.mxu0 0
    %1232 = vmatprep.subr.bf16.mxu0 0
    %1233 = vmatpush1.bf16.msra.mxu0 0
    %1234 = vmatprep.subr.bf16.mxu0 0
    %1235 = vmatpush1.bf16.msra.mxu0 0
    %1236 = vmatprep.mubr.bf16.mxu0 0
    %1237 = vmatmul.mubr.bf16.gmra.mrb[0].mxu0 0
    %v1238 = vpop.f32.mrb[0].mxu0
    %v1239 = vadd.f32 0.0, %v1238
    %v1240 = vpop.f32.mrb[0].mxu0
    %v1241 = vadd.f32 0.0, %v1240
    %v1242 = vpop.f32.mrb[0].mxu0
    %v1243 = vpop.f32.mrb[0].mxu0
    %1244 = vdwg.mxu0
    %1245 = vmatprep.subr.bf16.mxu0 %v1143
    %1246 = vmatpush1.bf16.msra.mxu0 %v1142
    %1247 = vmatprep.subr.bf16.mxu0 %v1147
    %1248 = vmatpush1.bf16.msra.mxu0 %v1146
    %1249 = vmatprep.subr.bf16.mxu0 %v1151
    %1250 = vmatpush1.bf16.msra.mxu0 %v1150
    %1251 = vmatprep.subr.bf16.mxu0 %v1155
    %1252 = vmatpush1.bf16.msra.mxu0 %v1154
    %1253 = vmatprep.subr.bf16.mxu0 %v1159
    %1254 = vmatpush1.bf16.msra.mxu0 %v1158
    %1255 = vmatprep.subr.bf16.mxu0 %v1163
    %1256 = vmatpush1.bf16.msra.mxu0 %v1162
    %1257 = vmatprep.subr.bf16.mxu0 %v1167
    %1258 = vmatpush1.bf16.msra.mxu0 %v1166
    %1259 = vmatprep.subr.bf16.mxu0 %v1171
    %1260 = vmatpush1.bf16.msra.mxu0 %v1170
    %1261 = vmatprep.subr.bf16.mxu0 0
    %1262 = vmatpush1.bf16.msra.mxu0 0
    %1263 = vmatprep.subr.bf16.mxu0 0
    %1264 = vmatpush1.bf16.msra.mxu0 0
    %1265 = vmatprep.subr.bf16.mxu0 0
    %1266 = vmatpush1.bf16.msra.mxu0 0
    %1267 = vmatprep.subr.bf16.mxu0 0
    %1268 = vmatpush1.bf16.msra.mxu0 0
    %1269 = vmatprep.subr.bf16.mxu0 0
    %1270 = vmatpush1.bf16.msra.mxu0 0
    %1271 = vmatprep.subr.bf16.mxu0 0
    %1272 = vmatpush1.bf16.msra.mxu0 0
    %1273 = vmatprep.subr.bf16.mxu0 0
    %1274 = vmatpush1.bf16.msra.mxu0 0
    %1275 = vmatprep.subr.bf16.mxu0 0
    %1276 = vmatpush1.bf16.msra.mxu0 0
    %1277 = vmatprep.mubr.bf16.mxu0 0
    %1278 = vmatmul.mubr.bf16.gmra.mrb[0].mxu0 0
    %v1279 = vpop.f32.mrb[0].mxu0
    %v1280 = vadd.f32 0.0, %v1279
    %v1281 = vpop.f32.mrb[0].mxu0
    %v1282 = vadd.f32 0.0, %v1281
    %v1283 = vpop.f32.mrb[0].mxu0
    %v1284 = vpop.f32.mrb[0].mxu0
    %1285 = vdwg.mxu0
    %v1286 = vadd.f32 %v723, %v1239
    %v1287 = vadd.f32 %v725, %v1241
    %v1288 = vadd.f32 %v796, %v1280
    %v1289 = vadd.f32 %v798, %v1282
    %v1322 = vunpack.c.l.b16 %v1012
    %v1323 = vunpack.c.h.b16 %v1012
    %v1324 = vunpack.c.l.b16 %v1013
    %v1325 = vunpack.c.h.b16 %v1013
    %v1326 = vunpack.c.l.b16 %v1014
    %v1327 = vunpack.c.h.b16 %v1014
    %v1328 = vunpack.c.l.b16 %v1015
    %v1329 = vunpack.c.h.b16 %v1015
    %v1330 = vunpack.c.l.b16 %v1016
    %v1331 = vunpack.c.h.b16 %v1016
    %v1332 = vunpack.c.l.b16 %v1017
    %v1333 = vunpack.c.h.b16 %v1017
    %v1334 = vunpack.c.l.b16 %v1018
    %v1335 = vunpack.c.h.b16 %v1018
    %v1336 = vunpack.c.l.b16 %v1019
    %v1337 = vunpack.c.h.b16 %v1019
    %v1338 = vunpack.c.l.b16 %v1020
    %v1339 = vunpack.c.h.b16 %v1020
    %v1340 = vunpack.c.l.b16 %v1021
    %v1341 = vunpack.c.h.b16 %v1021
    %v1342 = vunpack.c.l.b16 %v1022
    %v1343 = vunpack.c.h.b16 %v1022
    %v1344 = vunpack.c.l.b16 %v1023
    %v1345 = vunpack.c.h.b16 %v1023
    %v1346 = vunpack.c.l.b16 %v1024
    %v1347 = vunpack.c.h.b16 %v1024
    %v1348 = vunpack.c.l.b16 %v1025
    %v1349 = vunpack.c.h.b16 %v1025
    %v1350 = vunpack.c.l.b16 %v1026
    %v1351 = vunpack.c.h.b16 %v1026
    %v1352 = vunpack.c.l.b16 %v1027
    %v1353 = vunpack.c.h.b16 %v1027
    %v1354 = vunpack.c.l.b16 %v1028
    %v1355 = vunpack.c.h.b16 %v1028
    %v1356 = vunpack.c.l.b16 %v1029
    %v1357 = vunpack.c.h.b16 %v1029
    %v1358 = vunpack.c.l.b16 %v1030
    %v1359 = vunpack.c.h.b16 %v1030
    %v1360 = vunpack.c.l.b16 %v1031
    %v1361 = vunpack.c.h.b16 %v1031
    %v1362 = vunpack.c.l.b16 %v1032
    %v1363 = vunpack.c.h.b16 %v1032
    %v1364 = vunpack.c.l.b16 %v1033
    %v1365 = vunpack.c.h.b16 %v1033
    %v1366 = vunpack.c.l.b16 %v1034
    %v1367 = vunpack.c.h.b16 %v1034
    %v1368 = vunpack.c.l.b16 %v1035
    %v1369 = vunpack.c.h.b16 %v1035
    %v1370 = vunpack.c.l.b16 %v1036
    %v1371 = vunpack.c.h.b16 %v1036
    %v1372 = vunpack.c.l.b16 %v1037
    %v1373 = vunpack.c.h.b16 %v1037
    %v1374 = vunpack.c.l.b16 %v1038
    %v1375 = vunpack.c.h.b16 %v1038
    %v1376 = vunpack.c.l.b16 %v1039
    %v1377 = vunpack.c.h.b16 %v1039
    %v1378 = vunpack.c.l.b16 %v1040
    %v1379 = vunpack.c.h.b16 %v1040
    %v1380 = vunpack.c.l.b16 %v1041
    %v1381 = vunpack.c.h.b16 %v1041
    %v1382 = vunpack.c.l.b16 %v1042
    %v1383 = vunpack.c.h.b16 %v1042
    %v1384 = vunpack.c.l.b16 %v1043
    %v1385 = vunpack.c.h.b16 %v1043
    %v1386 = vpack.c.b16 %v1326, %v1322
    %v1387 = vpack.c.b16 %v1327, %v1323
    %v1388 = vpack.c.b16 %v1328, %v1324
    %v1389 = vpack.c.b16 %v1329, %v1325
    %v1390 = vpack.c.b16 %v1334, %v1330
    %v1391 = vpack.c.b16 %v1335, %v1331
    %v1392 = vpack.c.b16 %v1336, %v1332
    %v1393 = vpack.c.b16 %v1337, %v1333
    %v1394 = vpack.c.b16 %v1342, %v1338
    %v1395 = vpack.c.b16 %v1343, %v1339
    %v1396 = vpack.c.b16 %v1344, %v1340
    %v1397 = vpack.c.b16 %v1345, %v1341
    %v1398 = vpack.c.b16 %v1350, %v1346
    %v1399 = vpack.c.b16 %v1351, %v1347
    %v1400 = vpack.c.b16 %v1352, %v1348
    %v1401 = vpack.c.b16 %v1353, %v1349
    %v1402 = vpack.c.b16 %v1358, %v1354
    %v1403 = vpack.c.b16 %v1359, %v1355
    %v1404 = vpack.c.b16 %v1360, %v1356
    %v1405 = vpack.c.b16 %v1361, %v1357
    %v1406 = vpack.c.b16 %v1366, %v1362
    %v1407 = vpack.c.b16 %v1367, %v1363
    %v1408 = vpack.c.b16 %v1368, %v1364
    %v1409 = vpack.c.b16 %v1369, %v1365
    %v1410 = vpack.c.b16 %v1374, %v1370
    %v1411 = vpack.c.b16 %v1375, %v1371
    %v1412 = vpack.c.b16 %v1376, %v1372
    %v1413 = vpack.c.b16 %v1377, %v1373
    %v1414 = vpack.c.b16 %v1382, %v1378
    %v1415 = vpack.c.b16 %v1383, %v1379
    %v1416 = vpack.c.b16 %v1384, %v1380
    %v1417 = vpack.c.b16 %v1385, %v1381
    %1450 = vmatprep.subr.bf16.mxu0 %v1387
    %1451 = vmatpush1.bf16.msra.mxu0 %v1386
    %1452 = vmatprep.subr.bf16.mxu0 %v1391
    %1453 = vmatpush1.bf16.msra.mxu0 %v1390
    %1454 = vmatprep.subr.bf16.mxu0 %v1395
    %1455 = vmatpush1.bf16.msra.mxu0 %v1394
    %1456 = vmatprep.subr.bf16.mxu0 %v1399
    %1457 = vmatpush1.bf16.msra.mxu0 %v1398
    %1458 = vmatprep.subr.bf16.mxu0 %v1403
    %1459 = vmatpush1.bf16.msra.mxu0 %v1402
    %1460 = vmatprep.subr.bf16.mxu0 %v1407
    %1461 = vmatpush1.bf16.msra.mxu0 %v1406
    %1462 = vmatprep.subr.bf16.mxu0 %v1411
    %1463 = vmatpush1.bf16.msra.mxu0 %v1410
    %1464 = vmatprep.subr.bf16.mxu0 %v1415
    %1465 = vmatpush1.bf16.msra.mxu0 %v1414
    %1466 = vmatprep.subr.bf16.mxu0 0
    %1467 = vmatpush1.bf16.msra.mxu0 0
    %1468 = vmatprep.subr.bf16.mxu0 0
    %1469 = vmatpush1.bf16.msra.mxu0 0
    %1470 = vmatprep.subr.bf16.mxu0 0
    %1471 = vmatpush1.bf16.msra.mxu0 0
    %1472 = vmatprep.subr.bf16.mxu0 0
    %1473 = vmatpush1.bf16.msra.mxu0 0
    %1474 = vmatprep.subr.bf16.mxu0 0
    %1475 = vmatpush1.bf16.msra.mxu0 0
    %1476 = vmatprep.subr.bf16.mxu0 0
    %1477 = vmatpush1.bf16.msra.mxu0 0
    %1478 = vmatprep.subr.bf16.mxu0 0
    %1479 = vmatpush1.bf16.msra.mxu0 0
    %1480 = vmatprep.subr.bf16.mxu0 0
    %1481 = vmatpush1.bf16.msra.mxu0 0
    %1482 = vmatprep.mubr.bf16.mxu0 0
    %1483 = vmatmul.mubr.bf16.gmra.mrb[0].mxu0 0
    %v1484 = vpop.f32.mrb[0].mxu0
    %v1485 = vadd.f32 0.0, %v1484
    %v1486 = vpop.f32.mrb[0].mxu0
    %v1487 = vadd.f32 0.0, %v1486
    %v1488 = vpop.f32.mrb[0].mxu0
    %v1489 = vpop.f32.mrb[0].mxu0
    %1490 = vdwg.mxu0
    %1491 = vmatprep.subr.bf16.mxu0 %v1389
    %1492 = vmatpush1.bf16.msra.mxu0 %v1388
    %1493 = vmatprep.subr.bf16.mxu0 %v1393
    %1494 = vmatpush1.bf16.msra.mxu0 %v1392
    %1495 = vmatprep.subr.bf16.mxu0 %v1397
    %1496 = vmatpush1.bf16.msra.mxu0 %v1396
    %1497 = vmatprep.subr.bf16.mxu0 %v1401
    %1498 = vmatpush1.bf16.msra.mxu0 %v1400
    %1499 = vmatprep.subr.bf16.mxu0 %v1405
    %1500 = vmatpush1.bf16.msra.mxu0 %v1404
    %1501 = vmatprep.subr.bf16.mxu0 %v1409
    %1502 = vmatpush1.bf16.msra.mxu0 %v1408
    %1503 = vmatprep.subr.bf16.mxu0 %v1413
    %1504 = vmatpush1.bf16.msra.mxu0 %v1412
    %1505 = vmatprep.subr.bf16.mxu0 %v1417
    %1506 = vmatpush1.bf16.msra.mxu0 %v1416
    %1507 = vmatprep.subr.bf16.mxu0 0
    %1508 = vmatpush1.bf16.msra.mxu0 0
    %1509 = vmatprep.subr.bf16.mxu0 0
    %1510 = vmatpush1.bf16.msra.mxu0 0
    %1511 = vmatprep.subr.bf16.mxu0 0
    %1512 = vmatpush1.bf16.msra.mxu0 0
    %1513 = vmatprep.subr.bf16.mxu0 0
    %1514 = vmatpush1.bf16.msra.mxu0 0
    %1515 = vmatprep.subr.bf16.mxu0 0
    %1516 = vmatpush1.bf16.msra.mxu0 0
    %1517 = vmatprep.subr.bf16.mxu0 0
    %1518 = vmatpush1.bf16.msra.mxu0 0
    %1519 = vmatprep.subr.bf16.mxu0 0
    %1520 = vmatpush1.bf16.msra.mxu0 0
    %1521 = vmatprep.subr.bf16.mxu0 0
    %1522 = vmatpush1.bf16.msra.mxu0 0
    %1523 = vmatprep.mubr.bf16.mxu0 0
    %1524 = vmatmul.mubr.bf16.gmra.mrb[0].mxu0 0
    %v1525 = vpop.f32.mrb[0].mxu0
    %v1526 = vadd.f32 0.0, %v1525
    %v1527 = vpop.f32.mrb[0].mxu0
    %v1528 = vadd.f32 0.0, %v1527
    %v1529 = vpop.f32.mrb[0].mxu0
    %v1530 = vpop.f32.mrb[0].mxu0
    %1531 = vdwg.mxu0
    %v1532 = vadd.f32 %v903, %v1485
    %v1533 = vadd.f32 %v905, %v1487
    %v1534 = vadd.f32 %v976, %v1526
    %v1535 = vadd.f32 %v978, %v1528
    %v1536 = vmul.f32 %v1286, 0.5
    %v1537 = vtanh.pop %v1536
    %v1538 = vadd.f32 %v1537, 1.0
    %v1539 = vmul.f32 %v1538, 0.5
    %v1540 = vmul.f32 %v1287, 0.5
    %v1541 = vtanh.pop %v1540
    %v1542 = vadd.f32 %v1541, 1.0
    %v1543 = vmul.f32 %v1542, 0.5
    %v1544 = vtanh.pop %v1288
    %v1545 = vmul.f32 %v1289, 0.5
    %v1546 = vtanh.pop %v1545
    %v1547 = vadd.f32 %v1546, 1.0
    %v1548 = vmul.f32 %v1547, 0.5
    %v1549 = vmul.f32 %v1543, 0.0
    %v1550 = vmul.f32 %v1539, %v1544
    %v1551 = vadd.f32 %v1549, %v1550
    %v1552 = vtanh.pop %v1551
    %v1553 = vmul.f32 %v1548, %v1552
    %v1554 = vmul.f32 %v1532, 0.5
    %v1555 = vtanh.pop %v1554
    %v1556 = vadd.f32 %v1555, 1.0
    %v1557 = vmul.f32 %v1556, 0.5
    %v1558 = vmul.f32 %v1533, 0.5
    %v1559 = vtanh.pop %v1558
    %v1560 = vadd.f32 %v1559, 1.0
    %v1561 = vmul.f32 %v1560, 0.5
    %v1562 = vtanh.pop %v1534
    %v1563 = vmul.f32 %v1535, 0.5
    %v1564 = vtanh.pop %v1563
    %v1565 = vadd.f32 %v1564, 1.0
    %v1566 = vmul.f32 %v1565, 0.5
    %v1567 = vmul.f32 %v1561, 0.0
    %v1568 = vmul.f32 %v1557, %v1562
    %v1569 = vadd.f32 %v1567, %v1568
    %v1570 = vtanh.pop %v1569
    %v1571 = vmul.f32 %v1566, %v1570
    %v1572 = vpack.c.bf16 %v1553, %v1553
    %1573 = vmatprep.subr.bf16.mxu0 %v1141
    %1574 = vmatpush1.bf16.msra.mxu0 %v1140
    %1575 = vmatprep.subr.bf16.mxu0 %v1145
    %1576 = vmatpush1.bf16.msra.mxu0 %v1144
    %1577 = vmatprep.subr.bf16.mxu0 %v1149
    %1578 = vmatpush1.bf16.msra.mxu0 %v1148
    %1579 = vmatprep.subr.bf16.mxu0 %v1153
    %1580 = vmatpush1.bf16.msra.mxu0 %v1152
    %1581 = vmatprep.subr.bf16.mxu0 %v1157
    %1582 = vmatpush1.bf16.msra.mxu0 %v1156
    %1583 = vmatprep.subr.bf16.mxu0 %v1161
    %1584 = vmatpush1.bf16.msra.mxu0 %v1160
    %1585 = vmatprep.subr.bf16.mxu0 %v1165
    %1586 = vmatpush1.bf16.msra.mxu0 %v1164
    %1587 = vmatprep.subr.bf16.mxu0 %v1169
    %1588 = vmatpush1.bf16.msra.mxu0 %v1168
    %1589 = vmatprep.subr.bf16.mxu0 0
    %1590 = vmatpush1.bf16.msra.mxu0 0
    %1591 = vmatprep.subr.bf16.mxu0 0
    %1592 = vmatpush1.bf16.msra.mxu0 0
    %1593 = vmatprep.subr.bf16.mxu0 0
    %1594 = vmatpush1.bf16.msra.mxu0 0
    %1595 = vmatprep.subr.bf16.mxu0 0
    %1596 = vmatpush1.bf16.msra.mxu0 0
    %1597 = vmatprep.subr.bf16.mxu0 0
    %1598 = vmatpush1.bf16.msra.mxu0 0
    %1599 = vmatprep.subr.bf16.mxu0 0
    %1600 = vmatpush1.bf16.msra.mxu0 0
    %1601 = vmatprep.subr.bf16.mxu0 0
    %1602 = vmatpush1.bf16.msra.mxu0 0
    %1603 = vmatprep.subr.bf16.mxu0 0
    %1604 = vmatpush1.bf16.msra.mxu0 0
    %1605 = vmatprep.mubr.bf16.mxu0 0
    %1606 = vmatmul.mubr.bf16.gmra.mrb[0].mxu0 %v1572
    %v1607 = vpop.f32.mrb[0].mxu0
    %v1608 = vadd.f32 0.0, %v1607
    %v1609 = vpop.f32.mrb[0].mxu0
    %v1610 = vadd.f32 0.0, %v1609
    %v1611 = vpop.f32.mrb[0].mxu0
    %v1612 = vpop.f32.mrb[0].mxu0
    %1613 = vdwg.mxu0
    %1614 = vmatprep.subr.bf16.mxu0 %v1143
    %1615 = vmatpush1.bf16.msra.mxu0 %v1142
    %1616 = vmatprep.subr.bf16.mxu0 %v1147
    %1617 = vmatpush1.bf16.msra.mxu0 %v1146
    %1618 = vmatprep.subr.bf16.mxu0 %v1151
    %1619 = vmatpush1.bf16.msra.mxu0 %v1150
    %1620 = vmatprep.subr.bf16.mxu0 %v1155
    %1621 = vmatpush1.bf16.msra.mxu0 %v1154
    %1622 = vmatprep.subr.bf16.mxu0 %v1159
    %1623 = vmatpush1.bf16.msra.mxu0 %v1158
    %1624 = vmatprep.subr.bf16.mxu0 %v1163
    %1625 = vmatpush1.bf16.msra.mxu0 %v1162
    %1626 = vmatprep.subr.bf16.mxu0 %v1167
    %1627 = vmatpush1.bf16.msra.mxu0 %v1166
    %1628 = vmatprep.subr.bf16.mxu0 %v1171
    %1629 = vmatpush1.bf16.msra.mxu0 %v1170
    %1630 = vmatprep.subr.bf16.mxu0 0
    %1631 = vmatpush1.bf16.msra.mxu0 0
    %1632 = vmatprep.subr.bf16.mxu0 0
    %1633 = vmatpush1.bf16.msra.mxu0 0
    %1634 = vmatprep.subr.bf16.mxu0 0
    %1635 = vmatpush1.bf16.msra.mxu0 0
    %1636 = vmatprep.subr.bf16.mxu0 0
    %1637 = vmatpush1.bf16.msra.mxu0 0
    %1638 = vmatprep.subr.bf16.mxu0 0
    %1639 = vmatpush1.bf16.msra.mxu0 0
    %1640 = vmatprep.subr.bf16.mxu0 0
    %1641 = vmatpush1.bf16.msra.mxu0 0
    %1642 = vmatprep.subr.bf16.mxu0 0
    %1643 = vmatpush1.bf16.msra.mxu0 0
    %1644 = vmatprep.subr.bf16.mxu0 0
    %1645 = vmatpush1.bf16.msra.mxu0 0
    %1646 = vmatprep.mubr.bf16.mxu0 0
    %1647 = vmatmul.mubr.bf16.gmra.mrb[0].mxu0 %v1572
    %v1648 = vpop.f32.mrb[0].mxu0
    %v1649 = vadd.f32 0.0, %v1648
    %v1650 = vpop.f32.mrb[0].mxu0
    %v1651 = vadd.f32 0.0, %v1650
    %v1652 = vpop.f32.mrb[0].mxu0
    %v1653 = vpop.f32.mrb[0].mxu0
    %1654 = vdwg.mxu0
    %v1655 = vadd.f32 %v727, %v1608
    %v1656 = vadd.f32 %v729, %v1610
    %v1657 = vadd.f32 %v800, %v1649
    %v1658 = vadd.f32 %v802, %v1651
    %v1659 = vpack.c.bf16 %v1571, %v1571
    %1660 = vmatprep.subr.bf16.mxu0 %v1387
    %1661 = vmatpush1.bf16.msra.mxu0 %v1386
    %1662 = vmatprep.subr.bf16.mxu0 %v1391
    %1663 = vmatpush1.bf16.msra.mxu0 %v1390
    %1664 = vmatprep.subr.bf16.mxu0 %v1395
    %1665 = vmatpush1.bf16.msra.mxu0 %v1394
    %1666 = vmatprep.subr.bf16.mxu0 %v1399
    %1667 = vmatpush1.bf16.msra.mxu0 %v1398
    %1668 = vmatprep.subr.bf16.mxu0 %v1403
    %1669 = vmatpush1.bf16.msra.mxu0 %v1402
    %1670 = vmatprep.subr.bf16.mxu0 %v1407
    %1671 = vmatpush1.bf16.msra.mxu0 %v1406
    %1672 = vmatprep.subr.bf16.mxu0 %v1411
    %1673 = vmatpush1.bf16.msra.mxu0 %v1410
    %1674 = vmatprep.subr.bf16.mxu0 %v1415
    %1675 = vmatpush1.bf16.msra.mxu0 %v1414
    %1676 = vmatprep.subr.bf16.mxu0 0
    %1677 = vmatpush1.bf16.msra.mxu0 0
    %1678 = vmatprep.subr.bf16.mxu0 0
    %1679 = vmatpush1.bf16.msra.mxu0 0
    %1680 = vmatprep.subr.bf16.mxu0 0
    %1681 = vmatpush1.bf16.msra.mxu0 0
    %1682 = vmatprep.subr.bf16.mxu0 0
    %1683 = vmatpush1.bf16.msra.mxu0 0
    %1684 = vmatprep.subr.bf16.mxu0 0
    %1685 = vmatpush1.bf16.msra.mxu0 0
    %1686 = vmatprep.subr.bf16.mxu0 0
    %1687 = vmatpush1.bf16.msra.mxu0 0
    %1688 = vmatprep.subr.bf16.mxu0 0
    %1689 = vmatpush1.bf16.msra.mxu0 0
    %1690 = vmatprep.subr.bf16.mxu0 0
    %1691 = vmatpush1.bf16.msra.mxu0 0
    %1692 = vmatprep.mubr.bf16.mxu0 0
    %1693 = vmatmul.mubr.bf16.gmra.mrb[0].mxu0 %v1659
    %v1694 = vpop.f32.mrb[0].mxu0
    %v1695 = vadd.f32 0.0, %v1694
    %v1696 = vpop.f32.mrb[0].mxu0
    %v1697 = vadd.f32 0.0, %v1696
    %v1698 = vpop.f32.mrb[0].mxu0
    %v1699 = vpop.f32.mrb[0].mxu0
    %1700 = vdwg.mxu0
    %1701 = vmatprep.subr.bf16.mxu0 %v1389
    %1702 = vmatpush1.bf16.msra.mxu0 %v1388
    %1703 = vmatprep.subr.bf16.mxu0 %v1393
    %1704 = vmatpush1.bf16.msra.mxu0 %v1392
    %1705 = vmatprep.subr.bf16.mxu0 %v1397
    %1706 = vmatpush1.bf16.msra.mxu0 %v1396
    %1707 = vmatprep.subr.bf16.mxu0 %v1401
    %1708 = vmatpush1.bf16.msra.mxu0 %v1400
    %1709 = vmatprep.subr.bf16.mxu0 %v1405
    %1710 = vmatpush1.bf16.msra.mxu0 %v1404
    %1711 = vmatprep.subr.bf16.mxu0 %v1409
    %1712 = vmatpush1.bf16.msra.mxu0 %v1408
    %1713 = vmatprep.subr.bf16.mxu0 %v1413
    %1714 = vmatpush1.bf16.msra.mxu0 %v1412
    %1715 = vmatprep.subr.bf16.mxu0 %v1417
    %1716 = vmatpush1.bf16.msra.mxu0 %v1416
    %1717 = vmatprep.subr.bf16.mxu0 0
    %1718 = vmatpush1.bf16.msra.mxu0 0
    %1719 = vmatprep.subr.bf16.mxu0 0
    %1720 = vmatpush1.bf16.msra.mxu0 0
    %1721 = vmatprep.subr.bf16.mxu0 0
    %1722 = vmatpush1.bf16.msra.mxu0 0
    %1723 = vmatprep.subr.bf16.mxu0 0
    %1724 = vmatpush1.bf16.msra.mxu0 0
    %1725 = vmatprep.subr.bf16.mxu0 0
    %1726 = vmatpush1.bf16.msra.mxu0 0
    %1727 = vmatprep.subr.bf16.mxu0 0
    %1728 = vmatpush1.bf16.msra.mxu0 0
    %1729 = vmatprep.subr.bf16.mxu0 0
    %1730 = vmatpush1.bf16.msra.mxu0 0
    %1731 = vmatprep.subr.bf16.mxu0 0
    %1732 = vmatpush1.bf16.msra.mxu0 0
    %1733 = vmatprep.mubr.bf16.mxu0 0
    %1734 = vmatmul.mubr.bf16.gmra.mrb[0].mxu0 %v1659
    %v1735 = vpop.f32.mrb[0].mxu0
    %v1736 = vadd.f32 0.0, %v1735
    %v1737 = vpop.f32.mrb[0].mxu0
    %v1738 = vadd.f32 0.0, %v1737
    %v1739 = vpop.f32.mrb[0].mxu0
    %v1740 = vpop.f32.mrb[0].mxu0
    %1741 = vdwg.mxu0
    %v1742 = vadd.f32 %v899, %v1695
    %v1743 = vadd.f32 %v901, %v1697
    %v1744 = vadd.f32 %v972, %v1736
    %v1745 = vadd.f32 %v974, %v1738
    %v1746 = vmul.f32 %v1655, 0.5
    %v1747 = vtanh.pop %v1746
    %v1748 = vadd.f32 %v1747, 1.0
    %v1749 = vmul.f32 %v1748, 0.5
    %v1750 = vmul.f32 %v1656, 0.5
    %v1751 = vtanh.pop %v1750
    %v1752 = vadd.f32 %v1751, 1.0
    %v1753 = vmul.f32 %v1752, 0.5
    %v1754 = vtanh.pop %v1657
    %v1755 = vmul.f32 %v1658, 0.5
    %v1756 = vtanh.pop %v1755
    %v1757 = vadd.f32 %v1756, 1.0
    %v1758 = vmul.f32 %v1757, 0.5
    %v1759 = vmul.f32 %v1753, %v1551
    %v1760 = vmul.f32 %v1749, %v1754
    %v1761 = vadd.f32 %v1759, %v1760
    %v1762 = vtanh.pop %v1761
    %v1763 = vmul.f32 %v1758, %v1762
    %v1764 = vmul.f32 %v1742, 0.5
    %v1765 = vtanh.pop %v1764
    %v1766 = vadd.f32 %v1765, 1.0
    %v1767 = vmul.f32 %v1766, 0.5
    %v1768 = vmul.f32 %v1743, 0.5
    %v1769 = vtanh.pop %v1768
    %v1770 = vadd.f32 %v1769, 1.0
    %v1771 = vmul.f32 %v1770, 0.5
    %v1772 = vtanh.pop %v1744
    %v1773 = vmul.f32 %v1745, 0.5
    %v1774 = vtanh.pop %v1773
    %v1775 = vadd.f32 %v1774, 1.0
    %v1776 = vmul.f32 %v1775, 0.5
    %v1777 = vmul.f32 %v1771, %v1569
    %v1778 = vmul.f32 %v1767, %v1772
    %v1779 = vadd.f32 %v1777, %v1778
    %v1780 = vtanh.pop %v1779
    %v1781 = vmul.f32 %v1776, %v1780
    %v1782 = vmax.f32 %v1553, %v1763
    %v1783 = vmax.f32 %v1571, %v1781
    %v1784 = vpack.c.bf16 %v1763, %v1763
    %1785 = vmatprep.subr.bf16.mxu0 %v1141
    %1786 = vmatpush1.bf16.msra.mxu0 %v1140
    %1787 = vmatprep.subr.bf16.mxu0 %v1145
    %1788 = vmatpush1.bf16.msra.mxu0 %v1144
    %1789 = vmatprep.subr.bf16.mxu0 %v1149
    %1790 = vmatpush1.bf16.msra.mxu0 %v1148
    %1791 = vmatprep.subr.bf16.mxu0 %v1153
    %1792 = vmatpush1.bf16.msra.mxu0 %v1152
    %1793 = vmatprep.subr.bf16.mxu0 %v1157
    %1794 = vmatpush1.bf16.msra.mxu0 %v1156
    %1795 = vmatprep.subr.bf16.mxu0 %v1161
    %1796 = vmatpush1.bf16.msra.mxu0 %v1160
    %1797 = vmatprep.subr.bf16.mxu0 %v1165
    %1798 = vmatpush1.bf16.msra.mxu0 %v1164
    %1799 = vmatprep.subr.bf16.mxu0 %v1169
    %1800 = vmatpush1.bf16.msra.mxu0 %v1168
    %1801 = vmatprep.subr.bf16.mxu0 0
    %1802 = vmatpush1.bf16.msra.mxu0 0
    %1803 = vmatprep.subr.bf16.mxu0 0
    %1804 = vmatpush1.bf16.msra.mxu0 0
    %1805 = vmatprep.subr.bf16.mxu0 0
    %1806 = vmatpush1.bf16.msra.mxu0 0
    %1807 = vmatprep.subr.bf16.mxu0 0
    %1808 = vmatpush1.bf16.msra.mxu0 0
    %1809 = vmatprep.subr.bf16.mxu0 0
    %1810 = vmatpush1.bf16.msra.mxu0 0
    %1811 = vmatprep.subr.bf16.mxu0 0
    %1812 = vmatpush1.bf16.msra.mxu0 0
    %1813 = vmatprep.subr.bf16.mxu0 0
    %1814 = vmatpush1.bf16.msra.mxu0 0
    %1815 = vmatprep.subr.bf16.mxu0 0
    %1816 = vmatpush1.bf16.msra.mxu0 0
    %1817 = vmatprep.mubr.bf16.mxu0 0
    %1818 = vmatmul.mubr.bf16.gmra.mrb[0].mxu0 %v1784
    %v1819 = vpop.f32.mrb[0].mxu0
    %v1820 = vadd.f32 0.0, %v1819
    %v1821 = vpop.f32.mrb[0].mxu0
    %v1822 = vadd.f32 0.0, %v1821
    %v1823 = vpop.f32.mrb[0].mxu0
    %v1824 = vpop.f32.mrb[0].mxu0
    %1825 = vdwg.mxu0
    %1826 = vmatprep.subr.bf16.mxu0 %v1143
    %1827 = vmatpush1.bf16.msra.mxu0 %v1142
    %1828 = vmatprep.subr.bf16.mxu0 %v1147
    %1829 = vmatpush1.bf16.msra.mxu0 %v1146
    %1830 = vmatprep.subr.bf16.mxu0 %v1151
    %1831 = vmatpush1.bf16.msra.mxu0 %v1150
    %1832 = vmatprep.subr.bf16.mxu0 %v1155
    %1833 = vmatpush1.bf16.msra.mxu0 %v1154
    %1834 = vmatprep.subr.bf16.mxu0 %v1159
    %1835 = vmatpush1.bf16.msra.mxu0 %v1158
    %1836 = vmatprep.subr.bf16.mxu0 %v1163
    %1837 = vmatpush1.bf16.msra.mxu0 %v1162
    %1838 = vmatprep.subr.bf16.mxu0 %v1167
    %1839 = vmatpush1.bf16.msra.mxu0 %v1166
    %1840 = vmatprep.subr.bf16.mxu0 %v1171
    %1841 = vmatpush1.bf16.msra.mxu0 %v1170
    %1842 = vmatprep.subr.bf16.mxu0 0
    %1843 = vmatpush1.bf16.msra.mxu0 0
    %1844 = vmatprep.subr.bf16.mxu0 0
    %1845 = vmatpush1.bf16.msra.mxu0 0
    %1846 = vmatprep.subr.bf16.mxu0 0
    %1847 = vmatpush1.bf16.msra.mxu0 0
    %1848 = vmatprep.subr.bf16.mxu0 0
    %1849 = vmatpush1.bf16.msra.mxu0 0
    %1850 = vmatprep.subr.bf16.mxu0 0
    %1851 = vmatpush1.bf16.msra.mxu0 0
    %1852 = vmatprep.subr.bf16.mxu0 0
    %1853 = vmatpush1.bf16.msra.mxu0 0
    %1854 = vmatprep.subr.bf16.mxu0 0
    %1855 = vmatpush1.bf16.msra.mxu0 0
    %1856 = vmatprep.subr.bf16.mxu0 0
    %1857 = vmatpush1.bf16.msra.mxu0 0
    %1858 = vmatprep.mubr.bf16.mxu0 0
    %1859 = vmatmul.mubr.bf16.gmra.mrb[0].mxu0 %v1784
    %v1860 = vpop.f32.mrb[0].mxu0
    %v1861 = vadd.f32 0.0, %v1860
    %v1862 = vpop.f32.mrb[0].mxu0
    %v1863 = vadd.f32 0.0, %v1862
    %v1864 = vpop.f32.mrb[0].mxu0
    %v1865 = vpop.f32.mrb[0].mxu0
    %1866 = vdwg.mxu0
    %v1867 = vadd.f32 %v733, %v1820
    %v1868 = vadd.f32 %v735, %v1822
    %v1869 = vadd.f32 %v806, %v1861
    %v1870 = vadd.f32 %v808, %v1863
    %v1871 = vpack.c.bf16 %v1781, %v1781
    %1872 = vmatprep.subr.bf16.mxu0 %v1387
    %1873 = vmatpush1.bf16.msra.mxu0 %v1386
    %1874 = vmatprep.subr.bf16.mxu0 %v1391
    %1875 = vmatpush1.bf16.msra.mxu0 %v1390
    %1876 = vmatprep.subr.bf16.mxu0 %v1395
    %1877 = vmatpush1.bf16.msra.mxu0 %v1394
    %1878 = vmatprep.subr.bf16.mxu0 %v1399
    %1879 = vmatpush1.bf16.msra.mxu0 %v1398
    %1880 = vmatprep.subr.bf16.mxu0 %v1403
    %1881 = vmatpush1.bf16.msra.mxu0 %v1402
    %1882 = vmatprep.subr.bf16.mxu0 %v1407
    %1883 = vmatpush1.bf16.msra.mxu0 %v1406
    %1884 = vmatprep.subr.bf16.mxu0 %v1411
    %1885 = vmatpush1.bf16.msra.mxu0 %v1410
    %1886 = vmatprep.subr.bf16.mxu0 %v1415
    %1887 = vmatpush1.bf16.msra.mxu0 %v1414
    %1888 = vmatprep.subr.bf16.mxu0 0
    %1889 = vmatpush1.bf16.msra.mxu0 0
    %1890 = vmatprep.subr.bf16.mxu0 0
    %1891 = vmatpush1.bf16.msra.mxu0 0
    %1892 = vmatprep.subr.bf16.mxu0 0
    %1893 = vmatpush1.bf16.msra.mxu0 0
    %1894 = vmatprep.subr.bf16.mxu0 0
    %1895 = vmatpush1.bf16.msra.mxu0 0
    %1896 = vmatprep.subr.bf16.mxu0 0
    %1897 = vmatpush1.bf16.msra.mxu0 0
    %1898 = vmatprep.subr.bf16.mxu0 0
    %1899 = vmatpush1.bf16.msra.mxu0 0
    %1900 = vmatprep.subr.bf16.mxu0 0
    %1901 = vmatpush1.bf16.msra.mxu0 0
    %1902 = vmatprep.subr.bf16.mxu0 0
    %1903 = vmatpush1.bf16.msra.mxu0 0
    %1904 = vmatprep.mubr.bf16.mxu0 0
    %1905 = vmatmul.mubr.bf16.gmra.mrb[0].mxu0 %v1871
    %v1906 = vpop.f32.mrb[0].mxu0
    %v1907 = vadd.f32 0.0, %v1906
    %v1908 = vpop.f32.mrb[0].mxu0
    %v1909 = vadd.f32 0.0, %v1908
    %v1910 = vpop.f32.mrb[0].mxu0
    %v1911 = vpop.f32.mrb[0].mxu0
    %1912 = vdwg.mxu0
    %1913 = vmatprep.subr.bf16.mxu0 %v1389
    %1914 = vmatpush1.bf16.msra.mxu0 %v1388
    %1915 = vmatprep.subr.bf16.mxu0 %v1393
    %1916 = vmatpush1.bf16.msra.mxu0 %v1392
    %1917 = vmatprep.subr.bf16.mxu0 %v1397
    %1918 = vmatpush1.bf16.msra.mxu0 %v1396
    %1919 = vmatprep.subr.bf16.mxu0 %v1401
    %1920 = vmatpush1.bf16.msra.mxu0 %v1400
    %1921 = vmatprep.subr.bf16.mxu0 %v1405
    %1922 = vmatpush1.bf16.msra.mxu0 %v1404
    %1923 = vmatprep.subr.bf16.mxu0 %v1409
    %1924 = vmatpush1.bf16.msra.mxu0 %v1408
    %1925 = vmatprep.subr.bf16.mxu0 %v1413
    %1926 = vmatpush1.bf16.msra.mxu0 %v1412
    %1927 = vmatprep.subr.bf16.mxu0 %v1417
    %1928 = vmatpush1.bf16.msra.mxu0 %v1416
    %1929 = vmatprep.subr.bf16.mxu0 0
    %1930 = vmatpush1.bf16.msra.mxu0 0
    %1931 = vmatprep.subr.bf16.mxu0 0
    %1932 = vmatpush1.bf16.msra.mxu0 0
    %1933 = vmatprep.subr.bf16.mxu0 0
    %1934 = vmatpush1.bf16.msra.mxu0 0
    %1935 = vmatprep.subr.bf16.mxu0 0
    %1936 = vmatpush1.bf16.msra.mxu0 0
    %1937 = vmatprep.subr.bf16.mxu0 0
    %1938 = vmatpush1.bf16.msra.mxu0 0
    %1939 = vmatprep.subr.bf16.mxu0 0
    %1940 = vmatpush1.bf16.msra.mxu0 0
    %1941 = vmatprep.subr.bf16.mxu0 0
    %1942 = vmatpush1.bf16.msra.mxu0 0
    %1943 = vmatprep.subr.bf16.mxu0 0
    %1944 = vmatpush1.bf16.msra.mxu0 0
    %1945 = vmatprep.mubr.bf16.mxu0 0
    %1946 = vmatmul.mubr.bf16.gmra.mrb[0].mxu0 %v1871
    %v1947 = vpop.f32.mrb[0].mxu0
    %v1948 = vadd.f32 0.0, %v1947
    %v1949 = vpop.f32.mrb[0].mxu0
    %v1950 = vadd.f32 0.0, %v1949
    %v1951 = vpop.f32.mrb[0].mxu0
    %v1952 = vpop.f32.mrb[0].mxu0
    %1953 = vdwg.mxu0
    %v1954 = vadd.f32 %v893, %v1907
    %v1955 = vadd.f32 %v895, %v1909
    %v1956 = vadd.f32 %v966, %v1948
    %v1957 = vadd.f32 %v968, %v1950
    %v1958 = vmul.f32 %v1867, 0.5
    %v1959 = vtanh.pop %v1958
    %v1960 = vadd.f32 %v1959, 1.0
    %v1961 = vmul.f32 %v1960, 0.5
    %v1962 = vmul.f32 %v1868, 0.5
    %v1963 = vtanh.pop %v1962
    %v1964 = vadd.f32 %v1963, 1.0
    %v1965 = vmul.f32 %v1964, 0.5
    %v1966 = vtanh.pop %v1869
    %v1967 = vmul.f32 %v1870, 0.5
    %v1968 = vtanh.pop %v1967
    %v1969 = vadd.f32 %v1968, 1.0
    %v1970 = vmul.f32 %v1969, 0.5
    %v1971 = vmul.f32 %v1965, %v1761
    %v1972 = vmul.f32 %v1961, %v1966
    %v1973 = vadd.f32 %v1971, %v1972
    %v1974 = vtanh.pop %v1973
    %v1975 = vmul.f32 %v1970, %v1974
    %v1976 = vmul.f32 %v1954, 0.5
    %v1977 = vtanh.pop %v1976
    %v1978 = vadd.f32 %v1977, 1.0
    %v1979 = vmul.f32 %v1978, 0.5
    %v1980 = vmul.f32 %v1955, 0.5
    %v1981 = vtanh.pop %v1980
    %v1982 = vadd.f32 %v1981, 1.0
    %v1983 = vmul.f32 %v1982, 0.5
    %v1984 = vtanh.pop %v1956
    %v1985 = vmul.f32 %v1957, 0.5
    %v1986 = vtanh.pop %v1985
    %v1987 = vadd.f32 %v1986, 1.0
    %v1988 = vmul.f32 %v1987, 0.5
    %v1989 = vmul.f32 %v1983, %v1779
    %v1990 = vmul.f32 %v1979, %v1984
    %v1991 = vadd.f32 %v1989, %v1990
    %v1992 = vtanh.pop %v1991
    %v1993 = vmul.f32 %v1988, %v1992
    %v1994 = vmax.f32 %v1782, %v1975
    %v1995 = vmax.f32 %v1783, %v1993
    %v1996 = vpack.c.bf16 %v1975, %v1975
    %1997 = vmatprep.subr.bf16.mxu0 %v1141
    %1998 = vmatpush1.bf16.msra.mxu0 %v1140
    %1999 = vmatprep.subr.bf16.mxu0 %v1145
    %2000 = vmatpush1.bf16.msra.mxu0 %v1144
    %2001 = vmatprep.subr.bf16.mxu0 %v1149
    %2002 = vmatpush1.bf16.msra.mxu0 %v1148
    %2003 = vmatprep.subr.bf16.mxu0 %v1153
    %2004 = vmatpush1.bf16.msra.mxu0 %v1152
    %2005 = vmatprep.subr.bf16.mxu0 %v1157
    %2006 = vmatpush1.bf16.msra.mxu0 %v1156
    %2007 = vmatprep.subr.bf16.mxu0 %v1161
    %2008 = vmatpush1.bf16.msra.mxu0 %v1160
    %2009 = vmatprep.subr.bf16.mxu0 %v1165
    %2010 = vmatpush1.bf16.msra.mxu0 %v1164
    %2011 = vmatprep.subr.bf16.mxu0 %v1169
    %2012 = vmatpush1.bf16.msra.mxu0 %v1168
    %2013 = vmatprep.subr.bf16.mxu0 0
    %2014 = vmatpush1.bf16.msra.mxu0 0
    %2015 = vmatprep.subr.bf16.mxu0 0
    %2016 = vmatpush1.bf16.msra.mxu0 0
    %2017 = vmatprep.subr.bf16.mxu0 0
    %2018 = vmatpush1.bf16.msra.mxu0 0
    %2019 = vmatprep.subr.bf16.mxu0 0
    %2020 = vmatpush1.bf16.msra.mxu0 0
    %2021 = vmatprep.subr.bf16.mxu0 0
    %2022 = vmatpush1.bf16.msra.mxu0 0
    %2023 = vmatprep.subr.bf16.mxu0 0
    %2024 = vmatpush1.bf16.msra.mxu0 0
    %2025 = vmatprep.subr.bf16.mxu0 0
    %2026 = vmatpush1.bf16.msra.mxu0 0
    %2027 = vmatprep.subr.bf16.mxu0 0
    %2028 = vmatpush1.bf16.msra.mxu0 0
    %2029 = vmatprep.mubr.bf16.mxu0 0
    %2030 = vmatmul.mubr.bf16.gmra.mrb[0].mxu0 %v1996
    %v2031 = vpop.f32.mrb[0].mxu0
    %v2032 = vadd.f32 0.0, %v2031
    %v2033 = vpop.f32.mrb[0].mxu0
    %v2034 = vadd.f32 0.0, %v2033
    %v2035 = vpop.f32.mrb[0].mxu0
    %v2036 = vpop.f32.mrb[0].mxu0
    %2037 = vdwg.mxu0
    %2038 = vmatprep.subr.bf16.mxu0 %v1143
    %2039 = vmatpush1.bf16.msra.mxu0 %v1142
    %2040 = vmatprep.subr.bf16.mxu0 %v1147
    %2041 = vmatpush1.bf16.msra.mxu0 %v1146
    %2042 = vmatprep.subr.bf16.mxu0 %v1151
    %2043 = vmatpush1.bf16.msra.mxu0 %v1150
    %2044 = vmatprep.subr.bf16.mxu0 %v1155
    %2045 = vmatpush1.bf16.msra.mxu0 %v1154
    %2046 = vmatprep.subr.bf16.mxu0 %v1159
    %2047 = vmatpush1.bf16.msra.mxu0 %v1158
    %2048 = vmatprep.subr.bf16.mxu0 %v1163
    %2049 = vmatpush1.bf16.msra.mxu0 %v1162
    %2050 = vmatprep.subr.bf16.mxu0 %v1167
    %2051 = vmatpush1.bf16.msra.mxu0 %v1166
    %2052 = vmatprep.subr.bf16.mxu0 %v1171
    %2053 = vmatpush1.bf16.msra.mxu0 %v1170
    %2054 = vmatprep.subr.bf16.mxu0 0
    %2055 = vmatpush1.bf16.msra.mxu0 0
    %2056 = vmatprep.subr.bf16.mxu0 0
    %2057 = vmatpush1.bf16.msra.mxu0 0
    %2058 = vmatprep.subr.bf16.mxu0 0
    %2059 = vmatpush1.bf16.msra.mxu0 0
    %2060 = vmatprep.subr.bf16.mxu0 0
    %2061 = vmatpush1.bf16.msra.mxu0 0
    %2062 = vmatprep.subr.bf16.mxu0 0
    %2063 = vmatpush1.bf16.msra.mxu0 0
    %2064 = vmatprep.subr.bf16.mxu0 0
    %2065 = vmatpush1.bf16.msra.mxu0 0
    %2066 = vmatprep.subr.bf16.mxu0 0
    %2067 = vmatpush1.bf16.msra.mxu0 0
    %2068 = vmatprep.subr.bf16.mxu0 0
    %2069 = vmatpush1.bf16.msra.mxu0 0
    %2070 = vmatprep.mubr.bf16.mxu0 0
    %2071 = vmatmul.mubr.bf16.gmra.mrb[0].mxu0 %v1996
    %v2072 = vpop.f32.mrb[0].mxu0
    %v2073 = vadd.f32 0.0, %v2072
    %v2074 = vpop.f32.mrb[0].mxu0
    %v2075 = vadd.f32 0.0, %v2074
    %v2076 = vpop.f32.mrb[0].mxu0
    %v2077 = vpop.f32.mrb[0].mxu0
    %2078 = vdwg.mxu0
    %v2079 = vadd.f32 %v737, %v2032
    %v2080 = vadd.f32 %v739, %v2034
    %v2081 = vadd.f32 %v810, %v2073
    %v2082 = vadd.f32 %v812, %v2075
    %v2083 = vpack.c.bf16 %v1993, %v1993
    %2084 = vmatprep.subr.bf16.mxu0 %v1387
    %2085 = vmatpush1.bf16.msra.mxu0 %v1386
    %2086 = vmatprep.subr.bf16.mxu0 %v1391
    %2087 = vmatpush1.bf16.msra.mxu0 %v1390
    %2088 = vmatprep.subr.bf16.mxu0 %v1395
    %2089 = vmatpush1.bf16.msra.mxu0 %v1394
    %2090 = vmatprep.subr.bf16.mxu0 %v1399
    %2091 = vmatpush1.bf16.msra.mxu0 %v1398
    %2092 = vmatprep.subr.bf16.mxu0 %v1403
    %2093 = vmatpush1.bf16.msra.mxu0 %v1402
    %2094 = vmatprep.subr.bf16.mxu0 %v1407
    %2095 = vmatpush1.bf16.msra.mxu0 %v1406
    %2096 = vmatprep.subr.bf16.mxu0 %v1411
    %2097 = vmatpush1.bf16.msra.mxu0 %v1410
    %2098 = vmatprep.subr.bf16.mxu0 %v1415
    %2099 = vmatpush1.bf16.msra.mxu0 %v1414
    %2100 = vmatprep.subr.bf16.mxu0 0
    %2101 = vmatpush1.bf16.msra.mxu0 0
    %2102 = vmatprep.subr.bf16.mxu0 0
    %2103 = vmatpush1.bf16.msra.mxu0 0
    %2104 = vmatprep.subr.bf16.mxu0 0
    %2105 = vmatpush1.bf16.msra.mxu0 0
    %2106 = vmatprep.subr.bf16.mxu0 0
    %2107 = vmatpush1.bf16.msra.mxu0 0
    %2108 = vmatprep.subr.bf16.mxu0 0
    %2109 = vmatpush1.bf16.msra.mxu0 0
    %2110 = vmatprep.subr.bf16.mxu0 0
    %2111 = vmatpush1.bf16.msra.mxu0 0
    %2112 = vmatprep.subr.bf16.mxu0 0
    %2113 = vmatpush1.bf16.msra.mxu0 0
    %2114 = vmatprep.subr.bf16.mxu0 0
    %2115 = vmatpush1.bf16.msra.mxu0 0
    %2116 = vmatprep.mubr.bf16.mxu0 0
    %2117 = vmatmul.mubr.bf16.gmra.mrb[0].mxu0 %v2083
    %v2118 = vpop.f32.mrb[0].mxu0
    %v2119 = vadd.f32 0.0, %v2118
    %v2120 = vpop.f32.mrb[0].mxu0
    %v2121 = vadd.f32 0.0, %v2120
    %v2122 = vpop.f32.mrb[0].mxu0
    %v2123 = vpop.f32.mrb[0].mxu0
    %2124 = vdwg.mxu0
    %2125 = vmatprep.subr.bf16.mxu0 %v1389
    %2126 = vmatpush1.bf16.msra.mxu0 %v1388
    %2127 = vmatprep.subr.bf16.mxu0 %v1393
    %2128 = vmatpush1.bf16.msra.mxu0 %v1392
    %2129 = vmatprep.subr.bf16.mxu0 %v1397
    %2130 = vmatpush1.bf16.msra.mxu0 %v1396
    %2131 = vmatprep.subr.bf16.mxu0 %v1401
    %2132 = vmatpush1.bf16.msra.mxu0 %v1400
    %2133 = vmatprep.subr.bf16.mxu0 %v1405
    %2134 = vmatpush1.bf16.msra.mxu0 %v1404
    %2135 = vmatprep.subr.bf16.mxu0 %v1409
    %2136 = vmatpush1.bf16.msra.mxu0 %v1408
    %2137 = vmatprep.subr.bf16.mxu0 %v1413
    %2138 = vmatpush1.bf16.msra.mxu0 %v1412
    %2139 = vmatprep.subr.bf16.mxu0 %v1417
    %2140 = vmatpush1.bf16.msra.mxu0 %v1416
    %2141 = vmatprep.subr.bf16.mxu0 0
    %2142 = vmatpush1.bf16.msra.mxu0 0
    %2143 = vmatprep.subr.bf16.mxu0 0
    %2144 = vmatpush1.bf16.msra.mxu0 0
    %2145 = vmatprep.subr.bf16.mxu0 0
    %2146 = vmatpush1.bf16.msra.mxu0 0
    %2147 = vmatprep.subr.bf16.mxu0 0
    %2148 = vmatpush1.bf16.msra.mxu0 0
    %2149 = vmatprep.subr.bf16.mxu0 0
    %2150 = vmatpush1.bf16.msra.mxu0 0
    %2151 = vmatprep.subr.bf16.mxu0 0
    %2152 = vmatpush1.bf16.msra.mxu0 0
    %2153 = vmatprep.subr.bf16.mxu0 0
    %2154 = vmatpush1.bf16.msra.mxu0 0
    %2155 = vmatprep.subr.bf16.mxu0 0
    %2156 = vmatpush1.bf16.msra.mxu0 0
    %2157 = vmatprep.mubr.bf16.mxu0 0
    %2158 = vmatmul.mubr.bf16.gmra.mrb[0].mxu0 %v2083
    %v2159 = vpop.f32.mrb[0].mxu0
    %v2160 = vadd.f32 0.0, %v2159
    %v2161 = vpop.f32.mrb[0].mxu0
    %v2162 = vadd.f32 0.0, %v2161
    %v2163 = vpop.f32.mrb[0].mxu0
    %v2164 = vpop.f32.mrb[0].mxu0
    %2165 = vdwg.mxu0
    %v2166 = vadd.f32 %v889, %v2119
    %v2167 = vadd.f32 %v891, %v2121
    %v2168 = vadd.f32 %v962, %v2160
    %v2169 = vadd.f32 %v964, %v2162
    %v2170 = vmul.f32 %v2079, 0.5
    %v2171 = vtanh.pop %v2170
    %v2172 = vadd.f32 %v2171, 1.0
    %v2173 = vmul.f32 %v2172, 0.5
    %v2174 = vmul.f32 %v2080, 0.5
    %v2175 = vtanh.pop %v2174
    %v2176 = vadd.f32 %v2175, 1.0
    %v2177 = vmul.f32 %v2176, 0.5
    %v2178 = vtanh.pop %v2081
    %v2179 = vmul.f32 %v2082, 0.5
    %v2180 = vtanh.pop %v2179
    %v2181 = vadd.f32 %v2180, 1.0
    %v2182 = vmul.f32 %v2181, 0.5
    %v2183 = vmul.f32 %v2177, %v1973
    %v2184 = vmul.f32 %v2173, %v2178
    %v2185 = vadd.f32 %v2183, %v2184
    %v2186 = vtanh.pop %v2185
    %v2187 = vmul.f32 %v2182, %v2186
    %v2188 = vmul.f32 %v2166, 0.5
    %v2189 = vtanh.pop %v2188
    %v2190 = vadd.f32 %v2189, 1.0
    %v2191 = vmul.f32 %v2190, 0.5
    %v2192 = vmul.f32 %v2167, 0.5
    %v2193 = vtanh.pop %v2192
    %v2194 = vadd.f32 %v2193, 1.0
    %v2195 = vmul.f32 %v2194, 0.5
    %v2196 = vtanh.pop %v2168
    %v2197 = vmul.f32 %v2169, 0.5
    %v2198 = vtanh.pop %v2197
    %v2199 = vadd.f32 %v2198, 1.0
    %v2200 = vmul.f32 %v2199, 0.5
    %v2201 = vmul.f32 %v2195, %v1991
    %v2202 = vmul.f32 %v2191, %v2196
    %v2203 = vadd.f32 %v2201, %v2202
    %v2204 = vtanh.pop %v2203
    %v2205 = vmul.f32 %v2200, %v2204
    %v2206 = vmax.f32 %v1994, %v2187
    %v2207 = vmax.f32 %v1995, %v2205
    %v2208 = vpack.c.bf16 %v2187, %v2187
    %2209 = vmatprep.subr.bf16.mxu0 %v1141
    %2210 = vmatpush1.bf16.msra.mxu0 %v1140
    %2211 = vmatprep.subr.bf16.mxu0 %v1145
    %2212 = vmatpush1.bf16.msra.mxu0 %v1144
    %2213 = vmatprep.subr.bf16.mxu0 %v1149
    %2214 = vmatpush1.bf16.msra.mxu0 %v1148
    %2215 = vmatprep.subr.bf16.mxu0 %v1153
    %2216 = vmatpush1.bf16.msra.mxu0 %v1152
    %2217 = vmatprep.subr.bf16.mxu0 %v1157
    %2218 = vmatpush1.bf16.msra.mxu0 %v1156
    %2219 = vmatprep.subr.bf16.mxu0 %v1161
    %2220 = vmatpush1.bf16.msra.mxu0 %v1160
    %2221 = vmatprep.subr.bf16.mxu0 %v1165
    %2222 = vmatpush1.bf16.msra.mxu0 %v1164
    %2223 = vmatprep.subr.bf16.mxu0 %v1169
    %2224 = vmatpush1.bf16.msra.mxu0 %v1168
    %2225 = vmatprep.subr.bf16.mxu0 0
    %2226 = vmatpush1.bf16.msra.mxu0 0
    %2227 = vmatprep.subr.bf16.mxu0 0
    %2228 = vmatpush1.bf16.msra.mxu0 0
    %2229 = vmatprep.subr.bf16.mxu0 0
    %2230 = vmatpush1.bf16.msra.mxu0 0
    %2231 = vmatprep.subr.bf16.mxu0 0
    %2232 = vmatpush1.bf16.msra.mxu0 0
    %2233 = vmatprep.subr.bf16.mxu0 0
    %2234 = vmatpush1.bf16.msra.mxu0 0
    %2235 = vmatprep.subr.bf16.mxu0 0
    %2236 = vmatpush1.bf16.msra.mxu0 0
    %2237 = vmatprep.subr.bf16.mxu0 0
    %2238 = vmatpush1.bf16.msra.mxu0 0
    %2239 = vmatprep.subr.bf16.mxu0 0
    %2240 = vmatpush1.bf16.msra.mxu0 0
    %2241 = vmatprep.mubr.bf16.mxu0 0
    %2242 = vmatmul.mubr.bf16.gmra.mrb[0].mxu0 %v2208
    %v2243 = vpop.f32.mrb[0].mxu0
    %v2244 = vadd.f32 0.0, %v2243
    %v2245 = vpop.f32.mrb[0].mxu0
    %v2246 = vadd.f32 0.0, %v2245
    %v2247 = vpop.f32.mrb[0].mxu0
    %v2248 = vpop.f32.mrb[0].mxu0
    %2249 = vdwg.mxu0
    %2250 = vmatprep.subr.bf16.mxu0 %v1143
    %2251 = vmatpush1.bf16.msra.mxu0 %v1142
    %2252 = vmatprep.subr.bf16.mxu0 %v1147
    %2253 = vmatpush1.bf16.msra.mxu0 %v1146
    %2254 = vmatprep.subr.bf16.mxu0 %v1151
    %2255 = vmatpush1.bf16.msra.mxu0 %v1150
    %2256 = vmatprep.subr.bf16.mxu0 %v1155
    %2257 = vmatpush1.bf16.msra.mxu0 %v1154
    %2258 = vmatprep.subr.bf16.mxu0 %v1159
    %2259 = vmatpush1.bf16.msra.mxu0 %v1158
    %2260 = vmatprep.subr.bf16.mxu0 %v1163
    %2261 = vmatpush1.bf16.msra.mxu0 %v1162
    %2262 = vmatprep.subr.bf16.mxu0 %v1167
    %2263 = vmatpush1.bf16.msra.mxu0 %v1166
    %2264 = vmatprep.subr.bf16.mxu0 %v1171
    %2265 = vmatpush1.bf16.msra.mxu0 %v1170
    %2266 = vmatprep.subr.bf16.mxu0 0
    %2267 = vmatpush1.bf16.msra.mxu0 0
    %2268 = vmatprep.subr.bf16.mxu0 0
    %2269 = vmatpush1.bf16.msra.mxu0 0
    %2270 = vmatprep.subr.bf16.mxu0 0
    %2271 = vmatpush1.bf16.msra.mxu0 0
    %2272 = vmatprep.subr.bf16.mxu0 0
    %2273 = vmatpush1.bf16.msra.mxu0 0
    %2274 = vmatprep.subr.bf16.mxu0 0
    %2275 = vmatpush1.bf16.msra.mxu0 0
    %2276 = vmatprep.subr.bf16.mxu0 0
    %2277 = vmatpush1.bf16.msra.mxu0 0
    %2278 = vmatprep.subr.bf16.mxu0 0
    %2279 = vmatpush1.bf16.msra.mxu0 0
    %2280 = vmatprep.subr.bf16.mxu0 0
    %2281 = vmatpush1.bf16.msra.mxu0 0
    %2282 = vmatprep.mubr.bf16.mxu0 0
    %2283 = vmatmul.mubr.bf16.gmra.mrb[0].mxu0 %v2208
    %v2284 = vpop.f32.mrb[0].mxu0
    %v2285 = vadd.f32 0.0, %v2284
    %v2286 = vpop.f32.mrb[0].mxu0
    %v2287 = vadd.f32 0.0, %v2286
    %v2288 = vpop.f32.mrb[0].mxu0
    %v2289 = vpop.f32.mrb[0].mxu0
    %2290 = vdwg.mxu0
    %v2291 = vadd.f32 %v743, %v2244
    %v2292 = vadd.f32 %v745, %v2246
    %v2293 = vadd.f32 %v816, %v2285
    %v2294 = vadd.f32 %v818, %v2287
    %v2295 = vpack.c.bf16 %v2205, %v2205
    %2296 = vmatprep.subr.bf16.mxu0 %v1387
    %2297 = vmatpush1.bf16.msra.mxu0 %v1386
    %2298 = vmatprep.subr.bf16.mxu0 %v1391
    %2299 = vmatpush1.bf16.msra.mxu0 %v1390
    %2300 = vmatprep.subr.bf16.mxu0 %v1395
    %2301 = vmatpush1.bf16.msra.mxu0 %v1394
    %2302 = vmatprep.subr.bf16.mxu0 %v1399
    %2303 = vmatpush1.bf16.msra.mxu0 %v1398
    %2304 = vmatprep.subr.bf16.mxu0 %v1403
    %2305 = vmatpush1.bf16.msra.mxu0 %v1402
    %2306 = vmatprep.subr.bf16.mxu0 %v1407
    %2307 = vmatpush1.bf16.msra.mxu0 %v1406
    %2308 = vmatprep.subr.bf16.mxu0 %v1411
    %2309 = vmatpush1.bf16.msra.mxu0 %v1410
    %2310 = vmatprep.subr.bf16.mxu0 %v1415
    %2311 = vmatpush1.bf16.msra.mxu0 %v1414
    %2312 = vmatprep.subr.bf16.mxu0 0
    %2313 = vmatpush1.bf16.msra.mxu0 0
    %2314 = vmatprep.subr.bf16.mxu0 0
    %2315 = vmatpush1.bf16.msra.mxu0 0
    %2316 = vmatprep.subr.bf16.mxu0 0
    %2317 = vmatpush1.bf16.msra.mxu0 0
    %2318 = vmatprep.subr.bf16.mxu0 0
    %2319 = vmatpush1.bf16.msra.mxu0 0
    %2320 = vmatprep.subr.bf16.mxu0 0
    %2321 = vmatpush1.bf16.msra.mxu0 0
    %2322 = vmatprep.subr.bf16.mxu0 0
    %2323 = vmatpush1.bf16.msra.mxu0 0
    %2324 = vmatprep.subr.bf16.mxu0 0
    %2325 = vmatpush1.bf16.msra.mxu0 0
    %2326 = vmatprep.subr.bf16.mxu0 0
    %2327 = vmatpush1.bf16.msra.mxu0 0
    %2328 = vmatprep.mubr.bf16.mxu0 0
    %2329 = vmatmul.mubr.bf16.gmra.mrb[0].mxu0 %v2295
    %v2330 = vpop.f32.mrb[0].mxu0
    %v2331 = vadd.f32 0.0, %v2330
    %v2332 = vpop.f32.mrb[0].mxu0
    %v2333 = vadd.f32 0.0, %v2332
    %v2334 = vpop.f32.mrb[0].mxu0
    %v2335 = vpop.f32.mrb[0].mxu0
    %2336 = vdwg.mxu0
    %2337 = vmatprep.subr.bf16.mxu0 %v1389
    %2338 = vmatpush1.bf16.msra.mxu0 %v1388
    %2339 = vmatprep.subr.bf16.mxu0 %v1393
    %2340 = vmatpush1.bf16.msra.mxu0 %v1392
    %2341 = vmatprep.subr.bf16.mxu0 %v1397
    %2342 = vmatpush1.bf16.msra.mxu0 %v1396
    %2343 = vmatprep.subr.bf16.mxu0 %v1401
    %2344 = vmatpush1.bf16.msra.mxu0 %v1400
    %2345 = vmatprep.subr.bf16.mxu0 %v1405
    %2346 = vmatpush1.bf16.msra.mxu0 %v1404
    %2347 = vmatprep.subr.bf16.mxu0 %v1409
    %2348 = vmatpush1.bf16.msra.mxu0 %v1408
    %2349 = vmatprep.subr.bf16.mxu0 %v1413
    %2350 = vmatpush1.bf16.msra.mxu0 %v1412
    %2351 = vmatprep.subr.bf16.mxu0 %v1417
    %2352 = vmatpush1.bf16.msra.mxu0 %v1416
    %2353 = vmatprep.subr.bf16.mxu0 0
    %2354 = vmatpush1.bf16.msra.mxu0 0
    %2355 = vmatprep.subr.bf16.mxu0 0
    %2356 = vmatpush1.bf16.msra.mxu0 0
    %2357 = vmatprep.subr.bf16.mxu0 0
    %2358 = vmatpush1.bf16.msra.mxu0 0
    %2359 = vmatprep.subr.bf16.mxu0 0
    %2360 = vmatpush1.bf16.msra.mxu0 0
    %2361 = vmatprep.subr.bf16.mxu0 0
    %2362 = vmatpush1.bf16.msra.mxu0 0
    %2363 = vmatprep.subr.bf16.mxu0 0
    %2364 = vmatpush1.bf16.msra.mxu0 0
    %2365 = vmatprep.subr.bf16.mxu0 0
    %2366 = vmatpush1.bf16.msra.mxu0 0
    %2367 = vmatprep.subr.bf16.mxu0 0
    %2368 = vmatpush1.bf16.msra.mxu0 0
    %2369 = vmatprep.mubr.bf16.mxu0 0
    %2370 = vmatmul.mubr.bf16.gmra.mrb[0].mxu0 %v2295
    %v2371 = vpop.f32.mrb[0].mxu0
    %v2372 = vadd.f32 0.0, %v2371
    %v2373 = vpop.f32.mrb[0].mxu0
    %v2374 = vadd.f32 0.0, %v2373
    %v2375 = vpop.f32.mrb[0].mxu0
    %v2376 = vpop.f32.mrb[0].mxu0
    %2377 = vdwg.mxu0
    %v2378 = vadd.f32 %v883, %v2331
    %v2379 = vadd.f32 %v885, %v2333
    %v2380 = vadd.f32 %v956, %v2372
    %v2381 = vadd.f32 %v958, %v2374
    %v2382 = vmul.f32 %v2291, 0.5
    %v2383 = vtanh.pop %v2382
    %v2384 = vadd.f32 %v2383, 1.0
    %v2385 = vmul.f32 %v2384, 0.5
    %v2386 = vmul.f32 %v2292, 0.5
    %v2387 = vtanh.pop %v2386
    %v2388 = vadd.f32 %v2387, 1.0
    %v2389 = vmul.f32 %v2388, 0.5
    %v2390 = vtanh.pop %v2293
    %v2391 = vmul.f32 %v2294, 0.5
    %v2392 = vtanh.pop %v2391
    %v2393 = vadd.f32 %v2392, 1.0
    %v2394 = vmul.f32 %v2393, 0.5
    %v2395 = vmul.f32 %v2389, %v2185
    %v2396 = vmul.f32 %v2385, %v2390
    %v2397 = vadd.f32 %v2395, %v2396
    %v2398 = vtanh.pop %v2397
    %v2399 = vmul.f32 %v2394, %v2398
    %v2400 = vmul.f32 %v2378, 0.5
    %v2401 = vtanh.pop %v2400
    %v2402 = vadd.f32 %v2401, 1.0
    %v2403 = vmul.f32 %v2402, 0.5
    %v2404 = vmul.f32 %v2379, 0.5
    %v2405 = vtanh.pop %v2404
    %v2406 = vadd.f32 %v2405, 1.0
    %v2407 = vmul.f32 %v2406, 0.5
    %v2408 = vtanh.pop %v2380
    %v2409 = vmul.f32 %v2381, 0.5
    %v2410 = vtanh.pop %v2409
    %v2411 = vadd.f32 %v2410, 1.0
    %v2412 = vmul.f32 %v2411, 0.5
    %v2413 = vmul.f32 %v2407, %v2203
    %v2414 = vmul.f32 %v2403, %v2408
    %v2415 = vadd.f32 %v2413, %v2414
    %v2416 = vtanh.pop %v2415
    %v2417 = vmul.f32 %v2412, %v2416
    %v2418 = vmax.f32 %v2206, %v2399
    %v2419 = vmax.f32 %v2207, %v2417
    %v2420 = vpack.c.bf16 %v2399, %v2399
    %2421 = vmatprep.subr.bf16.mxu0 %v1141
    %2422 = vmatpush1.bf16.msra.mxu0 %v1140
    %2423 = vmatprep.subr.bf16.mxu0 %v1145
    %2424 = vmatpush1.bf16.msra.mxu0 %v1144
    %2425 = vmatprep.subr.bf16.mxu0 %v1149
    %2426 = vmatpush1.bf16.msra.mxu0 %v1148
    %2427 = vmatprep.subr.bf16.mxu0 %v1153
    %2428 = vmatpush1.bf16.msra.mxu0 %v1152
    %2429 = vmatprep.subr.bf16.mxu0 %v1157
    %2430 = vmatpush1.bf16.msra.mxu0 %v1156
    %2431 = vmatprep.subr.bf16.mxu0 %v1161
    %2432 = vmatpush1.bf16.msra.mxu0 %v1160
    %2433 = vmatprep.subr.bf16.mxu0 %v1165
    %2434 = vmatpush1.bf16.msra.mxu0 %v1164
    %2435 = vmatprep.subr.bf16.mxu0 %v1169
    %2436 = vmatpush1.bf16.msra.mxu0 %v1168
    %2437 = vmatprep.subr.bf16.mxu0 0
    %2438 = vmatpush1.bf16.msra.mxu0 0
    %2439 = vmatprep.subr.bf16.mxu0 0
    %2440 = vmatpush1.bf16.msra.mxu0 0
    %2441 = vmatprep.subr.bf16.mxu0 0
    %2442 = vmatpush1.bf16.msra.mxu0 0
    %2443 = vmatprep.subr.bf16.mxu0 0
    %2444 = vmatpush1.bf16.msra.mxu0 0
    %2445 = vmatprep.subr.bf16.mxu0 0
    %2446 = vmatpush1.bf16.msra.mxu0 0
    %2447 = vmatprep.subr.bf16.mxu0 0
    %2448 = vmatpush1.bf16.msra.mxu0 0
    %2449 = vmatprep.subr.bf16.mxu0 0
    %2450 = vmatpush1.bf16.msra.mxu0 0
    %2451 = vmatprep.subr.bf16.mxu0 0
    %2452 = vmatpush1.bf16.msra.mxu0 0
    %2453 = vmatprep.mubr.bf16.mxu0 0
    %2454 = vmatmul.mubr.bf16.gmra.mrb[0].mxu0 %v2420
    %v2455 = vpop.f32.mrb[0].mxu0
    %v2456 = vadd.f32 0.0, %v2455
    %v2457 = vpop.f32.mrb[0].mxu0
    %v2458 = vadd.f32 0.0, %v2457
    %v2459 = vpop.f32.mrb[0].mxu0
    %v2460 = vpop.f32.mrb[0].mxu0
    %2461 = vdwg.mxu0
    %2462 = vmatprep.subr.bf16.mxu0 %v1143
    %2463 = vmatpush1.bf16.msra.mxu0 %v1142
    %2464 = vmatprep.subr.bf16.mxu0 %v1147
    %2465 = vmatpush1.bf16.msra.mxu0 %v1146
    %2466 = vmatprep.subr.bf16.mxu0 %v1151
    %2467 = vmatpush1.bf16.msra.mxu0 %v1150
    %2468 = vmatprep.subr.bf16.mxu0 %v1155
    %2469 = vmatpush1.bf16.msra.mxu0 %v1154
    %2470 = vmatprep.subr.bf16.mxu0 %v1159
    %2471 = vmatpush1.bf16.msra.mxu0 %v1158
    %2472 = vmatprep.subr.bf16.mxu0 %v1163
    %2473 = vmatpush1.bf16.msra.mxu0 %v1162
    %2474 = vmatprep.subr.bf16.mxu0 %v1167
    %2475 = vmatpush1.bf16.msra.mxu0 %v1166
    %2476 = vmatprep.subr.bf16.mxu0 %v1171
    %2477 = vmatpush1.bf16.msra.mxu0 %v1170
    %2478 = vmatprep.subr.bf16.mxu0 0
    %2479 = vmatpush1.bf16.msra.mxu0 0
    %2480 = vmatprep.subr.bf16.mxu0 0
    %2481 = vmatpush1.bf16.msra.mxu0 0
    %2482 = vmatprep.subr.bf16.mxu0 0
    %2483 = vmatpush1.bf16.msra.mxu0 0
    %2484 = vmatprep.subr.bf16.mxu0 0
    %2485 = vmatpush1.bf16.msra.mxu0 0
    %2486 = vmatprep.subr.bf16.mxu0 0
    %2487 = vmatpush1.bf16.msra.mxu0 0
    %2488 = vmatprep.subr.bf16.mxu0 0
    %2489 = vmatpush1.bf16.msra.mxu0 0
    %2490 = vmatprep.subr.bf16.mxu0 0
    %2491 = vmatpush1.bf16.msra.mxu0 0
    %2492 = vmatprep.subr.bf16.mxu0 0
    %2493 = vmatpush1.bf16.msra.mxu0 0
    %2494 = vmatprep.mubr.bf16.mxu0 0
    %2495 = vmatmul.mubr.bf16.gmra.mrb[0].mxu0 %v2420
    %v2496 = vpop.f32.mrb[0].mxu0
    %v2497 = vadd.f32 0.0, %v2496
    %v2498 = vpop.f32.mrb[0].mxu0
    %v2499 = vadd.f32 0.0, %v2498
    %v2500 = vpop.f32.mrb[0].mxu0
    %v2501 = vpop.f32.mrb[0].mxu0
    %2502 = vdwg.mxu0
    %v2503 = vadd.f32 %v747, %v2456
    %v2504 = vadd.f32 %v749, %v2458
    %v2505 = vadd.f32 %v820, %v2497
    %v2506 = vadd.f32 %v822, %v2499
    %v2507 = vpack.c.bf16 %v2417, %v2417
    %2508 = vmatprep.subr.bf16.mxu0 %v1387
    %2509 = vmatpush1.bf16.msra.mxu0 %v1386
    %2510 = vmatprep.subr.bf16.mxu0 %v1391
    %2511 = vmatpush1.bf16.msra.mxu0 %v1390
    %2512 = vmatprep.subr.bf16.mxu0 %v1395
    %2513 = vmatpush1.bf16.msra.mxu0 %v1394
    %2514 = vmatprep.subr.bf16.mxu0 %v1399
    %2515 = vmatpush1.bf16.msra.mxu0 %v1398
    %2516 = vmatprep.subr.bf16.mxu0 %v1403
    %2517 = vmatpush1.bf16.msra.mxu0 %v1402
    %2518 = vmatprep.subr.bf16.mxu0 %v1407
    %2519 = vmatpush1.bf16.msra.mxu0 %v1406
    %2520 = vmatprep.subr.bf16.mxu0 %v1411
    %2521 = vmatpush1.bf16.msra.mxu0 %v1410
    %2522 = vmatprep.subr.bf16.mxu0 %v1415
    %2523 = vmatpush1.bf16.msra.mxu0 %v1414
    %2524 = vmatprep.subr.bf16.mxu0 0
    %2525 = vmatpush1.bf16.msra.mxu0 0
    %2526 = vmatprep.subr.bf16.mxu0 0
    %2527 = vmatpush1.bf16.msra.mxu0 0
    %2528 = vmatprep.subr.bf16.mxu0 0
    %2529 = vmatpush1.bf16.msra.mxu0 0
    %2530 = vmatprep.subr.bf16.mxu0 0
    %2531 = vmatpush1.bf16.msra.mxu0 0
    %2532 = vmatprep.subr.bf16.mxu0 0
    %2533 = vmatpush1.bf16.msra.mxu0 0
    %2534 = vmatprep.subr.bf16.mxu0 0
    %2535 = vmatpush1.bf16.msra.mxu0 0
    %2536 = vmatprep.subr.bf16.mxu0 0
    %2537 = vmatpush1.bf16.msra.mxu0 0
    %2538 = vmatprep.subr.bf16.mxu0 0
    %2539 = vmatpush1.bf16.msra.mxu0 0
    %2540 = vmatprep.mubr.bf16.mxu0 0
    %2541 = vmatmul.mubr.bf16.gmra.mrb[0].mxu0 %v2507
    %v2542 = vpop.f32.mrb[0].mxu0
    %v2543 = vadd.f32 0.0, %v2542
    %v2544 = vpop.f32.mrb[0].mxu0
    %v2545 = vadd.f32 0.0, %v2544
    %v2546 = vpop.f32.mrb[0].mxu0
    %v2547 = vpop.f32.mrb[0].mxu0
    %2548 = vdwg.mxu0
    %2549 = vmatprep.subr.bf16.mxu0 %v1389
    %2550 = vmatpush1.bf16.msra.mxu0 %v1388
    %2551 = vmatprep.subr.bf16.mxu0 %v1393
    %2552 = vmatpush1.bf16.msra.mxu0 %v1392
    %2553 = vmatprep.subr.bf16.mxu0 %v1397
    %2554 = vmatpush1.bf16.msra.mxu0 %v1396
    %2555 = vmatprep.subr.bf16.mxu0 %v1401
    %2556 = vmatpush1.bf16.msra.mxu0 %v1400
    %2557 = vmatprep.subr.bf16.mxu0 %v1405
    %2558 = vmatpush1.bf16.msra.mxu0 %v1404
    %2559 = vmatprep.subr.bf16.mxu0 %v1409
    %2560 = vmatpush1.bf16.msra.mxu0 %v1408
    %2561 = vmatprep.subr.bf16.mxu0 %v1413
    %2562 = vmatpush1.bf16.msra.mxu0 %v1412
    %2563 = vmatprep.subr.bf16.mxu0 %v1417
    %2564 = vmatpush1.bf16.msra.mxu0 %v1416
    %2565 = vmatprep.subr.bf16.mxu0 0
    %2566 = vmatpush1.bf16.msra.mxu0 0
    %2567 = vmatprep.subr.bf16.mxu0 0
    %2568 = vmatpush1.bf16.msra.mxu0 0
    %2569 = vmatprep.subr.bf16.mxu0 0
    %2570 = vmatpush1.bf16.msra.mxu0 0
    %2571 = vmatprep.subr.bf16.mxu0 0
    %2572 = vmatpush1.bf16.msra.mxu0 0
    %2573 = vmatprep.subr.bf16.mxu0 0
    %2574 = vmatpush1.bf16.msra.mxu0 0
    %2575 = vmatprep.subr.bf16.mxu0 0
    %2576 = vmatpush1.bf16.msra.mxu0 0
    %2577 = vmatprep.subr.bf16.mxu0 0
    %2578 = vmatpush1.bf16.msra.mxu0 0
    %2579 = vmatprep.subr.bf16.mxu0 0
    %2580 = vmatpush1.bf16.msra.mxu0 0
    %2581 = vmatprep.mubr.bf16.mxu0 0
    %2582 = vmatmul.mubr.bf16.gmra.mrb[0].mxu0 %v2507
    %v2583 = vpop.f32.mrb[0].mxu0
    %v2584 = vadd.f32 0.0, %v2583
    %v2585 = vpop.f32.mrb[0].mxu0
    %v2586 = vadd.f32 0.0, %v2585
    %v2587 = vpop.f32.mrb[0].mxu0
    %v2588 = vpop.f32.mrb[0].mxu0
    %2589 = vdwg.mxu0
    %v2590 = vadd.f32 %v879, %v2543
    %v2591 = vadd.f32 %v881, %v2545
    %v2592 = vadd.f32 %v952, %v2584
    %v2593 = vadd.f32 %v954, %v2586
    %v2594 = vmul.f32 %v2503, 0.5
    %v2595 = vtanh.pop %v2594
    %v2596 = vadd.f32 %v2595, 1.0
    %v2597 = vmul.f32 %v2596, 0.5
    %v2598 = vmul.f32 %v2504, 0.5
    %v2599 = vtanh.pop %v2598
    %v2600 = vadd.f32 %v2599, 1.0
    %v2601 = vmul.f32 %v2600, 0.5
    %v2602 = vtanh.pop %v2505
    %v2603 = vmul.f32 %v2506, 0.5
    %v2604 = vtanh.pop %v2603
    %v2605 = vadd.f32 %v2604, 1.0
    %v2606 = vmul.f32 %v2605, 0.5
    %v2607 = vmul.f32 %v2601, %v2397
    %v2608 = vmul.f32 %v2597, %v2602
    %v2609 = vadd.f32 %v2607, %v2608
    %v2610 = vtanh.pop %v2609
    %v2611 = vmul.f32 %v2606, %v2610
    %v2612 = vmul.f32 %v2590, 0.5
    %v2613 = vtanh.pop %v2612
    %v2614 = vadd.f32 %v2613, 1.0
    %v2615 = vmul.f32 %v2614, 0.5
    %v2616 = vmul.f32 %v2591, 0.5
    %v2617 = vtanh.pop %v2616
    %v2618 = vadd.f32 %v2617, 1.0
    %v2619 = vmul.f32 %v2618, 0.5
    %v2620 = vtanh.pop %v2592
    %v2621 = vmul.f32 %v2593, 0.5
    %v2622 = vtanh.pop %v2621
    %v2623 = vadd.f32 %v2622, 1.0
    %v2624 = vmul.f32 %v2623, 0.5
    %v2625 = vmul.f32 %v2619, %v2415
    %v2626 = vmul.f32 %v2615, %v2620
    %v2627 = vadd.f32 %v2625, %v2626
    %v2628 = vtanh.pop %v2627
    %v2629 = vmul.f32 %v2624, %v2628
    %v2630 = vmax.f32 %v2418, %v2611
    %v2631 = vmax.f32 %v2419, %v2629
    %v2632 = vpack.c.bf16 %v2611, %v2611
    %2633 = vmatprep.subr.bf16.mxu0 %v1141
    %2634 = vmatpush1.bf16.msra.mxu0 %v1140
    %2635 = vmatprep.subr.bf16.mxu0 %v1145
    %2636 = vmatpush1.bf16.msra.mxu0 %v1144
    %2637 = vmatprep.subr.bf16.mxu0 %v1149
    %2638 = vmatpush1.bf16.msra.mxu0 %v1148
    %2639 = vmatprep.subr.bf16.mxu0 %v1153
    %2640 = vmatpush1.bf16.msra.mxu0 %v1152
    %2641 = vmatprep.subr.bf16.mxu0 %v1157
    %2642 = vmatpush1.bf16.msra.mxu0 %v1156
    %2643 = vmatprep.subr.bf16.mxu0 %v1161
    %2644 = vmatpush1.bf16.msra.mxu0 %v1160
    %2645 = vmatprep.subr.bf16.mxu0 %v1165
    %2646 = vmatpush1.bf16.msra.mxu0 %v1164
    %2647 = vmatprep.subr.bf16.mxu0 %v1169
    %2648 = vmatpush1.bf16.msra.mxu0 %v1168
    %2649 = vmatprep.subr.bf16.mxu0 0
    %2650 = vmatpush1.bf16.msra.mxu0 0
    %2651 = vmatprep.subr.bf16.mxu0 0
    %2652 = vmatpush1.bf16.msra.mxu0 0
    %2653 = vmatprep.subr.bf16.mxu0 0
    %2654 = vmatpush1.bf16.msra.mxu0 0
    %2655 = vmatprep.subr.bf16.mxu0 0
    %2656 = vmatpush1.bf16.msra.mxu0 0
    %2657 = vmatprep.subr.bf16.mxu0 0
    %2658 = vmatpush1.bf16.msra.mxu0 0
    %2659 = vmatprep.subr.bf16.mxu0 0
    %2660 = vmatpush1.bf16.msra.mxu0 0
    %2661 = vmatprep.subr.bf16.mxu0 0
    %2662 = vmatpush1.bf16.msra.mxu0 0
    %2663 = vmatprep.subr.bf16.mxu0 0
    %2664 = vmatpush1.bf16.msra.mxu0 0
    %2665 = vmatprep.mubr.bf16.mxu0 0
    %2666 = vmatmul.mubr.bf16.gmra.mrb[0].mxu0 %v2632
    %v2667 = vpop.f32.mrb[0].mxu0
    %v2668 = vadd.f32 0.0, %v2667
    %v2669 = vpop.f32.mrb[0].mxu0
    %v2670 = vadd.f32 0.0, %v2669
    %v2671 = vpop.f32.mrb[0].mxu0
    %v2672 = vpop.f32.mrb[0].mxu0
    %2673 = vdwg.mxu0
    %2674 = vmatprep.subr.bf16.mxu0 %v1143
    %2675 = vmatpush1.bf16.msra.mxu0 %v1142
    %2676 = vmatprep.subr.bf16.mxu0 %v1147
    %2677 = vmatpush1.bf16.msra.mxu0 %v1146
    %2678 = vmatprep.subr.bf16.mxu0 %v1151
    %2679 = vmatpush1.bf16.msra.mxu0 %v1150
    %2680 = vmatprep.subr.bf16.mxu0 %v1155
    %2681 = vmatpush1.bf16.msra.mxu0 %v1154
    %2682 = vmatprep.subr.bf16.mxu0 %v1159
    %2683 = vmatpush1.bf16.msra.mxu0 %v1158
    %2684 = vmatprep.subr.bf16.mxu0 %v1163
    %2685 = vmatpush1.bf16.msra.mxu0 %v1162
    %2686 = vmatprep.subr.bf16.mxu0 %v1167
    %2687 = vmatpush1.bf16.msra.mxu0 %v1166
    %2688 = vmatprep.subr.bf16.mxu0 %v1171
    %2689 = vmatpush1.bf16.msra.mxu0 %v1170
    %2690 = vmatprep.subr.bf16.mxu0 0
    %2691 = vmatpush1.bf16.msra.mxu0 0
    %2692 = vmatprep.subr.bf16.mxu0 0
    %2693 = vmatpush1.bf16.msra.mxu0 0
    %2694 = vmatprep.subr.bf16.mxu0 0
    %2695 = vmatpush1.bf16.msra.mxu0 0
    %2696 = vmatprep.subr.bf16.mxu0 0
    %2697 = vmatpush1.bf16.msra.mxu0 0
    %2698 = vmatprep.subr.bf16.mxu0 0
    %2699 = vmatpush1.bf16.msra.mxu0 0
    %2700 = vmatprep.subr.bf16.mxu0 0
    %2701 = vmatpush1.bf16.msra.mxu0 0
    %2702 = vmatprep.subr.bf16.mxu0 0
    %2703 = vmatpush1.bf16.msra.mxu0 0
    %2704 = vmatprep.subr.bf16.mxu0 0
    %2705 = vmatpush1.bf16.msra.mxu0 0
    %2706 = vmatprep.mubr.bf16.mxu0 0
    %2707 = vmatmul.mubr.bf16.gmra.mrb[0].mxu0 %v2632
    %v2708 = vpop.f32.mrb[0].mxu0
    %v2709 = vadd.f32 0.0, %v2708
    %v2710 = vpop.f32.mrb[0].mxu0
    %v2711 = vadd.f32 0.0, %v2710
    %v2712 = vpop.f32.mrb[0].mxu0
    %v2713 = vpop.f32.mrb[0].mxu0
    %2714 = vdwg.mxu0
    %v2715 = vadd.f32 %v753, %v2668
    %v2716 = vadd.f32 %v755, %v2670
    %v2717 = vadd.f32 %v826, %v2709
    %v2718 = vadd.f32 %v828, %v2711
    %v2719 = vpack.c.bf16 %v2629, %v2629
    %2720 = vmatprep.subr.bf16.mxu0 %v1387
    %2721 = vmatpush1.bf16.msra.mxu0 %v1386
    %2722 = vmatprep.subr.bf16.mxu0 %v1391
    %2723 = vmatpush1.bf16.msra.mxu0 %v1390
    %2724 = vmatprep.subr.bf16.mxu0 %v1395
    %2725 = vmatpush1.bf16.msra.mxu0 %v1394
    %2726 = vmatprep.subr.bf16.mxu0 %v1399
    %2727 = vmatpush1.bf16.msra.mxu0 %v1398
    %2728 = vmatprep.subr.bf16.mxu0 %v1403
    %2729 = vmatpush1.bf16.msra.mxu0 %v1402
    %2730 = vmatprep.subr.bf16.mxu0 %v1407
    %2731 = vmatpush1.bf16.msra.mxu0 %v1406
    %2732 = vmatprep.subr.bf16.mxu0 %v1411
    %2733 = vmatpush1.bf16.msra.mxu0 %v1410
    %2734 = vmatprep.subr.bf16.mxu0 %v1415
    %2735 = vmatpush1.bf16.msra.mxu0 %v1414
    %2736 = vmatprep.subr.bf16.mxu0 0
    %2737 = vmatpush1.bf16.msra.mxu0 0
    %2738 = vmatprep.subr.bf16.mxu0 0
    %2739 = vmatpush1.bf16.msra.mxu0 0
    %2740 = vmatprep.subr.bf16.mxu0 0
    %2741 = vmatpush1.bf16.msra.mxu0 0
    %2742 = vmatprep.subr.bf16.mxu0 0
    %2743 = vmatpush1.bf16.msra.mxu0 0
    %2744 = vmatprep.subr.bf16.mxu0 0
    %2745 = vmatpush1.bf16.msra.mxu0 0
    %2746 = vmatprep.subr.bf16.mxu0 0
    %2747 = vmatpush1.bf16.msra.mxu0 0
    %2748 = vmatprep.subr.bf16.mxu0 0
    %2749 = vmatpush1.bf16.msra.mxu0 0
    %2750 = vmatprep.subr.bf16.mxu0 0
    %2751 = vmatpush1.bf16.msra.mxu0 0
    %2752 = vmatprep.mubr.bf16.mxu0 0
    %2753 = vmatmul.mubr.bf16.gmra.mrb[0].mxu0 %v2719
    %v2754 = vpop.f32.mrb[0].mxu0
    %v2755 = vadd.f32 0.0, %v2754
    %v2756 = vpop.f32.mrb[0].mxu0
    %v2757 = vadd.f32 0.0, %v2756
    %v2758 = vpop.f32.mrb[0].mxu0
    %v2759 = vpop.f32.mrb[0].mxu0
    %2760 = vdwg.mxu0
    %2761 = vmatprep.subr.bf16.mxu0 %v1389
    %2762 = vmatpush1.bf16.msra.mxu0 %v1388
    %2763 = vmatprep.subr.bf16.mxu0 %v1393
    %2764 = vmatpush1.bf16.msra.mxu0 %v1392
    %2765 = vmatprep.subr.bf16.mxu0 %v1397
    %2766 = vmatpush1.bf16.msra.mxu0 %v1396
    %2767 = vmatprep.subr.bf16.mxu0 %v1401
    %2768 = vmatpush1.bf16.msra.mxu0 %v1400
    %2769 = vmatprep.subr.bf16.mxu0 %v1405
    %2770 = vmatpush1.bf16.msra.mxu0 %v1404
    %2771 = vmatprep.subr.bf16.mxu0 %v1409
    %2772 = vmatpush1.bf16.msra.mxu0 %v1408
    %2773 = vmatprep.subr.bf16.mxu0 %v1413
    %2774 = vmatpush1.bf16.msra.mxu0 %v1412
    %2775 = vmatprep.subr.bf16.mxu0 %v1417
    %2776 = vmatpush1.bf16.msra.mxu0 %v1416
    %2777 = vmatprep.subr.bf16.mxu0 0
    %2778 = vmatpush1.bf16.msra.mxu0 0
    %2779 = vmatprep.subr.bf16.mxu0 0
    %2780 = vmatpush1.bf16.msra.mxu0 0
    %2781 = vmatprep.subr.bf16.mxu0 0
    %2782 = vmatpush1.bf16.msra.mxu0 0
    %2783 = vmatprep.subr.bf16.mxu0 0
    %2784 = vmatpush1.bf16.msra.mxu0 0
    %2785 = vmatprep.subr.bf16.mxu0 0
    %2786 = vmatpush1.bf16.msra.mxu0 0
    %2787 = vmatprep.subr.bf16.mxu0 0
    %2788 = vmatpush1.bf16.msra.mxu0 0
    %2789 = vmatprep.subr.bf16.mxu0 0
    %2790 = vmatpush1.bf16.msra.mxu0 0
    %2791 = vmatprep.subr.bf16.mxu0 0
    %2792 = vmatpush1.bf16.msra.mxu0 0
    %2793 = vmatprep.mubr.bf16.mxu0 0
    %2794 = vmatmul.mubr.bf16.gmra.mrb[0].mxu0 %v2719
    %v2795 = vpop.f32.mrb[0].mxu0
    %v2796 = vadd.f32 0.0, %v2795
    %v2797 = vpop.f32.mrb[0].mxu0
    %v2798 = vadd.f32 0.0, %v2797
    %v2799 = vpop.f32.mrb[0].mxu0
    %v2800 = vpop.f32.mrb[0].mxu0
    %2801 = vdwg.mxu0
    %v2802 = vadd.f32 %v873, %v2755
    %v2803 = vadd.f32 %v875, %v2757
    %v2804 = vadd.f32 %v946, %v2796
    %v2805 = vadd.f32 %v948, %v2798
    %v2806 = vmul.f32 %v2715, 0.5
    %v2807 = vtanh.pop %v2806
    %v2808 = vadd.f32 %v2807, 1.0
    %v2809 = vmul.f32 %v2808, 0.5
    %v2810 = vmul.f32 %v2716, 0.5
    %v2811 = vtanh.pop %v2810
    %v2812 = vadd.f32 %v2811, 1.0
    %v2813 = vmul.f32 %v2812, 0.5
    %v2814 = vtanh.pop %v2717
    %v2815 = vmul.f32 %v2718, 0.5
    %v2816 = vtanh.pop %v2815
    %v2817 = vadd.f32 %v2816, 1.0
    %v2818 = vmul.f32 %v2817, 0.5
    %v2819 = vmul.f32 %v2813, %v2609
    %v2820 = vmul.f32 %v2809, %v2814
    %v2821 = vadd.f32 %v2819, %v2820
    %v2822 = vtanh.pop %v2821
    %v2823 = vmul.f32 %v2818, %v2822
    %v2824 = vmul.f32 %v2802, 0.5
    %v2825 = vtanh.pop %v2824
    %v2826 = vadd.f32 %v2825, 1.0
    %v2827 = vmul.f32 %v2826, 0.5
    %v2828 = vmul.f32 %v2803, 0.5
    %v2829 = vtanh.pop %v2828
    %v2830 = vadd.f32 %v2829, 1.0
    %v2831 = vmul.f32 %v2830, 0.5
    %v2832 = vtanh.pop %v2804
    %v2833 = vmul.f32 %v2805, 0.5
    %v2834 = vtanh.pop %v2833
    %v2835 = vadd.f32 %v2834, 1.0
    %v2836 = vmul.f32 %v2835, 0.5
    %v2837 = vmul.f32 %v2831, %v2627
    %v2838 = vmul.f32 %v2827, %v2832
    %v2839 = vadd.f32 %v2837, %v2838
    %v2840 = vtanh.pop %v2839
    %v2841 = vmul.f32 %v2836, %v2840
    %v2842 = vmax.f32 %v2630, %v2823
    %v2843 = vmax.f32 %v2631, %v2841
    %v2844 = vpack.c.bf16 %v2823, %v2823
    %2845 = vmatprep.subr.bf16.mxu0 %v1141
    %2846 = vmatpush1.bf16.msra.mxu0 %v1140
    %2847 = vmatprep.subr.bf16.mxu0 %v1145
    %2848 = vmatpush1.bf16.msra.mxu0 %v1144
    %2849 = vmatprep.subr.bf16.mxu0 %v1149
    %2850 = vmatpush1.bf16.msra.mxu0 %v1148
    %2851 = vmatprep.subr.bf16.mxu0 %v1153
    %2852 = vmatpush1.bf16.msra.mxu0 %v1152
    %2853 = vmatprep.subr.bf16.mxu0 %v1157
    %2854 = vmatpush1.bf16.msra.mxu0 %v1156
    %2855 = vmatprep.subr.bf16.mxu0 %v1161
    %2856 = vmatpush1.bf16.msra.mxu0 %v1160
    %2857 = vmatprep.subr.bf16.mxu0 %v1165
    %2858 = vmatpush1.bf16.msra.mxu0 %v1164
    %2859 = vmatprep.subr.bf16.mxu0 %v1169
    %2860 = vmatpush1.bf16.msra.mxu0 %v1168
    %2861 = vmatprep.subr.bf16.mxu0 0
    %2862 = vmatpush1.bf16.msra.mxu0 0
    %2863 = vmatprep.subr.bf16.mxu0 0
    %2864 = vmatpush1.bf16.msra.mxu0 0
    %2865 = vmatprep.subr.bf16.mxu0 0
    %2866 = vmatpush1.bf16.msra.mxu0 0
    %2867 = vmatprep.subr.bf16.mxu0 0
    %2868 = vmatpush1.bf16.msra.mxu0 0
    %2869 = vmatprep.subr.bf16.mxu0 0
    %2870 = vmatpush1.bf16.msra.mxu0 0
    %2871 = vmatprep.subr.bf16.mxu0 0
    %2872 = vmatpush1.bf16.msra.mxu0 0
    %2873 = vmatprep.subr.bf16.mxu0 0
    %2874 = vmatpush1.bf16.msra.mxu0 0
    %2875 = vmatprep.subr.bf16.mxu0 0
    %2876 = vmatpush1.bf16.msra.mxu0 0
    %2877 = vmatprep.mubr.bf16.mxu0 0
    %2878 = vmatmul.mubr.bf16.gmra.mrb[0].mxu0 %v2844
    %v2879 = vpop.f32.mrb[0].mxu0
    %v2880 = vadd.f32 0.0, %v2879
    %v2881 = vpop.f32.mrb[0].mxu0
    %v2882 = vadd.f32 0.0, %v2881
    %v2883 = vpop.f32.mrb[0].mxu0
    %v2884 = vpop.f32.mrb[0].mxu0
    %2885 = vdwg.mxu0
    %2886 = vmatprep.subr.bf16.mxu0 %v1143
    %2887 = vmatpush1.bf16.msra.mxu0 %v1142
    %2888 = vmatprep.subr.bf16.mxu0 %v1147
    %2889 = vmatpush1.bf16.msra.mxu0 %v1146
    %2890 = vmatprep.subr.bf16.mxu0 %v1151
    %2891 = vmatpush1.bf16.msra.mxu0 %v1150
    %2892 = vmatprep.subr.bf16.mxu0 %v1155
    %2893 = vmatpush1.bf16.msra.mxu0 %v1154
    %2894 = vmatprep.subr.bf16.mxu0 %v1159
    %2895 = vmatpush1.bf16.msra.mxu0 %v1158
    %2896 = vmatprep.subr.bf16.mxu0 %v1163
    %2897 = vmatpush1.bf16.msra.mxu0 %v1162
    %2898 = vmatprep.subr.bf16.mxu0 %v1167
    %2899 = vmatpush1.bf16.msra.mxu0 %v1166
    %2900 = vmatprep.subr.bf16.mxu0 %v1171
    %2901 = vmatpush1.bf16.msra.mxu0 %v1170
    %2902 = vmatprep.subr.bf16.mxu0 0
    %2903 = vmatpush1.bf16.msra.mxu0 0
    %2904 = vmatprep.subr.bf16.mxu0 0
    %2905 = vmatpush1.bf16.msra.mxu0 0
    %2906 = vmatprep.subr.bf16.mxu0 0
    %2907 = vmatpush1.bf16.msra.mxu0 0
    %2908 = vmatprep.subr.bf16.mxu0 0
    %2909 = vmatpush1.bf16.msra.mxu0 0
    %2910 = vmatprep.subr.bf16.mxu0 0
    %2911 = vmatpush1.bf16.msra.mxu0 0
    %2912 = vmatprep.subr.bf16.mxu0 0
    %2913 = vmatpush1.bf16.msra.mxu0 0
    %2914 = vmatprep.subr.bf16.mxu0 0
    %2915 = vmatpush1.bf16.msra.mxu0 0
    %2916 = vmatprep.subr.bf16.mxu0 0
    %2917 = vmatpush1.bf16.msra.mxu0 0
    %2918 = vmatprep.mubr.bf16.mxu0 0
    %2919 = vmatmul.mubr.bf16.gmra.mrb[0].mxu0 %v2844
    %v2920 = vpop.f32.mrb[0].mxu0
    %v2921 = vadd.f32 0.0, %v2920
    %v2922 = vpop.f32.mrb[0].mxu0
    %v2923 = vadd.f32 0.0, %v2922
    %v2924 = vpop.f32.mrb[0].mxu0
    %v2925 = vpop.f32.mrb[0].mxu0
    %2926 = vdwg.mxu0
    %v2927 = vadd.f32 %v757, %v2880
    %v2928 = vadd.f32 %v759, %v2882
    %v2929 = vadd.f32 %v830, %v2921
    %v2930 = vadd.f32 %v832, %v2923
    %v2931 = vpack.c.bf16 %v2841, %v2841
    %2932 = vmatprep.subr.bf16.mxu0 %v1387
    %2933 = vmatpush1.bf16.msra.mxu0 %v1386
    %2934 = vmatprep.subr.bf16.mxu0 %v1391
    %2935 = vmatpush1.bf16.msra.mxu0 %v1390
    %2936 = vmatprep.subr.bf16.mxu0 %v1395
    %2937 = vmatpush1.bf16.msra.mxu0 %v1394
    %2938 = vmatprep.subr.bf16.mxu0 %v1399
    %2939 = vmatpush1.bf16.msra.mxu0 %v1398
    %2940 = vmatprep.subr.bf16.mxu0 %v1403
    %2941 = vmatpush1.bf16.msra.mxu0 %v1402
    %2942 = vmatprep.subr.bf16.mxu0 %v1407
    %2943 = vmatpush1.bf16.msra.mxu0 %v1406
    %2944 = vmatprep.subr.bf16.mxu0 %v1411
    %2945 = vmatpush1.bf16.msra.mxu0 %v1410
    %2946 = vmatprep.subr.bf16.mxu0 %v1415
    %2947 = vmatpush1.bf16.msra.mxu0 %v1414
    %2948 = vmatprep.subr.bf16.mxu0 0
    %2949 = vmatpush1.bf16.msra.mxu0 0
    %2950 = vmatprep.subr.bf16.mxu0 0
    %2951 = vmatpush1.bf16.msra.mxu0 0
    %2952 = vmatprep.subr.bf16.mxu0 0
    %2953 = vmatpush1.bf16.msra.mxu0 0
    %2954 = vmatprep.subr.bf16.mxu0 0
    %2955 = vmatpush1.bf16.msra.mxu0 0
    %2956 = vmatprep.subr.bf16.mxu0 0
    %2957 = vmatpush1.bf16.msra.mxu0 0
    %2958 = vmatprep.subr.bf16.mxu0 0
    %2959 = vmatpush1.bf16.msra.mxu0 0
    %2960 = vmatprep.subr.bf16.mxu0 0
    %2961 = vmatpush1.bf16.msra.mxu0 0
    %2962 = vmatprep.subr.bf16.mxu0 0
    %2963 = vmatpush1.bf16.msra.mxu0 0
    %2964 = vmatprep.mubr.bf16.mxu0 0
    %2965 = vmatmul.mubr.bf16.gmra.mrb[0].mxu0 %v2931
    %v2966 = vpop.f32.mrb[0].mxu0
    %v2967 = vadd.f32 0.0, %v2966
    %v2968 = vpop.f32.mrb[0].mxu0
    %v2969 = vadd.f32 0.0, %v2968
    %v2970 = vpop.f32.mrb[0].mxu0
    %v2971 = vpop.f32.mrb[0].mxu0
    %2972 = vdwg.mxu0
    %2973 = vmatprep.subr.bf16.mxu0 %v1389
    %2974 = vmatpush1.bf16.msra.mxu0 %v1388
    %2975 = vmatprep.subr.bf16.mxu0 %v1393
    %2976 = vmatpush1.bf16.msra.mxu0 %v1392
    %2977 = vmatprep.subr.bf16.mxu0 %v1397
    %2978 = vmatpush1.bf16.msra.mxu0 %v1396
    %2979 = vmatprep.subr.bf16.mxu0 %v1401
    %2980 = vmatpush1.bf16.msra.mxu0 %v1400
    %2981 = vmatprep.subr.bf16.mxu0 %v1405
    %2982 = vmatpush1.bf16.msra.mxu0 %v1404
    %2983 = vmatprep.subr.bf16.mxu0 %v1409
    %2984 = vmatpush1.bf16.msra.mxu0 %v1408
    %2985 = vmatprep.subr.bf16.mxu0 %v1413
    %2986 = vmatpush1.bf16.msra.mxu0 %v1412
    %2987 = vmatprep.subr.bf16.mxu0 %v1417
    %2988 = vmatpush1.bf16.msra.mxu0 %v1416
    %2989 = vmatprep.subr.bf16.mxu0 0
    %2990 = vmatpush1.bf16.msra.mxu0 0
    %2991 = vmatprep.subr.bf16.mxu0 0
    %2992 = vmatpush1.bf16.msra.mxu0 0
    %2993 = vmatprep.subr.bf16.mxu0 0
    %2994 = vmatpush1.bf16.msra.mxu0 0
    %2995 = vmatprep.subr.bf16.mxu0 0
    %2996 = vmatpush1.bf16.msra.mxu0 0
    %2997 = vmatprep.subr.bf16.mxu0 0
    %2998 = vmatpush1.bf16.msra.mxu0 0
    %2999 = vmatprep.subr.bf16.mxu0 0
    %3000 = vmatpush1.bf16.msra.mxu0 0
    %3001 = vmatprep.subr.bf16.mxu0 0
    %3002 = vmatpush1.bf16.msra.mxu0 0
    %3003 = vmatprep.subr.bf16.mxu0 0
    %3004 = vmatpush1.bf16.msra.mxu0 0
    %3005 = vmatprep.mubr.bf16.mxu0 0
    %3006 = vmatmul.mubr.bf16.gmra.mrb[0].mxu0 %v2931
    %v3007 = vpop.f32.mrb[0].mxu0
    %v3008 = vadd.f32 0.0, %v3007
    %v3009 = vpop.f32.mrb[0].mxu0
    %v3010 = vadd.f32 0.0, %v3009
    %v3011 = vpop.f32.mrb[0].mxu0
    %v3012 = vpop.f32.mrb[0].mxu0
    %3013 = vdwg.mxu0
    %v3014 = vadd.f32 %v869, %v2967
    %v3015 = vadd.f32 %v871, %v2969
    %v3016 = vadd.f32 %v942, %v3008
    %v3017 = vadd.f32 %v944, %v3010
    %v3018 = vmul.f32 %v2927, 0.5
    %v3019 = vtanh.pop %v3018
    %v3020 = vadd.f32 %v3019, 1.0
    %v3021 = vmul.f32 %v3020, 0.5
    %v3022 = vmul.f32 %v2928, 0.5
    %v3023 = vtanh.pop %v3022
    %v3024 = vadd.f32 %v3023, 1.0
    %v3025 = vmul.f32 %v3024, 0.5
    %v3026 = vtanh.pop %v2929
    %v3027 = vmul.f32 %v2930, 0.5
    %v3028 = vtanh.pop %v3027
    %v3029 = vadd.f32 %v3028, 1.0
    %v3030 = vmul.f32 %v3029, 0.5
    %v3031 = vmul.f32 %v3025, %v2821
    %v3032 = vmul.f32 %v3021, %v3026
    %v3033 = vadd.f32 %v3031, %v3032
    %v3034 = vtanh.pop %v3033
    %v3035 = vmul.f32 %v3030, %v3034
    %v3036 = vmul.f32 %v3014, 0.5
    %v3037 = vtanh.pop %v3036
    %v3038 = vadd.f32 %v3037, 1.0
    %v3039 = vmul.f32 %v3038, 0.5
    %v3040 = vmul.f32 %v3015, 0.5
    %v3041 = vtanh.pop %v3040
    %v3042 = vadd.f32 %v3041, 1.0
    %v3043 = vmul.f32 %v3042, 0.5
    %v3044 = vtanh.pop %v3016
    %v3045 = vmul.f32 %v3017, 0.5
    %v3046 = vtanh.pop %v3045
    %v3047 = vadd.f32 %v3046, 1.0
    %v3048 = vmul.f32 %v3047, 0.5
    %v3049 = vmul.f32 %v3043, %v2839
    %v3050 = vmul.f32 %v3039, %v3044
    %v3051 = vadd.f32 %v3049, %v3050
    %v3052 = vtanh.pop %v3051
    %v3053 = vmul.f32 %v3048, %v3052
    %v3054 = vmax.f32 %v2842, %v3035
    %v3055 = vmax.f32 %v2843, %v3053
    %3056 = vst [vmem:[#allocation8] sm:$0xff] %v3054
    %3057 = vst [vmem:[#allocation8 + $0x8] sm:$0xff] %v3055
    // Predicated region
    $region38: #{sentence_encoder_forward.1} parent=1 // pred_check
      _
    $region39: #{sentence_encoder_forward.1} parent=1 // pred_check_branch
      %3059 = sbr.rel (0) target = $region41
    $region40: #{sentence_encoder_forward.1} parent=1 // pred_region
      %s3061 = ssub.s32 256, 256
      %3062 = vsyncadd [#allocation4], %s3061
      %s3064 = sshll.u32 [#allocation8], 4
      %s3065 = int_to_ptr.vmem [resolvable:$true] %s3064
      %3067 = dma.vmem_to_hbm [thread:$0]  %s3065, 256, %s6, [#allocation4]
    $region41: #{sentence_encoder_forward.1} parent=1 // pred_fallthru
      _
    // Predicated region
    $region42: #{sentence_encoder_forward.1} parent=1 // pred_check
      _
    $region43: #{sentence_encoder_forward.1} parent=1 // pred_check_branch
      %3069 = sbr.rel (0) target = $region45
    $region44: #{sentence_encoder_forward.1} parent=1 // pred_region
      %3070 = dma.done [#allocation4], 256
    $region45: #{sentence_encoder_forward.1} parent=1 // pred_fallthru
      _
    %3071 = vsyncpa [#allocation3], 1
    %3072 = vsyncpa [#allocation6], 1
    %3073 = vsyncpa [#allocation4], 1

</llo_original>
